<compile_context>
chip_gen: v6e
topology: v6e:2x2x1
jax: 0.10.0
libtpu: 0.0.40
codegen_flags: <defaults>
</compile_context>

<pallas_src>
import functools
import math

import jax
import jax.numpy as jnp
from jax.experimental import pallas as pl
from jax.experimental.pallas import tpu as pltpu


# ----------------------------------------------------------------------------
# Fused layer-stack kernel
# ----------------------------------------------------------------------------

def _ln(x, g, b, eps):
    """LayerNorm over the last dim, f32 statistics (PyTorch nn.LayerNorm)."""
    mean = jnp.mean(x, axis=-1, keepdims=True)
    c = x - mean
    var = jnp.mean(c * c, axis=-1, keepdims=True)
    return c * jax.lax.rsqrt(var + eps) * g + b


def _mae_layerstack_kernel(x_ref, in_w_ref, in_b_ref, out_w_ref, out_b_ref,
                           ln1_g_ref, ln1_b_ref, ff1_w_ref, ff1_b_ref,
                           ff2_w_ref, ff2_b_ref, ln2_g_ref, ln2_b_ref,
                           o_ref, act_ref, *, n_head, n_seq, seq_len, eps):
    f32 = jnp.float32
    bf16 = jnp.bfloat16
    l = pl.program_id(1)

    # Layer 0: load the (bf16) input block into the resident f32 stream.
    @pl.when(l == 0)
    def _():
        act_ref[...] = x_ref[...].astype(f32)

    x = act_ref[...]                                  # (M, E) f32 residual
    M, E = x.shape
    Dh = E // n_head

    # --- QKV projection: one big MXU matmul over all B_blk*S rows ---
    # 1/sqrt(Dh) is pre-folded into the Q columns of in_w / in_b.
    qkv = jnp.dot(x.astype(bf16), in_w_ref[0],
                  preferred_element_type=f32) + in_b_ref[0]        # (M, 3E) f32
    qkv_bf = qkv.astype(bf16)                                      # cast once

    out_w = out_w_ref[0]                                           # (E, E) bf16

    # --- per-sequence, per-head attention with per-head out-proj accumulation
    # (every store stays 128-lane dense; no masked-strip scratch writes) ---
    seq_proj = []
    for b in range(n_seq):
        r0 = b * seq_len
        acc = jnp.zeros((seq_len, E), f32)
        for h in range(n_head):
            c0 = h * Dh
            q = qkv_bf[r0:r0 + seq_len, c0:c0 + Dh]
            k = qkv_bf[r0:r0 + seq_len, E + c0:E + c0 + Dh]
            v = qkv_bf[r0:r0 + seq_len, 2 * E + c0:2 * E + c0 + Dh]
            # scores = q @ k^T (contract last dims; scale already folded)
            s = jax.lax.dot_general(q, k, (((1,), (1,)), ((), ())),
                                    preferred_element_type=f32)    # (S, S)
            s = s - jnp.max(s, axis=-1, keepdims=True)              # f32 max
            p = jnp.exp(s)
            denom = jnp.sum(p, axis=-1, keepdims=True)              # f32 sum
            p = p * pl.reciprocal(denom, approx=True)               # EUP recip
            o_h = jnp.dot(p.astype(bf16), v, preferred_element_type=f32)
            acc = acc + jnp.dot(o_h.astype(bf16), out_w[c0:c0 + Dh, :],
                                preferred_element_type=f32)
        seq_proj.append(acc)
    proj = seq_proj[0] if n_seq == 1 else jnp.concatenate(seq_proj, axis=0)
    proj = proj + out_b_ref[0]                                      # (M, E)

    # --- residual + LayerNorm1 ---
    h1 = _ln(x + proj, ln1_g_ref[0], ln1_b_ref[0], eps)

    # --- FFN: relu fused with the bf16 downcast ---
    ff = jnp.dot(h1.astype(bf16), ff1_w_ref[0],
                 preferred_element_type=f32) + ff1_b_ref[0]
    ff = jnp.maximum(ff, 0.0).astype(bf16)
    ff = jnp.dot(ff, ff2_w_ref[0],
                 preferred_element_type=f32) + ff2_b_ref[0]

    # --- residual + LayerNorm2; keep resident stream in f32 ---
    h2 = _ln(h1 + ff, ln2_g_ref[0], ln2_b_ref[0], eps)
    act_ref[...] = h2

    # Only the last layer writes the output block (bf16 HBM traffic).
    @pl.when(l == pl.num_programs(1) - 1)
    def _():
        o_ref[...] = h2.astype(o_ref.dtype)


def _vmem_limit_bytes(E, F, Mb, n_layers):
    """Real VMEM budget (weights double-buffered + activations), capped at 48 MiB."""
    del n_layers  # only two layers' weights are ever resident (double buffer)
    w_bytes = 2 * (3 * E * E + E * E + E * F + F * E)        # bf16 weights/layer
    b_bytes = 4 * (3 * E + E + F + E + 4 * E)                # f32 biases + LN
    weights = 2 * (w_bytes + b_bytes)                        # double-buffered
    acts = 2 * 2 * (Mb * E * 2) + Mb * E * 4                 # x/o blocks + f32 scratch
    inter = 4 * Mb * (3 * E + F + 6 * E)                     # rough intermediates
    est = weights + acts + inter
    return int(max(16 << 20, min(int(1.5 * est) + (4 << 20), 48 << 20)))


def _mae_stack_forward(x2d, st, *, n_head, batch_block, seq_len, eps=1e-5):
    """Run the whole encoder stack in one pallas_call. x2d: (N_pad*S, E) bf16."""
    M_total, E = x2d.shape
    L = st["in_w"].shape[0]
    F = st["ff1_w"].shape[2]
    Mb = batch_block * seq_len
    n_blocks = M_total // Mb

    def wspec(arr):
        nd = arr.ndim - 1
        return pl.BlockSpec((1,) + arr.shape[1:],
                            lambda n, l, _nd=nd: (l,) + (0,) * _nd)

    kernel = functools.partial(_mae_layerstack_kernel, n_head=n_head,
                               n_seq=batch_block, seq_len=seq_len, eps=eps)

    return pl.pallas_call(
        kernel,
        out_shape=jax.ShapeDtypeStruct((M_total, E), jnp.bfloat16),
        grid=(n_blocks, L),
        in_specs=[
            pl.BlockSpec((Mb, E), lambda n, l: (n, 0)),     # flattened batch slab
            wspec(st["in_w"]), wspec(st["in_b"]),           # in_proj (Q-scaled)
            wspec(st["out_w"]), wspec(st["out_b"]),         # out_proj
            wspec(st["ln1_g"]), wspec(st["ln1_b"]),         # LN1
            wspec(st["ff1_w"]), wspec(st["ff1_b"]),         # FFN linear1
            wspec(st["ff2_w"]), wspec(st["ff2_b"]),         # FFN linear2
            wspec(st["ln2_g"]), wspec(st["ln2_b"]),         # LN2
        ],
        out_specs=pl.BlockSpec((Mb, E), lambda n, l: (n, 0)),
        scratch_shapes=[pltpu.VMEM((Mb, E), jnp.float32)],  # resident residual
        compiler_params=pltpu.CompilerParams(
            # batch axis "arbitrary": at small batch the kernel is weight-DMA
            # bound, so sharding across v7x's 2 TCs would duplicate weight DMA.
            dimension_semantics=("arbitrary", "arbitrary"),
            vmem_limit_bytes=_vmem_limit_bytes(E, F, Mb, L)),
    )(x2d,
      st["in_w"], st["in_b"], st["out_w"], st["out_b"],
      st["ln1_g"], st["ln1_b"], st["ff1_w"], st["ff1_b"],
      st["ff2_w"], st["ff2_b"], st["ln2_g"], st["ln2_b"])


@functools.partial(jax.jit, static_argnames=("n_head", "batch_block"))
def mae_encoder_forward(x_sne, stacked, n_head, batch_block=8):
    """MAEEncoder.forward: x is (S, N, E) as in PyTorch batch_first=False."""
    S, N, E = x_sne.shape
    assert E % 128 == 0, "embedding dim must be lane-dense (multiple of 128)"
    B_blk = max(1, min(batch_block, N))
    n_blocks = -(-N // B_blk)
    N_pad = n_blocks * B_blk
    x = jnp.transpose(x_sne, (1, 0, 2)).astype(jnp.bfloat16)  # (N, S, E) bf16
    if N_pad != N:
        x = jnp.pad(x, ((0, N_pad - N), (0, 0), (0, 0)))
    x2d = x.reshape(N_pad * S, E)
    out2d = _mae_stack_forward(x2d, stacked, n_head=n_head,
                               batch_block=B_blk, seq_len=S)
    out = out2d.reshape(N_pad, S, E)[:N]
    return jnp.transpose(out, (1, 0, 2))                      # (S, N, E) bf16


# ----------------------------------------------------------------------------
# Parameter init (PyTorch-like f32 params) and kernel-side packing
# ----------------------------------------------------------------------------

def init_params(key, *, emb_dim, ff_dim, num_layers):
    layers = []
    for i in range(num_layers):
        k = jax.random.split(jax.random.fold_in(key, i), 6)

        def dense(kk, shape, scale=0.02):
            return scale * jax.random.normal(kk, shape, jnp.float32)

        layers.append(dict(
            in_w=dense(k[0], (emb_dim, 3 * emb_dim)),
            in_b=dense(k[1], (1, 3 * emb_dim)),
            out_w=dense(k[2], (emb_dim, emb_dim)),
            out_b=dense(k[3], (1, emb_dim)),
            ln1_g=jnp.ones((1, emb_dim), jnp.float32),
            ln1_b=jnp.zeros((1, emb_dim), jnp.float32),
            ff1_w=dense(k[4], (emb_dim, ff_dim)),
            ff1_b=jnp.zeros((1, ff_dim), jnp.float32),
            ff2_w=dense(k[5], (ff_dim, emb_dim)),
            ff2_b=jnp.zeros((1, emb_dim), jnp.float32),
            ln2_g=jnp.ones((1, emb_dim), jnp.float32),
            ln2_b=jnp.zeros((1, emb_dim), jnp.float32),
        ))
    return dict(layers=layers)


def prepare_stacked_params(params, n_head):
    """Stack per-layer params to (L, ...), fold 1/sqrt(Dh) into Q, cast W->bf16."""
    layers = params["layers"]
    E = layers[0]["in_w"].shape[0]
    scale = 1.0 / math.sqrt(E // n_head)
    q_scale = jnp.concatenate([jnp.full((E,), scale, jnp.float32),
                               jnp.ones((2 * E,), jnp.float32)])

    def stack(name):
        return jnp.stack([l[name] for l in layers])

    return dict(
        in_w=(stack("in_w") * q_scale).astype(jnp.bfloat16),   # (L, E, 3E)
        in_b=stack("in_b") * q_scale,                          # (L, 1, 3E) f32
        out_w=stack("out_w").astype(jnp.bfloat16),             # (L, E, E)
        out_b=stack("out_b"),
        ln1_g=stack("ln1_g"), ln1_b=stack("ln1_b"),
        ff1_w=stack("ff1_w").astype(jnp.bfloat16),              # (L, E, F)
        ff1_b=stack("ff1_b"),
        ff2_w=stack("ff2_w").astype(jnp.bfloat16),              # (L, F, E)
        ff2_b=stack("ff2_b"),
        ln2_g=stack("ln2_g"), ln2_b=stack("ln2_b"),
    )


# ----------------------------------------------------------------------------
# Pure-JAX reference (f32 activations; weights quantized to bf16 to match the
# kernel's weight storage precision)
# ----------------------------------------------------------------------------

def reference_forward(x_sne, params, n_head, eps=1e-5):
    def wq(w):  # match the kernel's bf16 weight storage
        return w.astype(jnp.bfloat16).astype(jnp.float32)

    x = jnp.transpose(x_sne, (1, 0, 2)).astype(jnp.float32)    # (N, S, E)
    N, S, E = x.shape
    Dh = E // n_head

    def ln(v, g, b):
        m = jnp.mean(v, -1, keepdims=True)
        c = v - m
        var = jnp.mean(c * c, -1, keepdims=True)
        return c * jax.lax.rsqrt(var + eps) * g + b

    for L in params["layers"]:
        qkv = x @ wq(L["in_w"]) + L["in_b"]
        q, k, v = jnp.split(qkv, 3, axis=-1)

        def heads(t):
            return t.reshape(N, S, n_head, Dh).transpose(0, 2, 1, 3)

        q, k, v = heads(q), heads(k), heads(v)
        s = jnp.einsum("nhqd,nhkd->nhqk", q, k) / math.sqrt(Dh)
        p = jax.nn.softmax(s, axis=-1)
        o = jnp.einsum("nhqk,nhkd->nhqd", p, v)
        o = o.transpose(0, 2, 1, 3).reshape(N, S, E)
        o = o @ wq(L["out_w"]) + L["out_b"]
        x = ln(x + o, L["ln1_g"], L["ln1_b"])
        f = jnp.maximum(x @ wq(L["ff1_w"]) + L["ff1_b"], 0.0)
        f = f @ wq(L["ff2_w"]) + L["ff2_b"]
        x = ln(x + f, L["ln2_g"], L["ln2_b"])
    return jnp.transpose(x, (1, 0, 2))


# ----------------------------------------------------------------------------
# Main
# ----------------------------------------------------------------------------

if __name__ == "__main__":
    # Small test config consistent with MAEEncoder(emb_dim, n_head, layers);
    # E=128 keeps the lane axis dense; S multiple of 8 keeps sublanes clean.
    S, N, E = 16, 2, 128
    n_head = 4
    num_layers = 2
    ff_dim = 256   # TODO(synk): PyTorch default dim_feedforward=2048, scaled down for the small test

    key = jax.random.PRNGKey(0)
    k_param, k_x = jax.random.split(key)
    params = init_params(k_param, emb_dim=E, ff_dim=ff_dim, num_layers=num_layers)
    stacked = prepare_stacked_params(params, n_head)
    x = jax.random.normal(k_x, (S, N, E), jnp.float32)   # (seq, batch, emb)

    out = mae_encoder_forward(x, stacked, n_head=n_head, batch_block=8)
    jax.block_until_ready(out)
    assert out.shape == (S, N, E)

    ref = reference_forward(x, params, n_head=n_head)
    err = float(jnp.max(jnp.abs(out.astype(jnp.float32) - ref)))
    assert err < 1e-1, f"max abs err vs f32 reference: {err}"

    print("KERNEL_OK")
</pallas_src>

<mosaic_0001>
module attributes {stable_mosaic.version = 11 : i64} {
  func.func @_mae_layerstack_kernel(%arg0: i32, %arg1: i32, %arg2: memref<32x128xbf16, #tpu.memory_space<vmem>>, %arg3: memref<1x128x384xbf16, #tpu.memory_space<vmem>>, %arg4: memref<1x1x384xf32, #tpu.memory_space<vmem>>, %arg5: memref<1x128x128xbf16, #tpu.memory_space<vmem>>, %arg6: memref<1x1x128xf32, #tpu.memory_space<vmem>>, %arg7: memref<1x1x128xf32, #tpu.memory_space<vmem>>, %arg8: memref<1x1x128xf32, #tpu.memory_space<vmem>>, %arg9: memref<1x128x256xbf16, #tpu.memory_space<vmem>>, %arg10: memref<1x1x256xf32, #tpu.memory_space<vmem>>, %arg11: memref<1x256x128xbf16, #tpu.memory_space<vmem>>, %arg12: memref<1x1x128xf32, #tpu.memory_space<vmem>>, %arg13: memref<1x1x128xf32, #tpu.memory_space<vmem>>, %arg14: memref<1x1x128xf32, #tpu.memory_space<vmem>>, %arg15: memref<32x128xbf16, #tpu.memory_space<vmem>>, %arg16: memref<32x128xf32, #tpu.memory_space<vmem>>) attributes {dimension_semantics = [#tpu.dimension_semantics<arbitrary>, #tpu.dimension_semantics<arbitrary>], iteration_bounds = array<i64: 1, 2>, scalar_prefetch = 0 : i64, scratch_operands = 1 : i64, tpu.core_type = #tpu.core_type<tc>, window_params = [{transform_indices = @transform_0, window_bounds = array<i64: 32, 128>}, {transform_indices = @transform_1, window_bounds = array<i64: 1, 128, 384>}, {transform_indices = @transform_2, window_bounds = array<i64: 1, 1, 384>}, {transform_indices = @transform_3, window_bounds = array<i64: 1, 128, 128>}, {transform_indices = @transform_4, window_bounds = array<i64: 1, 1, 128>}, {transform_indices = @transform_5, window_bounds = array<i64: 1, 1, 128>}, {transform_indices = @transform_6, window_bounds = array<i64: 1, 1, 128>}, {transform_indices = @transform_7, window_bounds = array<i64: 1, 128, 256>}, {transform_indices = @transform_8, window_bounds = array<i64: 1, 1, 256>}, {transform_indices = @transform_9, window_bounds = array<i64: 1, 256, 128>}, {transform_indices = @transform_10, window_bounds = array<i64: 1, 1, 128>}, {transform_indices = @transform_11, window_bounds = array<i64: 1, 1, 128>}, {transform_indices = @transform_12, window_bounds = array<i64: 1, 1, 128>}, {transform_indices = @transform_13, window_bounds = array<i64: 32, 128>}]} {
    %c0_i32 = arith.constant 0 : i32
    %0 = arith.cmpi eq, %arg1, %c0_i32 : i32
    %1 = arith.extui %0 : i1 to i32
    %c0_i32_0 = arith.constant 0 : i32
    %2 = arith.cmpi ne, %1, %c0_i32_0 : i32
    scf.if %2 {
      %c0_96 = arith.constant 0 : index
      %c0_97 = arith.constant 0 : index
      %254 = vector.load %arg2[%c0_96, %c0_97] : memref<32x128xbf16, #tpu.memory_space<vmem>>, vector<32x128xbf16>
      %255 = arith.extf %254 : vector<32x128xbf16> to vector<32x128xf32>
      %c0_98 = arith.constant 0 : index
      %c0_99 = arith.constant 0 : index
      %256 = vector.load %arg16[%c0_98, %c0_99] : memref<32x128xf32, #tpu.memory_space<vmem>>, vector<32x128xf32>
      tpu.vector_store %arg16[%c0_98, %c0_99], %255 {strides = array<i32>} : memref<32x128xf32, #tpu.memory_space<vmem>>, vector<32x128xf32>,
    } else {
    }
    %c0 = arith.constant 0 : index
    %c0_1 = arith.constant 0 : index
    %3 = vector.load %arg16[%c0, %c0_1] : memref<32x128xf32, #tpu.memory_space<vmem>>, vector<32x128xf32>
    %4 = arith.truncf %3 : vector<32x128xf32> to vector<32x128xbf16>
    %c0_2 = arith.constant 0 : index
    %c0_3 = arith.constant 0 : index
    %c0_4 = arith.constant 0 : index
    %5 = vector.load %arg3[%c0_2, %c0_3, %c0_4] : memref<1x128x384xbf16, #tpu.memory_space<vmem>>, vector<1x128x384xbf16>
    %6 = vector.shape_cast %5 : vector<1x128x384xbf16> to vector<128x384xbf16>
    %cst = arith.constant dense<0.000000e+00> : vector<32x384xf32>
    %7 = tpu.matmul %4, %6, %cst {dimension_numbers = #tpu.dot_dimension_numbers<[1], [0], [0], [1], [0, 0, 1, 1], [], []>} : vector<32x128xbf16>, vector<128x384xbf16>, vector<32x384xf32> -> vector<32x384xf32>
    %c0_5 = arith.constant 0 : index
    %c0_6 = arith.constant 0 : index
    %c0_7 = arith.constant 0 : index
    %8 = vector.load %arg4[%c0_5, %c0_6, %c0_7] : memref<1x1x384xf32, #tpu.memory_space<vmem>>, vector<1x1x384xf32>
    %9 = vector.shape_cast %8 : vector<1x1x384xf32> to vector<1x384xf32>
    %10 = vector.broadcast %9 : vector<1x384xf32> to vector<32x384xf32>
    %11 = arith.addf %7, %10 : vector<32x384xf32>
    %12 = arith.truncf %11 : vector<32x384xf32> to vector<32x384xbf16>
    %c0_8 = arith.constant 0 : index
    %c0_9 = arith.constant 0 : index
    %c0_10 = arith.constant 0 : index
    %13 = vector.load %arg5[%c0_8, %c0_9, %c0_10] : memref<1x128x128xbf16, #tpu.memory_space<vmem>>, vector<1x128x128xbf16>
    %14 = vector.shape_cast %13 : vector<1x128x128xbf16> to vector<128x128xbf16>
    %cst_11 = arith.constant 0.000000e+00 : f32
    %15 = vector.broadcast %cst_11 : f32 to vector<16x128xf32>
    %16 = vector.extract_strided_slice %12 {offsets = [0, 0], sizes = [16, 32], strides = [1, 1]} : vector<32x384xbf16> to vector<16x32xbf16>
    %17 = vector.extract_strided_slice %12 {offsets = [0, 128], sizes = [16, 32], strides = [1, 1]} : vector<32x384xbf16> to vector<16x32xbf16>
    %18 = vector.extract_strided_slice %12 {offsets = [0, 256], sizes = [16, 32], strides = [1, 1]} : vector<32x384xbf16> to vector<16x32xbf16>
    %cst_12 = arith.constant dense<0.000000e+00> : vector<16x16xf32>
    %19 = tpu.matmul %16, %17, %cst_12 {dimension_numbers = #tpu.dot_dimension_numbers<[1], [1], [0], [0], [0, 0, 1, 0], [], []>} : vector<16x32xbf16>, vector<16x32xbf16>, vector<16x16xf32> -> vector<16x16xf32>
    %cst_13 = arith.constant dense<0xFF800000> : vector<16xf32>
    %20 = vector.multi_reduction <maximumf>, %19, %cst_13 [1] : vector<16x16xf32> to vector<16xf32>
    %21 = vector.shape_cast %20 : vector<16xf32> to vector<16x1xf32>
    %22 = vector.broadcast %21 : vector<16x1xf32> to vector<16x16xf32>
    %23 = arith.subf %19, %22 : vector<16x16xf32>
    %24 = math.exp %23 : vector<16x16xf32>
    %cst_14 = arith.constant dense<0.000000e+00> : vector<16xf32>
    %25 = vector.multi_reduction <add>, %24, %cst_14 [1] : vector<16x16xf32> to vector<16xf32>
    %26 = vector.shape_cast %25 : vector<16xf32> to vector<16x1xf32>
    %27 = tpu.reciprocal %26 {approx = true} : vector<16x1xf32> -> vector<16x1xf32>
    %28 = vector.broadcast %27 : vector<16x1xf32> to vector<16x16xf32>
    %29 = arith.mulf %24, %28 : vector<16x16xf32>
    %30 = arith.truncf %29 : vector<16x16xf32> to vector<16x16xbf16>
    %cst_15 = arith.constant dense<0.000000e+00> : vector<16x32xf32>
    %31 = tpu.matmul %30, %18, %cst_15 {dimension_numbers = #tpu.dot_dimension_numbers<[1], [0], [0], [1], [0, 0, 1, 1], [], []>} : vector<16x16xbf16>, vector<16x32xbf16>, vector<16x32xf32> -> vector<16x32xf32>
    %32 = arith.truncf %31 : vector<16x32xf32> to vector<16x32xbf16>
    %33 = vector.extract_strided_slice %14 {offsets = [0, 0], sizes = [32, 128], strides = [1, 1]} : vector<128x128xbf16> to vector<32x128xbf16>
    %cst_16 = arith.constant dense<0.000000e+00> : vector<16x128xf32>
    %34 = tpu.matmul %32, %33, %cst_16 {dimension_numbers = #tpu.dot_dimension_numbers<[1], [0], [0], [1], [0, 0, 1, 1], [], []>} : vector<16x32xbf16>, vector<32x128xbf16>, vector<16x128xf32> -> vector<16x128xf32>
    %35 = arith.addf %15, %34 : vector<16x128xf32>
    %36 = vector.extract_strided_slice %12 {offsets = [0, 32], sizes = [16, 32], strides = [1, 1]} : vector<32x384xbf16> to vector<16x32xbf16>
    %37 = vector.extract_strided_slice %12 {offsets = [0, 160], sizes = [16, 32], strides = [1, 1]} : vector<32x384xbf16> to vector<16x32xbf16>
    %38 = vector.extract_strided_slice %12 {offsets = [0, 288], sizes = [16, 32], strides = [1, 1]} : vector<32x384xbf16> to vector<16x32xbf16>
    %cst_17 = arith.constant dense<0.000000e+00> : vector<16x16xf32>
    %39 = tpu.matmul %36, %37, %cst_17 {dimension_numbers = #tpu.dot_dimension_numbers<[1], [1], [0], [0], [0, 0, 1, 0], [], []>} : vector<16x32xbf16>, vector<16x32xbf16>, vector<16x16xf32> -> vector<16x16xf32>
    %cst_18 = arith.constant dense<0xFF800000> : vector<16xf32>
    %40 = vector.multi_reduction <maximumf>, %39, %cst_18 [1] : vector<16x16xf32> to vector<16xf32>
    %41 = vector.shape_cast %40 : vector<16xf32> to vector<16x1xf32>
    %42 = vector.broadcast %41 : vector<16x1xf32> to vector<16x16xf32>
    %43 = arith.subf %39, %42 : vector<16x16xf32>
    %44 = math.exp %43 : vector<16x16xf32>
    %cst_19 = arith.constant dense<0.000000e+00> : vector<16xf32>
    %45 = vector.multi_reduction <add>, %44, %cst_19 [1] : vector<16x16xf32> to vector<16xf32>
    %46 = vector.shape_cast %45 : vector<16xf32> to vector<16x1xf32>
    %47 = tpu.reciprocal %46 {approx = true} : vector<16x1xf32> -> vector<16x1xf32>
    %48 = vector.broadcast %47 : vector<16x1xf32> to vector<16x16xf32>
    %49 = arith.mulf %44, %48 : vector<16x16xf32>
    %50 = arith.truncf %49 : vector<16x16xf32> to vector<16x16xbf16>
    %cst_20 = arith.constant dense<0.000000e+00> : vector<16x32xf32>
    %51 = tpu.matmul %50, %38, %cst_20 {dimension_numbers = #tpu.dot_dimension_numbers<[1], [0], [0], [1], [0, 0, 1, 1], [], []>} : vector<16x16xbf16>, vector<16x32xbf16>, vector<16x32xf32> -> vector<16x32xf32>
    %52 = arith.truncf %51 : vector<16x32xf32> to vector<16x32xbf16>
    %53 = vector.extract_strided_slice %14 {offsets = [32, 0], sizes = [32, 128], strides = [1, 1]} : vector<128x128xbf16> to vector<32x128xbf16>
    %cst_21 = arith.constant dense<0.000000e+00> : vector<16x128xf32>
    %54 = tpu.matmul %52, %53, %cst_21 {dimension_numbers = #tpu.dot_dimension_numbers<[1], [0], [0], [1], [0, 0, 1, 1], [], []>} : vector<16x32xbf16>, vector<32x128xbf16>, vector<16x128xf32> -> vector<16x128xf32>
    %55 = arith.addf %35, %54 : vector<16x128xf32>
    %56 = vector.extract_strided_slice %12 {offsets = [0, 64], sizes = [16, 32], strides = [1, 1]} : vector<32x384xbf16> to vector<16x32xbf16>
    %57 = vector.extract_strided_slice %12 {offsets = [0, 192], sizes = [16, 32], strides = [1, 1]} : vector<32x384xbf16> to vector<16x32xbf16>
    %58 = vector.extract_strided_slice %12 {offsets = [0, 320], sizes = [16, 32], strides = [1, 1]} : vector<32x384xbf16> to vector<16x32xbf16>
    %cst_22 = arith.constant dense<0.000000e+00> : vector<16x16xf32>
    %59 = tpu.matmul %56, %57, %cst_22 {dimension_numbers = #tpu.dot_dimension_numbers<[1], [1], [0], [0], [0, 0, 1, 0], [], []>} : vector<16x32xbf16>, vector<16x32xbf16>, vector<16x16xf32> -> vector<16x16xf32>
    %cst_23 = arith.constant dense<0xFF800000> : vector<16xf32>
    %60 = vector.multi_reduction <maximumf>, %59, %cst_23 [1] : vector<16x16xf32> to vector<16xf32>
    %61 = vector.shape_cast %60 : vector<16xf32> to vector<16x1xf32>
    %62 = vector.broadcast %61 : vector<16x1xf32> to vector<16x16xf32>
    %63 = arith.subf %59, %62 : vector<16x16xf32>
    %64 = math.exp %63 : vector<16x16xf32>
    %cst_24 = arith.constant dense<0.000000e+00> : vector<16xf32>
    %65 = vector.multi_reduction <add>, %64, %cst_24 [1] : vector<16x16xf32> to vector<16xf32>
    %66 = vector.shape_cast %65 : vector<16xf32> to vector<16x1xf32>
    %67 = tpu.reciprocal %66 {approx = true} : vector<16x1xf32> -> vector<16x1xf32>
    %68 = vector.broadcast %67 : vector<16x1xf32> to vector<16x16xf32>
    %69 = arith.mulf %64, %68 : vector<16x16xf32>
    %70 = arith.truncf %69 : vector<16x16xf32> to vector<16x16xbf16>
    %cst_25 = arith.constant dense<0.000000e+00> : vector<16x32xf32>
    %71 = tpu.matmul %70, %58, %cst_25 {dimension_numbers = #tpu.dot_dimension_numbers<[1], [0], [0], [1], [0, 0, 1, 1], [], []>} : vector<16x16xbf16>, vector<16x32xbf16>, vector<16x32xf32> -> vector<16x32xf32>
    %72 = arith.truncf %71 : vector<16x32xf32> to vector<16x32xbf16>
    %73 = vector.extract_strided_slice %14 {offsets = [64, 0], sizes = [32, 128], strides = [1, 1]} : vector<128x128xbf16> to vector<32x128xbf16>
    %cst_26 = arith.constant dense<0.000000e+00> : vector<16x128xf32>
    %74 = tpu.matmul %72, %73, %cst_26 {dimension_numbers = #tpu.dot_dimension_numbers<[1], [0], [0], [1], [0, 0, 1, 1], [], []>} : vector<16x32xbf16>, vector<32x128xbf16>, vector<16x128xf32> -> vector<16x128xf32>
    %75 = arith.addf %55, %74 : vector<16x128xf32>
    %76 = vector.extract_strided_slice %12 {offsets = [0, 96], sizes = [16, 32], strides = [1, 1]} : vector<32x384xbf16> to vector<16x32xbf16>
    %77 = vector.extract_strided_slice %12 {offsets = [0, 224], sizes = [16, 32], strides = [1, 1]} : vector<32x384xbf16> to vector<16x32xbf16>
    %78 = vector.extract_strided_slice %12 {offsets = [0, 352], sizes = [16, 32], strides = [1, 1]} : vector<32x384xbf16> to vector<16x32xbf16>
    %cst_27 = arith.constant dense<0.000000e+00> : vector<16x16xf32>
    %79 = tpu.matmul %76, %77, %cst_27 {dimension_numbers = #tpu.dot_dimension_numbers<[1], [1], [0], [0], [0, 0, 1, 0], [], []>} : vector<16x32xbf16>, vector<16x32xbf16>, vector<16x16xf32> -> vector<16x16xf32>
    %cst_28 = arith.constant dense<0xFF800000> : vector<16xf32>
    %80 = vector.multi_reduction <maximumf>, %79, %cst_28 [1] : vector<16x16xf32> to vector<16xf32>
    %81 = vector.shape_cast %80 : vector<16xf32> to vector<16x1xf32>
    %82 = vector.broadcast %81 : vector<16x1xf32> to vector<16x16xf32>
    %83 = arith.subf %79, %82 : vector<16x16xf32>
    %84 = math.exp %83 : vector<16x16xf32>
    %cst_29 = arith.constant dense<0.000000e+00> : vector<16xf32>
    %85 = vector.multi_reduction <add>, %84, %cst_29 [1] : vector<16x16xf32> to vector<16xf32>
    %86 = vector.shape_cast %85 : vector<16xf32> to vector<16x1xf32>
    %87 = tpu.reciprocal %86 {approx = true} : vector<16x1xf32> -> vector<16x1xf32>
    %88 = vector.broadcast %87 : vector<16x1xf32> to vector<16x16xf32>
    %89 = arith.mulf %84, %88 : vector<16x16xf32>
    %90 = arith.truncf %89 : vector<16x16xf32> to vector<16x16xbf16>
    %cst_30 = arith.constant dense<0.000000e+00> : vector<16x32xf32>
    %91 = tpu.matmul %90, %78, %cst_30 {dimension_numbers = #tpu.dot_dimension_numbers<[1], [0], [0], [1], [0, 0, 1, 1], [], []>} : vector<16x16xbf16>, vector<16x32xbf16>, vector<16x32xf32> -> vector<16x32xf32>
    %92 = arith.truncf %91 : vector<16x32xf32> to vector<16x32xbf16>
    %93 = vector.extract_strided_slice %14 {offsets = [96, 0], sizes = [32, 128], strides = [1, 1]} : vector<128x128xbf16> to vector<32x128xbf16>
    %cst_31 = arith.constant dense<0.000000e+00> : vector<16x128xf32>
    %94 = tpu.matmul %92, %93, %cst_31 {dimension_numbers = #tpu.dot_dimension_numbers<[1], [0], [0], [1], [0, 0, 1, 1], [], []>} : vector<16x32xbf16>, vector<32x128xbf16>, vector<16x128xf32> -> vector<16x128xf32>
    %95 = arith.addf %75, %94 : vector<16x128xf32>
    %cst_32 = arith.constant 0.000000e+00 : f32
    %96 = vector.broadcast %cst_32 : f32 to vector<16x128xf32>
    %97 = vector.extract_strided_slice %12 {offsets = [16, 0], sizes = [16, 32], strides = [1, 1]} : vector<32x384xbf16> to vector<16x32xbf16>
    %98 = vector.extract_strided_slice %12 {offsets = [16, 128], sizes = [16, 32], strides = [1, 1]} : vector<32x384xbf16> to vector<16x32xbf16>
    %99 = vector.extract_strided_slice %12 {offsets = [16, 256], sizes = [16, 32], strides = [1, 1]} : vector<32x384xbf16> to vector<16x32xbf16>
    %cst_33 = arith.constant dense<0.000000e+00> : vector<16x16xf32>
    %100 = tpu.matmul %97, %98, %cst_33 {dimension_numbers = #tpu.dot_dimension_numbers<[1], [1], [0], [0], [0, 0, 1, 0], [], []>} : vector<16x32xbf16>, vector<16x32xbf16>, vector<16x16xf32> -> vector<16x16xf32>
    %cst_34 = arith.constant dense<0xFF800000> : vector<16xf32>
    %101 = vector.multi_reduction <maximumf>, %100, %cst_34 [1] : vector<16x16xf32> to vector<16xf32>
    %102 = vector.shape_cast %101 : vector<16xf32> to vector<16x1xf32>
    %103 = vector.broadcast %102 : vector<16x1xf32> to vector<16x16xf32>
    %104 = arith.subf %100, %103 : vector<16x16xf32>
    %105 = math.exp %104 : vector<16x16xf32>
    %cst_35 = arith.constant dense<0.000000e+00> : vector<16xf32>
    %106 = vector.multi_reduction <add>, %105, %cst_35 [1] : vector<16x16xf32> to vector<16xf32>
    %107 = vector.shape_cast %106 : vector<16xf32> to vector<16x1xf32>
    %108 = tpu.reciprocal %107 {approx = true} : vector<16x1xf32> -> vector<16x1xf32>
    %109 = vector.broadcast %108 : vector<16x1xf32> to vector<16x16xf32>
    %110 = arith.mulf %105, %109 : vector<16x16xf32>
    %111 = arith.truncf %110 : vector<16x16xf32> to vector<16x16xbf16>
    %cst_36 = arith.constant dense<0.000000e+00> : vector<16x32xf32>
    %112 = tpu.matmul %111, %99, %cst_36 {dimension_numbers = #tpu.dot_dimension_numbers<[1], [0], [0], [1], [0, 0, 1, 1], [], []>} : vector<16x16xbf16>, vector<16x32xbf16>, vector<16x32xf32> -> vector<16x32xf32>
    %113 = arith.truncf %112 : vector<16x32xf32> to vector<16x32xbf16>
    %114 = vector.extract_strided_slice %14 {offsets = [0, 0], sizes = [32, 128], strides = [1, 1]} : vector<128x128xbf16> to vector<32x128xbf16>
    %cst_37 = arith.constant dense<0.000000e+00> : vector<16x128xf32>
    %115 = tpu.matmul %113, %114, %cst_37 {dimension_numbers = #tpu.dot_dimension_numbers<[1], [0], [0], [1], [0, 0, 1, 1], [], []>} : vector<16x32xbf16>, vector<32x128xbf16>, vector<16x128xf32> -> vector<16x128xf32>
    %116 = arith.addf %96, %115 : vector<16x128xf32>
    %117 = vector.extract_strided_slice %12 {offsets = [16, 32], sizes = [16, 32], strides = [1, 1]} : vector<32x384xbf16> to vector<16x32xbf16>
    %118 = vector.extract_strided_slice %12 {offsets = [16, 160], sizes = [16, 32], strides = [1, 1]} : vector<32x384xbf16> to vector<16x32xbf16>
    %119 = vector.extract_strided_slice %12 {offsets = [16, 288], sizes = [16, 32], strides = [1, 1]} : vector<32x384xbf16> to vector<16x32xbf16>
    %cst_38 = arith.constant dense<0.000000e+00> : vector<16x16xf32>
    %120 = tpu.matmul %117, %118, %cst_38 {dimension_numbers = #tpu.dot_dimension_numbers<[1], [1], [0], [0], [0, 0, 1, 0], [], []>} : vector<16x32xbf16>, vector<16x32xbf16>, vector<16x16xf32> -> vector<16x16xf32>
    %cst_39 = arith.constant dense<0xFF800000> : vector<16xf32>
    %121 = vector.multi_reduction <maximumf>, %120, %cst_39 [1] : vector<16x16xf32> to vector<16xf32>
    %122 = vector.shape_cast %121 : vector<16xf32> to vector<16x1xf32>
    %123 = vector.broadcast %122 : vector<16x1xf32> to vector<16x16xf32>
    %124 = arith.subf %120, %123 : vector<16x16xf32>
    %125 = math.exp %124 : vector<16x16xf32>
    %cst_40 = arith.constant dense<0.000000e+00> : vector<16xf32>
    %126 = vector.multi_reduction <add>, %125, %cst_40 [1] : vector<16x16xf32> to vector<16xf32>
    %127 = vector.shape_cast %126 : vector<16xf32> to vector<16x1xf32>
    %128 = tpu.reciprocal %127 {approx = true} : vector<16x1xf32> -> vector<16x1xf32>
    %129 = vector.broadcast %128 : vector<16x1xf32> to vector<16x16xf32>
    %130 = arith.mulf %125, %129 : vector<16x16xf32>
    %131 = arith.truncf %130 : vector<16x16xf32> to vector<16x16xbf16>
    %cst_41 = arith.constant dense<0.000000e+00> : vector<16x32xf32>
    %132 = tpu.matmul %131, %119, %cst_41 {dimension_numbers = #tpu.dot_dimension_numbers<[1], [0], [0], [1], [0, 0, 1, 1], [], []>} : vector<16x16xbf16>, vector<16x32xbf16>, vector<16x32xf32> -> vector<16x32xf32>
    %133 = arith.truncf %132 : vector<16x32xf32> to vector<16x32xbf16>
    %134 = vector.extract_strided_slice %14 {offsets = [32, 0], sizes = [32, 128], strides = [1, 1]} : vector<128x128xbf16> to vector<32x128xbf16>
    %cst_42 = arith.constant dense<0.000000e+00> : vector<16x128xf32>
    %135 = tpu.matmul %133, %134, %cst_42 {dimension_numbers = #tpu.dot_dimension_numbers<[1], [0], [0], [1], [0, 0, 1, 1], [], []>} : vector<16x32xbf16>, vector<32x128xbf16>, vector<16x128xf32> -> vector<16x128xf32>
    %136 = arith.addf %116, %135 : vector<16x128xf32>
    %137 = vector.extract_strided_slice %12 {offsets = [16, 64], sizes = [16, 32], strides = [1, 1]} : vector<32x384xbf16> to vector<16x32xbf16>
    %138 = vector.extract_strided_slice %12 {offsets = [16, 192], sizes = [16, 32], strides = [1, 1]} : vector<32x384xbf16> to vector<16x32xbf16>
    %139 = vector.extract_strided_slice %12 {offsets = [16, 320], sizes = [16, 32], strides = [1, 1]} : vector<32x384xbf16> to vector<16x32xbf16>
    %cst_43 = arith.constant dense<0.000000e+00> : vector<16x16xf32>
    %140 = tpu.matmul %137, %138, %cst_43 {dimension_numbers = #tpu.dot_dimension_numbers<[1], [1], [0], [0], [0, 0, 1, 0], [], []>} : vector<16x32xbf16>, vector<16x32xbf16>, vector<16x16xf32> -> vector<16x16xf32>
    %cst_44 = arith.constant dense<0xFF800000> : vector<16xf32>
    %141 = vector.multi_reduction <maximumf>, %140, %cst_44 [1] : vector<16x16xf32> to vector<16xf32>
    %142 = vector.shape_cast %141 : vector<16xf32> to vector<16x1xf32>
    %143 = vector.broadcast %142 : vector<16x1xf32> to vector<16x16xf32>
    %144 = arith.subf %140, %143 : vector<16x16xf32>
    %145 = math.exp %144 : vector<16x16xf32>
    %cst_45 = arith.constant dense<0.000000e+00> : vector<16xf32>
    %146 = vector.multi_reduction <add>, %145, %cst_45 [1] : vector<16x16xf32> to vector<16xf32>
    %147 = vector.shape_cast %146 : vector<16xf32> to vector<16x1xf32>
    %148 = tpu.reciprocal %147 {approx = true} : vector<16x1xf32> -> vector<16x1xf32>
    %149 = vector.broadcast %148 : vector<16x1xf32> to vector<16x16xf32>
    %150 = arith.mulf %145, %149 : vector<16x16xf32>
    %151 = arith.truncf %150 : vector<16x16xf32> to vector<16x16xbf16>
    %cst_46 = arith.constant dense<0.000000e+00> : vector<16x32xf32>
    %152 = tpu.matmul %151, %139, %cst_46 {dimension_numbers = #tpu.dot_dimension_numbers<[1], [0], [0], [1], [0, 0, 1, 1], [], []>} : vector<16x16xbf16>, vector<16x32xbf16>, vector<16x32xf32> -> vector<16x32xf32>
    %153 = arith.truncf %152 : vector<16x32xf32> to vector<16x32xbf16>
    %154 = vector.extract_strided_slice %14 {offsets = [64, 0], sizes = [32, 128], strides = [1, 1]} : vector<128x128xbf16> to vector<32x128xbf16>
    %cst_47 = arith.constant dense<0.000000e+00> : vector<16x128xf32>
    %155 = tpu.matmul %153, %154, %cst_47 {dimension_numbers = #tpu.dot_dimension_numbers<[1], [0], [0], [1], [0, 0, 1, 1], [], []>} : vector<16x32xbf16>, vector<32x128xbf16>, vector<16x128xf32> -> vector<16x128xf32>
    %156 = arith.addf %136, %155 : vector<16x128xf32>
    %157 = vector.extract_strided_slice %12 {offsets = [16, 96], sizes = [16, 32], strides = [1, 1]} : vector<32x384xbf16> to vector<16x32xbf16>
    %158 = vector.extract_strided_slice %12 {offsets = [16, 224], sizes = [16, 32], strides = [1, 1]} : vector<32x384xbf16> to vector<16x32xbf16>
    %159 = vector.extract_strided_slice %12 {offsets = [16, 352], sizes = [16, 32], strides = [1, 1]} : vector<32x384xbf16> to vector<16x32xbf16>
    %cst_48 = arith.constant dense<0.000000e+00> : vector<16x16xf32>
    %160 = tpu.matmul %157, %158, %cst_48 {dimension_numbers = #tpu.dot_dimension_numbers<[1], [1], [0], [0], [0, 0, 1, 0], [], []>} : vector<16x32xbf16>, vector<16x32xbf16>, vector<16x16xf32> -> vector<16x16xf32>
    %cst_49 = arith.constant dense<0xFF800000> : vector<16xf32>
    %161 = vector.multi_reduction <maximumf>, %160, %cst_49 [1] : vector<16x16xf32> to vector<16xf32>
    %162 = vector.shape_cast %161 : vector<16xf32> to vector<16x1xf32>
    %163 = vector.broadcast %162 : vector<16x1xf32> to vector<16x16xf32>
    %164 = arith.subf %160, %163 : vector<16x16xf32>
    %165 = math.exp %164 : vector<16x16xf32>
    %cst_50 = arith.constant dense<0.000000e+00> : vector<16xf32>
    %166 = vector.multi_reduction <add>, %165, %cst_50 [1] : vector<16x16xf32> to vector<16xf32>
    %167 = vector.shape_cast %166 : vector<16xf32> to vector<16x1xf32>
    %168 = tpu.reciprocal %167 {approx = true} : vector<16x1xf32> -> vector<16x1xf32>
    %169 = vector.broadcast %168 : vector<16x1xf32> to vector<16x16xf32>
    %170 = arith.mulf %165, %169 : vector<16x16xf32>
    %171 = arith.truncf %170 : vector<16x16xf32> to vector<16x16xbf16>
    %cst_51 = arith.constant dense<0.000000e+00> : vector<16x32xf32>
    %172 = tpu.matmul %171, %159, %cst_51 {dimension_numbers = #tpu.dot_dimension_numbers<[1], [0], [0], [1], [0, 0, 1, 1], [], []>} : vector<16x16xbf16>, vector<16x32xbf16>, vector<16x32xf32> -> vector<16x32xf32>
    %173 = arith.truncf %172 : vector<16x32xf32> to vector<16x32xbf16>
    %174 = vector.extract_strided_slice %14 {offsets = [96, 0], sizes = [32, 128], strides = [1, 1]} : vector<128x128xbf16> to vector<32x128xbf16>
    %cst_52 = arith.constant dense<0.000000e+00> : vector<16x128xf32>
    %175 = tpu.matmul %173, %174, %cst_52 {dimension_numbers = #tpu.dot_dimension_numbers<[1], [0], [0], [1], [0, 0, 1, 1], [], []>} : vector<16x32xbf16>, vector<32x128xbf16>, vector<16x128xf32> -> vector<16x128xf32>
    %176 = arith.addf %156, %175 : vector<16x128xf32>
    %177 = tpu.concatenate %95, %176 in 0 : vector<16x128xf32>, vector<16x128xf32> -> vector<32x128xf32>
    %c0_53 = arith.constant 0 : index
    %c0_54 = arith.constant 0 : index
    %c0_55 = arith.constant 0 : index
    %178 = vector.load %arg6[%c0_53, %c0_54, %c0_55] : memref<1x1x128xf32, #tpu.memory_space<vmem>>, vector<1x1x128xf32>
    %179 = vector.shape_cast %178 : vector<1x1x128xf32> to vector<1x128xf32>
    %180 = vector.broadcast %179 : vector<1x128xf32> to vector<32x128xf32>
    %181 = arith.addf %177, %180 : vector<32x128xf32>
    %182 = arith.addf %3, %181 : vector<32x128xf32>
    %c0_56 = arith.constant 0 : index
    %c0_57 = arith.constant 0 : index
    %c0_58 = arith.constant 0 : index
    %183 = vector.load %arg7[%c0_56, %c0_57, %c0_58] : memref<1x1x128xf32, #tpu.memory_space<vmem>>, vector<1x1x128xf32>
    %184 = vector.shape_cast %183 : vector<1x1x128xf32> to vector<1x128xf32>
    %c0_59 = arith.constant 0 : index
    %c0_60 = arith.constant 0 : index
    %c0_61 = arith.constant 0 : index
    %185 = vector.load %arg8[%c0_59, %c0_60, %c0_61] : memref<1x1x128xf32, #tpu.memory_space<vmem>>, vector<1x1x128xf32>
    %186 = vector.shape_cast %185 : vector<1x1x128xf32> to vector<1x128xf32>
    %cst_62 = arith.constant dense<0.000000e+00> : vector<32xf32>
    %187 = vector.multi_reduction <add>, %182, %cst_62 [1] : vector<32x128xf32> to vector<32xf32>
    %188 = vector.shape_cast %187 : vector<32xf32> to vector<32x1xf32>
    %cst_63 = arith.constant 1.280000e+02 : f32
    %189 = vector.broadcast %cst_63 : f32 to vector<32x1xf32>
    %190 = arith.divf %188, %189 : vector<32x1xf32>
    %191 = vector.broadcast %190 : vector<32x1xf32> to vector<32x128xf32>
    %192 = arith.subf %182, %191 : vector<32x128xf32>
    %193 = arith.mulf %192, %192 : vector<32x128xf32>
    %cst_64 = arith.constant dense<0.000000e+00> : vector<32xf32>
    %194 = vector.multi_reduction <add>, %193, %cst_64 [1] : vector<32x128xf32> to vector<32xf32>
    %195 = vector.shape_cast %194 : vector<32xf32> to vector<32x1xf32>
    %cst_65 = arith.constant 1.280000e+02 : f32
    %196 = vector.broadcast %cst_65 : f32 to vector<32x1xf32>
    %197 = arith.divf %195, %196 : vector<32x1xf32>
    %cst_66 = arith.constant 9.99999974E-6 : f32
    %198 = vector.broadcast %cst_66 : f32 to vector<32x1xf32>
    %199 = arith.addf %197, %198 : vector<32x1xf32>
    %200 = math.rsqrt %199 : vector<32x1xf32>
    %201 = vector.broadcast %200 : vector<32x1xf32> to vector<32x128xf32>
    %202 = arith.mulf %192, %201 : vector<32x128xf32>
    %203 = vector.broadcast %184 : vector<1x128xf32> to vector<32x128xf32>
    %204 = arith.mulf %202, %203 : vector<32x128xf32>
    %205 = vector.broadcast %186 : vector<1x128xf32> to vector<32x128xf32>
    %206 = arith.addf %204, %205 : vector<32x128xf32>
    %207 = arith.truncf %206 : vector<32x128xf32> to vector<32x128xbf16>
    %c0_67 = arith.constant 0 : index
    %c0_68 = arith.constant 0 : index
    %c0_69 = arith.constant 0 : index
    %208 = vector.load %arg9[%c0_67, %c0_68, %c0_69] : memref<1x128x256xbf16, #tpu.memory_space<vmem>>, vector<1x128x256xbf16>
    %209 = vector.shape_cast %208 : vector<1x128x256xbf16> to vector<128x256xbf16>
    %cst_70 = arith.constant dense<0.000000e+00> : vector<32x256xf32>
    %210 = tpu.matmul %207, %209, %cst_70 {dimension_numbers = #tpu.dot_dimension_numbers<[1], [0], [0], [1], [0, 0, 1, 1], [], []>} : vector<32x128xbf16>, vector<128x256xbf16>, vector<32x256xf32> -> vector<32x256xf32>
    %c0_71 = arith.constant 0 : index
    %c0_72 = arith.constant 0 : index
    %c0_73 = arith.constant 0 : index
    %211 = vector.load %arg10[%c0_71, %c0_72, %c0_73] : memref<1x1x256xf32, #tpu.memory_space<vmem>>, vector<1x1x256xf32>
    %212 = vector.shape_cast %211 : vector<1x1x256xf32> to vector<1x256xf32>
    %213 = vector.broadcast %212 : vector<1x256xf32> to vector<32x256xf32>
    %214 = arith.addf %210, %213 : vector<32x256xf32>
    %cst_74 = arith.constant 0.000000e+00 : f32
    %215 = vector.broadcast %cst_74 : f32 to vector<32x256xf32>
    %216 = arith.maximumf %214, %215 : vector<32x256xf32>
    %217 = arith.truncf %216 : vector<32x256xf32> to vector<32x256xbf16>
    %c0_75 = arith.constant 0 : index
    %c0_76 = arith.constant 0 : index
    %c0_77 = arith.constant 0 : index
    %218 = vector.load %arg11[%c0_75, %c0_76, %c0_77] : memref<1x256x128xbf16, #tpu.memory_space<vmem>>, vector<1x256x128xbf16>
    %219 = vector.shape_cast %218 : vector<1x256x128xbf16> to vector<256x128xbf16>
    %cst_78 = arith.constant dense<0.000000e+00> : vector<32x128xf32>
    %220 = tpu.matmul %217, %219, %cst_78 {dimension_numbers = #tpu.dot_dimension_numbers<[1], [0], [0], [1], [0, 0, 1, 1], [], []>} : vector<32x256xbf16>, vector<256x128xbf16>, vector<32x128xf32> -> vector<32x128xf32>
    %c0_79 = arith.constant 0 : index
    %c0_80 = arith.constant 0 : index
    %c0_81 = arith.constant 0 : index
    %221 = vector.load %arg12[%c0_79, %c0_80, %c0_81] : memref<1x1x128xf32, #tpu.memory_space<vmem>>, vector<1x1x128xf32>
    %222 = vector.shape_cast %221 : vector<1x1x128xf32> to vector<1x128xf32>
    %223 = vector.broadcast %222 : vector<1x128xf32> to vector<32x128xf32>
    %224 = arith.addf %220, %223 : vector<32x128xf32>
    %225 = arith.addf %206, %224 : vector<32x128xf32>
    %c0_82 = arith.constant 0 : index
    %c0_83 = arith.constant 0 : index
    %c0_84 = arith.constant 0 : index
    %226 = vector.load %arg13[%c0_82, %c0_83, %c0_84] : memref<1x1x128xf32, #tpu.memory_space<vmem>>, vector<1x1x128xf32>
    %227 = vector.shape_cast %226 : vector<1x1x128xf32> to vector<1x128xf32>
    %c0_85 = arith.constant 0 : index
    %c0_86 = arith.constant 0 : index
    %c0_87 = arith.constant 0 : index
    %228 = vector.load %arg14[%c0_85, %c0_86, %c0_87] : memref<1x1x128xf32, #tpu.memory_space<vmem>>, vector<1x1x128xf32>
    %229 = vector.shape_cast %228 : vector<1x1x128xf32> to vector<1x128xf32>
    %cst_88 = arith.constant dense<0.000000e+00> : vector<32xf32>
    %230 = vector.multi_reduction <add>, %225, %cst_88 [1] : vector<32x128xf32> to vector<32xf32>
    %231 = vector.shape_cast %230 : vector<32xf32> to vector<32x1xf32>
    %cst_89 = arith.constant 1.280000e+02 : f32
    %232 = vector.broadcast %cst_89 : f32 to vector<32x1xf32>
    %233 = arith.divf %231, %232 : vector<32x1xf32>
    %234 = vector.broadcast %233 : vector<32x1xf32> to vector<32x128xf32>
    %235 = arith.subf %225, %234 : vector<32x128xf32>
    %236 = arith.mulf %235, %235 : vector<32x128xf32>
    %cst_90 = arith.constant dense<0.000000e+00> : vector<32xf32>
    %237 = vector.multi_reduction <add>, %236, %cst_90 [1] : vector<32x128xf32> to vector<32xf32>
    %238 = vector.shape_cast %237 : vector<32xf32> to vector<32x1xf32>
    %cst_91 = arith.constant 1.280000e+02 : f32
    %239 = vector.broadcast %cst_91 : f32 to vector<32x1xf32>
    %240 = arith.divf %238, %239 : vector<32x1xf32>
    %cst_92 = arith.constant 9.99999974E-6 : f32
    %241 = vector.broadcast %cst_92 : f32 to vector<32x1xf32>
    %242 = arith.addf %240, %241 : vector<32x1xf32>
    %243 = math.rsqrt %242 : vector<32x1xf32>
    %244 = vector.broadcast %243 : vector<32x1xf32> to vector<32x128xf32>
    %245 = arith.mulf %235, %244 : vector<32x128xf32>
    %246 = vector.broadcast %227 : vector<1x128xf32> to vector<32x128xf32>
    %247 = arith.mulf %245, %246 : vector<32x128xf32>
    %248 = vector.broadcast %229 : vector<1x128xf32> to vector<32x128xf32>
    %249 = arith.addf %247, %248 : vector<32x128xf32>
    %c0_93 = arith.constant 0 : index
    %c0_94 = arith.constant 0 : index
    %250 = vector.load %arg16[%c0_93, %c0_94] : memref<32x128xf32, #tpu.memory_space<vmem>>, vector<32x128xf32>
    tpu.vector_store %arg16[%c0_93, %c0_94], %249 {strides = array<i32>} : memref<32x128xf32, #tpu.memory_space<vmem>>, vector<32x128xf32>,
    %c1_i32 = arith.constant 1 : i32
    %251 = arith.cmpi eq, %arg1, %c1_i32 : i32
    %252 = arith.extui %251 : i1 to i32
    %c0_i32_95 = arith.constant 0 : i32
    %253 = arith.cmpi ne, %252, %c0_i32_95 : i32
    scf.if %253 {
      %254 = arith.truncf %249 : vector<32x128xf32> to vector<32x128xbf16>
      %c0_96 = arith.constant 0 : index
      %c0_97 = arith.constant 0 : index
      %255 = vector.load %arg15[%c0_96, %c0_97] : memref<32x128xbf16, #tpu.memory_space<vmem>>, vector<32x128xbf16>
      tpu.vector_store %arg15[%c0_96, %c0_97], %254 {strides = array<i32>} : memref<32x128xbf16, #tpu.memory_space<vmem>>, vector<32x128xbf16>,
    } else {
    }
    return
  }
  func.func @transform_0(%arg0: i32, %arg1: i32) -> (i32, i32) {
    %c0_i32 = arith.constant 0 : i32
    %c0_i32_0 = arith.constant 0 : i32
    return %arg0, %c0_i32 : i32, i32
  }
  func.func @transform_1(%arg0: i32, %arg1: i32) -> (i32, i32, i32) {
    %c0_i32 = arith.constant 0 : i32
    %c0_i32_0 = arith.constant 0 : i32
    %c0_i32_1 = arith.constant 0 : i32
    return %arg1, %c0_i32, %c0_i32_0 : i32, i32, i32
  }
  func.func @transform_2(%arg0: i32, %arg1: i32) -> (i32, i32, i32) {
    %c0_i32 = arith.constant 0 : i32
    %c0_i32_0 = arith.constant 0 : i32
    %c0_i32_1 = arith.constant 0 : i32
    return %arg1, %c0_i32, %c0_i32_0 : i32, i32, i32
  }
  func.func @transform_3(%arg0: i32, %arg1: i32) -> (i32, i32, i32) {
    %c0_i32 = arith.constant 0 : i32
    %c0_i32_0 = arith.constant 0 : i32
    %c0_i32_1 = arith.constant 0 : i32
    return %arg1, %c0_i32, %c0_i32_0 : i32, i32, i32
  }
  func.func @transform_4(%arg0: i32, %arg1: i32) -> (i32, i32, i32) {
    %c0_i32 = arith.constant 0 : i32
    %c0_i32_0 = arith.constant 0 : i32
    %c0_i32_1 = arith.constant 0 : i32
    return %arg1, %c0_i32, %c0_i32_0 : i32, i32, i32
  }
  func.func @transform_5(%arg0: i32, %arg1: i32) -> (i32, i32, i32) {
    %c0_i32 = arith.constant 0 : i32
    %c0_i32_0 = arith.constant 0 : i32
    %c0_i32_1 = arith.constant 0 : i32
    return %arg1, %c0_i32, %c0_i32_0 : i32, i32, i32
  }
  func.func @transform_6(%arg0: i32, %arg1: i32) -> (i32, i32, i32) {
    %c0_i32 = arith.constant 0 : i32
    %c0_i32_0 = arith.constant 0 : i32
    %c0_i32_1 = arith.constant 0 : i32
    return %arg1, %c0_i32, %c0_i32_0 : i32, i32, i32
  }
  func.func @transform_7(%arg0: i32, %arg1: i32) -> (i32, i32, i32) {
    %c0_i32 = arith.constant 0 : i32
    %c0_i32_0 = arith.constant 0 : i32
    %c0_i32_1 = arith.constant 0 : i32
    return %arg1, %c0_i32, %c0_i32_0 : i32, i32, i32
  }
  func.func @transform_8(%arg0: i32, %arg1: i32) -> (i32, i32, i32) {
    %c0_i32 = arith.constant 0 : i32
    %c0_i32_0 = arith.constant 0 : i32
    %c0_i32_1 = arith.constant 0 : i32
    return %arg1, %c0_i32, %c0_i32_0 : i32, i32, i32
  }
  func.func @transform_9(%arg0: i32, %arg1: i32) -> (i32, i32, i32) {
    %c0_i32 = arith.constant 0 : i32
    %c0_i32_0 = arith.constant 0 : i32
    %c0_i32_1 = arith.constant 0 : i32
    return %arg1, %c0_i32, %c0_i32_0 : i32, i32, i32
  }
  func.func @transform_10(%arg0: i32, %arg1: i32) -> (i32, i32, i32) {
    %c0_i32 = arith.constant 0 : i32
    %c0_i32_0 = arith.constant 0 : i32
    %c0_i32_1 = arith.constant 0 : i32
    return %arg1, %c0_i32, %c0_i32_0 : i32, i32, i32
  }
  func.func @transform_11(%arg0: i32, %arg1: i32) -> (i32, i32, i32) {
    %c0_i32 = arith.constant 0 : i32
    %c0_i32_0 = arith.constant 0 : i32
    %c0_i32_1 = arith.constant 0 : i32
    return %arg1, %c0_i32, %c0_i32_0 : i32, i32, i32
  }
  func.func @transform_12(%arg0: i32, %arg1: i32) -> (i32, i32, i32) {
    %c0_i32 = arith.constant 0 : i32
    %c0_i32_0 = arith.constant 0 : i32
    %c0_i32_1 = arith.constant 0 : i32
    return %arg1, %c0_i32, %c0_i32_0 : i32, i32, i32
  }
  func.func @transform_13(%arg0: i32, %arg1: i32) -> (i32, i32) {
    %c0_i32 = arith.constant 0 : i32
    %c0_i32_0 = arith.constant 0 : i32
    return %arg0, %c0_i32 : i32, i32
  }
}

</mosaic_0001>

<llo_original>
// kernel: mae_encoder_forward.1
$region0: #{mae_encoder_forward.1}
  #allocation0 [shape = 'u32[]', space=smem, size = 0x4, offset = 0x4, fixed_abs, tag = 'smem constant byte address 0x4 - core index']
  #allocation1 [shape = 'u32[144,128]{1,0:T(1,128)}', space=vmem, size = 0x12000, scoped, tag = 'internal scratch']
  #allocation2 [shape = 'f32[32,128]{1,0:T(8,128)}', space=vmem, size = 0x4000, scoped, tag = 'scratch operand']
  %s0 = inlined_call_operand.vmem [shape: bf16[32,128], index: 0, kind: input, shape index: {}]
  %s1 = inlined_call_operand.hbm [shape: bf16[2,128,384], index: 1, kind: input, shape index: {}]
  %s2 = inlined_call_operand.vmem [shape: f32[2,1,384], index: 2, kind: input, shape index: {}]
  %s3 = inlined_call_operand.hbm [shape: bf16[2,128,128], index: 3, kind: input, shape index: {}]
  %s4 = inlined_call_operand.vmem [shape: f32[2,1,128], index: 4, kind: input, shape index: {}]
  %s5 = inlined_call_operand.vmem [shape: f32[2,1,128], index: 5, kind: input, shape index: {}]
  %s6 = inlined_call_operand.vmem [shape: f32[2,1,128], index: 6, kind: input, shape index: {}]
  %s7 = inlined_call_operand.hbm [shape: bf16[2,128,256], index: 7, kind: input, shape index: {}]
  %s8 = inlined_call_operand.vmem [shape: f32[2,1,256], index: 8, kind: input, shape index: {}]
  %s9 = inlined_call_operand.hbm [shape: bf16[2,256,128], index: 9, kind: input, shape index: {}]
  %s10 = inlined_call_operand.vmem [shape: f32[2,1,128], index: 10, kind: input, shape index: {}]
  %s11 = inlined_call_operand.vmem [shape: f32[2,1,128], index: 11, kind: input, shape index: {}]
  %s12 = inlined_call_operand.vmem [shape: f32[2,1,128], index: 12, kind: input, shape index: {}]
  %s13 = inlined_call_operand.vmem [shape: bf16[32,128], index: 13, kind: output, shape index: {}]
  %s14 = sld [smem:[#allocation0]]
  $region109: #{mae_encoder_forward.1} parent=0
    _
  %s16 = ssub.s32 1, %s14
  %s17 = scalar_select 0, %s16, %s14
  $region1: #{mae_encoder_forward.1} parent=0
    #allocation3 [shape = 'u8[196608]{0}', space=vmem, size = 0x30000, scoped, tag = 'input window, operand 1']
    #allocation4 [shape = 's32[2]{0}', space=sflag, size = 0x8, scoped, tag = 'scoped memory for mae_encoder_forward.1']
    #allocation5 [shape = 'u8[65536]{0}', space=vmem, size = 0x10000, scoped, tag = 'input window, operand 3']
    #allocation6 [shape = 's32[2]{0}', space=sflag, size = 0x8, scoped, tag = 'scoped memory for mae_encoder_forward.1']
    #allocation7 [shape = 'u8[131072]{0}', space=vmem, size = 0x20000, scoped, tag = 'input window, operand 7']
    #allocation8 [shape = 'u8[131072]{0}', space=vmem, size = 0x20000, scoped, tag = 'input window, operand 9']
    #allocation9 [shape = 's32[2]{0}', space=sflag, size = 0x8, scoped, tag = 'scoped memory for mae_encoder_forward.1']
    %18 = vsyncpa [#allocation4], 0
    %s19 = scalar_lea.sflag [#allocation4], 1
    %20 = vsyncpa %s19, 0
    %21 = vsyncpa [#allocation6], 0
    %s22 = scalar_lea.sflag [#allocation6], 1
    %23 = vsyncpa %s22, 0
    %24 = vsyncpa [#allocation9], 0
    %s25 = scalar_lea.sflag [#allocation9], 1
    %26 = vsyncpa %s25, 0
    loop: start=0, step=1, limit=4
    $region2: #{mae_encoder_forward.1} parent=1 // loop_pre_header
      _
    $region3: #{mae_encoder_forward.1} parent=1 // loop_header
      %s28 = sphi 0, %s32
      %p29 = scmp.ge.s32.totalorder %s28, 4
      %s35 = sphi 0, %s47
      %s36 = sphi 0, %s43
      %s37 = sphi 0, %s35
      %s38 = sphi 0, %s36
      %s39 = sphi 0, %s37
      %s40 = sphi 0, %s38
      %s50 = sphi 0, %s52
      %s53 = sphi 0, %s50
      %s54 = sphi 0, %s53
      %s70 = sphi 0, %s54
      %s76 = sphi 0, %s78
      %s79 = sphi 0, %s76
      %s80 = sphi 0, %s79
      %s96 = sphi 0, %s80
      %s102 = sphi 0, %s104
      %s105 = sphi 0, %s102
      %s106 = sphi 0, %s105
      %s122 = sphi 0, %s106
      %s128 = sphi 0, %s130
      %s131 = sphi 0, %s128
      %s132 = sphi 0, %s131
      %s148 = sphi 0, %s132
      %s154 = sphi 0, %s156
      %s157 = sphi 0, %s154
      %s158 = sphi 0, %s157
      %s174 = sphi 0, %s158
      %s180 = sphi 0, %s182
      %s183 = sphi 0, %s180
      %s184 = sphi 0, %s183
      %s200 = sphi 0, %s184
      %s206 = sphi 0, %s208
      %s209 = sphi 0, %s206
      %s210 = sphi 0, %s209
      %s226 = sphi 0, %s210
      %s232 = sphi 0, %s234
      %s235 = sphi 0, %s232
      %s236 = sphi 0, %s235
      %s252 = sphi 0, %s236
      %s258 = sphi 0, %s260
      %s261 = sphi 0, %s258
      %s262 = sphi 0, %s261
      %s278 = sphi 0, %s262
      %s284 = sphi 0, %s286
      %s287 = sphi 0, %s284
      %s288 = sphi 0, %s287
      %s304 = sphi 0, %s288
      %s310 = sphi 0, %s312
      %s313 = sphi 0, %s310
      %s314 = sphi 0, %s313
      %s330 = sphi 0, %s314
      %s336 = sphi 0, %s338
      %s339 = sphi 0, %s336
      %s340 = sphi 0, %s339
      %s356 = sphi 0, %s340
      %s362 = sphi 0, %s364
      %s365 = sphi 0, %s362
      %s366 = sphi 0, %s365
      %s382 = sphi 0, %s366
      %s388 = sphi 0, %s390
      %s391 = sphi 0, %s388
      %s392 = sphi 0, %s391
      %s408 = sphi 0, %s392
    $region4: #{mae_encoder_forward.1} parent=1 // loop_header_branch
      %31 = sbr.rel (%p29) target = $region8
    $region5: #{mae_encoder_forward.1} parent=1 // loop_body
      %s33 = ssub.s32 %s28, 1
      %s34 = ssub.s32 %s28, 2
      %s41 = sadd.s32 1, %s36
      %p42 = scmp.ge.s32.totalorder %s41, 2
      %s43 = scalar_select %p42, 0, %s41
      %s44 = sadd.s32 1, %s35
      %s45 = scalar_select %p42, %s44, %s35
      %p46 = scmp.ge.s32.totalorder %s45, 1
      %s47 = scalar_select %p46, 0, %s45
      %s48 = ssub.s32 %s35, %s47
      %p49 = scmp.eq.s32.totalorder %s48, 0
      %s51 = sadd.s32 %s50, 1
      %s52 = scalar_select %p49, %s50, %s51
      %p55 = pneg %p49
      %p56 = scmp.eq.s32.totalorder %s28, 1
      %p57 = por %p55, %p56
      %p58 = scmp.ne.s32.totalorder %s50, %s53
      %p59 = scmp.eq.s32.totalorder %s28, 0
      %p60 = por %p58, %p59
      %p61 = scmp.ne.s32.totalorder %s50, %s53
      %p62 = scmp.eq.s32.totalorder %s33, 1
      %p63 = por %p61, %p62
      %p64 = scmp.ne.s32.totalorder %s53, %s54
      %p65 = scmp.eq.s32.totalorder %s33, 0
      %p66 = por %p64, %p65
      %p67 = scmp.ne.s32.totalorder %s53, %s54
      %p68 = scmp.eq.s32.totalorder %s34, 1
      %p69 = por %p67, %p68
      %p71 = scmp.ne.s32.totalorder %s54, %s70
      %p72 = scmp.eq.s32.totalorder %s34, 0
      %p73 = por %p71, %p72
      %s74 = ssub.s32 %s36, %s43
      %p75 = scmp.eq.s32.totalorder %s74, 0
      %s77 = sadd.s32 %s76, 1
      %s78 = scalar_select %p75, %s76, %s77
      %p81 = pneg %p75
      %p82 = scmp.eq.s32.totalorder %s28, 1
      %p83 = por %p81, %p82
      %p84 = scmp.ne.s32.totalorder %s76, %s79
      %p85 = scmp.eq.s32.totalorder %s28, 0
      %p86 = por %p84, %p85
      %p87 = scmp.ne.s32.totalorder %s76, %s79
      %p88 = scmp.eq.s32.totalorder %s33, 1
      %p89 = por %p87, %p88
      %p90 = scmp.ne.s32.totalorder %s79, %s80
      %p91 = scmp.eq.s32.totalorder %s33, 0
      %p92 = por %p90, %p91
      %p93 = scmp.ne.s32.totalorder %s79, %s80
      %p94 = scmp.eq.s32.totalorder %s34, 1
      %p95 = por %p93, %p94
      %p97 = scmp.ne.s32.totalorder %s80, %s96
      %p98 = scmp.eq.s32.totalorder %s34, 0
      %p99 = por %p97, %p98
      %s100 = ssub.s32 %s36, %s43
      %p101 = scmp.eq.s32.totalorder %s100, 0
      %s103 = sadd.s32 %s102, 1
      %s104 = scalar_select %p101, %s102, %s103
      %p107 = pneg %p101
      %p108 = scmp.eq.s32.totalorder %s28, 1
      %p109 = por %p107, %p108
      %p110 = scmp.ne.s32.totalorder %s102, %s105
      %p111 = scmp.eq.s32.totalorder %s28, 0
      %p112 = por %p110, %p111
      %p113 = scmp.ne.s32.totalorder %s102, %s105
      %p114 = scmp.eq.s32.totalorder %s33, 1
      %p115 = por %p113, %p114
      %p116 = scmp.ne.s32.totalorder %s105, %s106
      %p117 = scmp.eq.s32.totalorder %s33, 0
      %p118 = por %p116, %p117
      %p119 = scmp.ne.s32.totalorder %s105, %s106
      %p120 = scmp.eq.s32.totalorder %s34, 1
      %p121 = por %p119, %p120
      %p123 = scmp.ne.s32.totalorder %s106, %s122
      %p124 = scmp.eq.s32.totalorder %s34, 0
      %p125 = por %p123, %p124
      %s126 = ssub.s32 %s36, %s43
      %p127 = scmp.eq.s32.totalorder %s126, 0
      %s129 = sadd.s32 %s128, 1
      %s130 = scalar_select %p127, %s128, %s129
      %p133 = pneg %p127
      %p134 = scmp.eq.s32.totalorder %s28, 1
      %p135 = por %p133, %p134
      %p136 = scmp.ne.s32.totalorder %s128, %s131
      %p137 = scmp.eq.s32.totalorder %s28, 0
      %p138 = por %p136, %p137
      %p139 = scmp.ne.s32.totalorder %s128, %s131
      %p140 = scmp.eq.s32.totalorder %s33, 1
      %p141 = por %p139, %p140
      %p142 = scmp.ne.s32.totalorder %s131, %s132
      %p143 = scmp.eq.s32.totalorder %s33, 0
      %p144 = por %p142, %p143
      %p145 = scmp.ne.s32.totalorder %s131, %s132
      %p146 = scmp.eq.s32.totalorder %s34, 1
      %p147 = por %p145, %p146
      %p149 = scmp.ne.s32.totalorder %s132, %s148
      %p150 = scmp.eq.s32.totalorder %s34, 0
      %p151 = por %p149, %p150
      %s152 = ssub.s32 %s36, %s43
      %p153 = scmp.eq.s32.totalorder %s152, 0
      %s155 = sadd.s32 %s154, 1
      %s156 = scalar_select %p153, %s154, %s155
      %p159 = pneg %p153
      %p160 = scmp.eq.s32.totalorder %s28, 1
      %p161 = por %p159, %p160
      %p162 = scmp.ne.s32.totalorder %s154, %s157
      %p163 = scmp.eq.s32.totalorder %s28, 0
      %p164 = por %p162, %p163
      %p165 = scmp.ne.s32.totalorder %s154, %s157
      %p166 = scmp.eq.s32.totalorder %s33, 1
      %p167 = por %p165, %p166
      %p168 = scmp.ne.s32.totalorder %s157, %s158
      %p169 = scmp.eq.s32.totalorder %s33, 0
      %p170 = por %p168, %p169
      %p171 = scmp.ne.s32.totalorder %s157, %s158
      %p172 = scmp.eq.s32.totalorder %s34, 1
      %p173 = por %p171, %p172
      %p175 = scmp.ne.s32.totalorder %s158, %s174
      %p176 = scmp.eq.s32.totalorder %s34, 0
      %p177 = por %p175, %p176
      %s178 = ssub.s32 %s36, %s43
      %p179 = scmp.eq.s32.totalorder %s178, 0
      %s181 = sadd.s32 %s180, 1
      %s182 = scalar_select %p179, %s180, %s181
      %p185 = pneg %p179
      %p186 = scmp.eq.s32.totalorder %s28, 1
      %p187 = por %p185, %p186
      %p188 = scmp.ne.s32.totalorder %s180, %s183
      %p189 = scmp.eq.s32.totalorder %s28, 0
      %p190 = por %p188, %p189
      %p191 = scmp.ne.s32.totalorder %s180, %s183
      %p192 = scmp.eq.s32.totalorder %s33, 1
      %p193 = por %p191, %p192
      %p194 = scmp.ne.s32.totalorder %s183, %s184
      %p195 = scmp.eq.s32.totalorder %s33, 0
      %p196 = por %p194, %p195
      %p197 = scmp.ne.s32.totalorder %s183, %s184
      %p198 = scmp.eq.s32.totalorder %s34, 1
      %p199 = por %p197, %p198
      %p201 = scmp.ne.s32.totalorder %s184, %s200
      %p202 = scmp.eq.s32.totalorder %s34, 0
      %p203 = por %p201, %p202
      %s204 = ssub.s32 %s36, %s43
      %p205 = scmp.eq.s32.totalorder %s204, 0
      %s207 = sadd.s32 %s206, 1
      %s208 = scalar_select %p205, %s206, %s207
      %p211 = pneg %p205
      %p212 = scmp.eq.s32.totalorder %s28, 1
      %p213 = por %p211, %p212
      %p214 = scmp.ne.s32.totalorder %s206, %s209
      %p215 = scmp.eq.s32.totalorder %s28, 0
      %p216 = por %p214, %p215
      %p217 = scmp.ne.s32.totalorder %s206, %s209
      %p218 = scmp.eq.s32.totalorder %s33, 1
      %p219 = por %p217, %p218
      %p220 = scmp.ne.s32.totalorder %s209, %s210
      %p221 = scmp.eq.s32.totalorder %s33, 0
      %p222 = por %p220, %p221
      %p223 = scmp.ne.s32.totalorder %s209, %s210
      %p224 = scmp.eq.s32.totalorder %s34, 1
      %p225 = por %p223, %p224
      %p227 = scmp.ne.s32.totalorder %s210, %s226
      %p228 = scmp.eq.s32.totalorder %s34, 0
      %p229 = por %p227, %p228
      %s230 = ssub.s32 %s36, %s43
      %p231 = scmp.eq.s32.totalorder %s230, 0
      %s233 = sadd.s32 %s232, 1
      %s234 = scalar_select %p231, %s232, %s233
      %p237 = pneg %p231
      %p238 = scmp.eq.s32.totalorder %s28, 1
      %p239 = por %p237, %p238
      %p240 = scmp.ne.s32.totalorder %s232, %s235
      %p241 = scmp.eq.s32.totalorder %s28, 0
      %p242 = por %p240, %p241
      %p243 = scmp.ne.s32.totalorder %s232, %s235
      %p244 = scmp.eq.s32.totalorder %s33, 1
      %p245 = por %p243, %p244
      %p246 = scmp.ne.s32.totalorder %s235, %s236
      %p247 = scmp.eq.s32.totalorder %s33, 0
      %p248 = por %p246, %p247
      %p249 = scmp.ne.s32.totalorder %s235, %s236
      %p250 = scmp.eq.s32.totalorder %s34, 1
      %p251 = por %p249, %p250
      %p253 = scmp.ne.s32.totalorder %s236, %s252
      %p254 = scmp.eq.s32.totalorder %s34, 0
      %p255 = por %p253, %p254
      %s256 = ssub.s32 %s36, %s43
      %p257 = scmp.eq.s32.totalorder %s256, 0
      %s259 = sadd.s32 %s258, 1
      %s260 = scalar_select %p257, %s258, %s259
      %p263 = pneg %p257
      %p264 = scmp.eq.s32.totalorder %s28, 1
      %p265 = por %p263, %p264
      %p266 = scmp.ne.s32.totalorder %s258, %s261
      %p267 = scmp.eq.s32.totalorder %s28, 0
      %p268 = por %p266, %p267
      %p269 = scmp.ne.s32.totalorder %s258, %s261
      %p270 = scmp.eq.s32.totalorder %s33, 1
      %p271 = por %p269, %p270
      %p272 = scmp.ne.s32.totalorder %s261, %s262
      %p273 = scmp.eq.s32.totalorder %s33, 0
      %p274 = por %p272, %p273
      %p275 = scmp.ne.s32.totalorder %s261, %s262
      %p276 = scmp.eq.s32.totalorder %s34, 1
      %p277 = por %p275, %p276
      %p279 = scmp.ne.s32.totalorder %s262, %s278
      %p280 = scmp.eq.s32.totalorder %s34, 0
      %p281 = por %p279, %p280
      %s282 = ssub.s32 %s36, %s43
      %p283 = scmp.eq.s32.totalorder %s282, 0
      %s285 = sadd.s32 %s284, 1
      %s286 = scalar_select %p283, %s284, %s285
      %p289 = pneg %p283
      %p290 = scmp.eq.s32.totalorder %s28, 1
      %p291 = por %p289, %p290
      %p292 = scmp.ne.s32.totalorder %s284, %s287
      %p293 = scmp.eq.s32.totalorder %s28, 0
      %p294 = por %p292, %p293
      %p295 = scmp.ne.s32.totalorder %s284, %s287
      %p296 = scmp.eq.s32.totalorder %s33, 1
      %p297 = por %p295, %p296
      %p298 = scmp.ne.s32.totalorder %s287, %s288
      %p299 = scmp.eq.s32.totalorder %s33, 0
      %p300 = por %p298, %p299
      %p301 = scmp.ne.s32.totalorder %s287, %s288
      %p302 = scmp.eq.s32.totalorder %s34, 1
      %p303 = por %p301, %p302
      %p305 = scmp.ne.s32.totalorder %s288, %s304
      %p306 = scmp.eq.s32.totalorder %s34, 0
      %p307 = por %p305, %p306
      %s308 = ssub.s32 %s36, %s43
      %p309 = scmp.eq.s32.totalorder %s308, 0
      %s311 = sadd.s32 %s310, 1
      %s312 = scalar_select %p309, %s310, %s311
      %p315 = pneg %p309
      %p316 = scmp.eq.s32.totalorder %s28, 1
      %p317 = por %p315, %p316
      %p318 = scmp.ne.s32.totalorder %s310, %s313
      %p319 = scmp.eq.s32.totalorder %s28, 0
      %p320 = por %p318, %p319
      %p321 = scmp.ne.s32.totalorder %s310, %s313
      %p322 = scmp.eq.s32.totalorder %s33, 1
      %p323 = por %p321, %p322
      %p324 = scmp.ne.s32.totalorder %s313, %s314
      %p325 = scmp.eq.s32.totalorder %s33, 0
      %p326 = por %p324, %p325
      %p327 = scmp.ne.s32.totalorder %s313, %s314
      %p328 = scmp.eq.s32.totalorder %s34, 1
      %p329 = por %p327, %p328
      %p331 = scmp.ne.s32.totalorder %s314, %s330
      %p332 = scmp.eq.s32.totalorder %s34, 0
      %p333 = por %p331, %p332
      %s334 = ssub.s32 %s36, %s43
      %p335 = scmp.eq.s32.totalorder %s334, 0
      %s337 = sadd.s32 %s336, 1
      %s338 = scalar_select %p335, %s336, %s337
      %p341 = pneg %p335
      %p342 = scmp.eq.s32.totalorder %s28, 1
      %p343 = por %p341, %p342
      %p344 = scmp.ne.s32.totalorder %s336, %s339
      %p345 = scmp.eq.s32.totalorder %s28, 0
      %p346 = por %p344, %p345
      %p347 = scmp.ne.s32.totalorder %s336, %s339
      %p348 = scmp.eq.s32.totalorder %s33, 1
      %p349 = por %p347, %p348
      %p350 = scmp.ne.s32.totalorder %s339, %s340
      %p351 = scmp.eq.s32.totalorder %s33, 0
      %p352 = por %p350, %p351
      %p353 = scmp.ne.s32.totalorder %s339, %s340
      %p354 = scmp.eq.s32.totalorder %s34, 1
      %p355 = por %p353, %p354
      %p357 = scmp.ne.s32.totalorder %s340, %s356
      %p358 = scmp.eq.s32.totalorder %s34, 0
      %p359 = por %p357, %p358
      %s360 = ssub.s32 %s36, %s43
      %p361 = scmp.eq.s32.totalorder %s360, 0
      %s363 = sadd.s32 %s362, 1
      %s364 = scalar_select %p361, %s362, %s363
      %p367 = pneg %p361
      %p368 = scmp.eq.s32.totalorder %s28, 1
      %p369 = por %p367, %p368
      %p370 = scmp.ne.s32.totalorder %s362, %s365
      %p371 = scmp.eq.s32.totalorder %s28, 0
      %p372 = por %p370, %p371
      %p373 = scmp.ne.s32.totalorder %s362, %s365
      %p374 = scmp.eq.s32.totalorder %s33, 1
      %p375 = por %p373, %p374
      %p376 = scmp.ne.s32.totalorder %s365, %s366
      %p377 = scmp.eq.s32.totalorder %s33, 0
      %p378 = por %p376, %p377
      %p379 = scmp.ne.s32.totalorder %s365, %s366
      %p380 = scmp.eq.s32.totalorder %s34, 1
      %p381 = por %p379, %p380
      %p383 = scmp.ne.s32.totalorder %s366, %s382
      %p384 = scmp.eq.s32.totalorder %s34, 0
      %p385 = por %p383, %p384
      %s386 = ssub.s32 %s35, %s47
      %p387 = scmp.eq.s32.totalorder %s386, 0
      %s389 = sadd.s32 %s388, 1
      %s390 = scalar_select %p387, %s388, %s389
      %p393 = pneg %p387
      %p394 = scmp.eq.s32.totalorder %s28, 1
      %p395 = por %p393, %p394
      %p396 = scmp.ne.s32.totalorder %s388, %s391
      %p397 = scmp.eq.s32.totalorder %s28, 0
      %p398 = por %p396, %p397
      %p399 = scmp.ne.s32.totalorder %s388, %s391
      %p400 = scmp.eq.s32.totalorder %s33, 1
      %p401 = por %p399, %p400
      %p402 = scmp.ne.s32.totalorder %s391, %s392
      %p403 = scmp.eq.s32.totalorder %s33, 0
      %p404 = por %p402, %p403
      %p405 = scmp.ne.s32.totalorder %s391, %s392
      %p406 = scmp.eq.s32.totalorder %s34, 1
      %p407 = por %p405, %p406
      %p409 = scmp.ne.s32.totalorder %s392, %s408
      %p410 = scmp.eq.s32.totalorder %s34, 0
      %p411 = por %p409, %p410
      %p412 = scmp.le.s32.totalorder 1, %s28
      %p413 = scmp.lt.s32.totalorder %s28, 3
      %p414 = pnand %p412, %p413
      %p415 = pneg %p414
      // Predicated region
      $region9: #{mae_encoder_forward.1} parent=5 // pred_check
        _
      $region10: #{mae_encoder_forward.1} parent=5 // pred_check_branch
        %417 = sbr.rel (%p414) target = $region12
      $region11: #{mae_encoder_forward.1} parent=5 // pred_region
        %s418 = ssub.s32 %s28, 1
        // Predicated region
        $region13: #{mae_encoder_forward.1} parent=11 // pred_check
          %p419 = pneg %p66
        $region14: #{mae_encoder_forward.1} parent=11 // pred_check_branch
          %421 = sbr.rel (%p419) target = $region16
        $region15: #{mae_encoder_forward.1} parent=11 // pred_region
          %s422 = smul.u32 4, %s37
          %p423 = scmp.lt.s32.totalorder %s422, 3
          %s424 = scalar_select %p423, %s422, 3
          %s425 = smul.addr %s424, 4
          %s426 = scalar_lea.vmem %s0, %s425
          %s427 = smul.u32 4, %s37
        $region16: #{mae_encoder_forward.1} parent=11 // pred_fallthru
          _
      $region12: #{mae_encoder_forward.1} parent=5 // pred_fallthru
        _
      %p428 = scmp.lt.s32.totalorder %s28, 2
      // Predicated region
      $region17: #{mae_encoder_forward.1} parent=5 // pred_check
        %p429 = pneg %p428
      $region18: #{mae_encoder_forward.1} parent=5 // pred_check_branch
        %431 = sbr.rel (%p429) target = $region20
      $region19: #{mae_encoder_forward.1} parent=5 // pred_region
        // Predicated region
        $region21: #{mae_encoder_forward.1} parent=19 // pred_check
          %p432 = pneg %p86
        $region22: #{mae_encoder_forward.1} parent=19 // pred_check_branch
          %434 = sbr.rel (%p432) target = $region24
        $region23: #{mae_encoder_forward.1} parent=19 // pred_region
          %s435 = sand.u32 %s76, 1
          %s436 = scalar_lea.sflag [#allocation4], %s435
          %s437 = sand.u32 %s76, 1
          %s438 = smul.addr %s437, 192
          %s439 = scalar_lea.vmem [#allocation3], %s438
          %s441 = ssub.s32 3072, 3072
          %442 = vsyncadd %s436, %s441
          %s443 = smul.addr %s36, 48
          %s444 = smul.addr %s443, 64
          %s445 = scalar_lea.hbm %s1, %s444
          %s446 = sshll.u32 %s439, 4
          %s447 = int_to_ptr.vmem [resolvable:$true] %s446
          %452 = dma.hbm_to_vmem [thread:$0]  %s445, 3072, %s447, %s436, 192, 192, 12
        $region24: #{mae_encoder_forward.1} parent=19 // pred_fallthru
          _
        // Predicated region
        $region25: #{mae_encoder_forward.1} parent=19 // pred_check
          %p453 = pneg %p112
        $region26: #{mae_encoder_forward.1} parent=19 // pred_check_branch
          %455 = sbr.rel (%p453) target = $region28
        $region27: #{mae_encoder_forward.1} parent=19 // pred_region
          %p456 = scmp.lt.s32.totalorder %s36, 1
          %s457 = scalar_select %p456, %s36, 1
          %s458 = smul.addr %s457, 3
          %s459 = scalar_lea.vmem %s2, %s458
        $region28: #{mae_encoder_forward.1} parent=19 // pred_fallthru
          _
        // Predicated region
        $region29: #{mae_encoder_forward.1} parent=19 // pred_check
          %p460 = pneg %p138
        $region30: #{mae_encoder_forward.1} parent=19 // pred_check_branch
          %462 = sbr.rel (%p460) target = $region32
        $region31: #{mae_encoder_forward.1} parent=19 // pred_region
          %s463 = sand.u32 %s28, 1
          %s464 = scalar_lea.sflag [#allocation6], %s463
          %s465 = sand.u32 %s128, 1
          %s466 = smul.addr %s465, 64
          %s467 = scalar_lea.vmem [#allocation5], %s466
          %s469 = ssub.s32 1024, 1024
          %470 = vsyncadd %s464, %s469
          %s471 = smul.addr %s36, 16
          %s472 = smul.addr %s471, 64
          %s473 = scalar_lea.hbm %s3, %s472
          %s474 = sshll.u32 %s467, 4
          %s475 = int_to_ptr.vmem [resolvable:$true] %s474
          %480 = dma.hbm_to_vmem [thread:$0]  %s473, 1024, %s475, %s464, 64, 64, 4
        $region32: #{mae_encoder_forward.1} parent=19 // pred_fallthru
          _
        // Predicated region
        $region33: #{mae_encoder_forward.1} parent=19 // pred_check
          %p481 = pneg %p164
        $region34: #{mae_encoder_forward.1} parent=19 // pred_check_branch
          %483 = sbr.rel (%p481) target = $region36
        $region35: #{mae_encoder_forward.1} parent=19 // pred_region
          %p484 = scmp.lt.s32.totalorder %s36, 1
          %s485 = scalar_select %p484, %s36, 1
          %s486 = scalar_lea.vmem %s4, %s485
        $region36: #{mae_encoder_forward.1} parent=19 // pred_fallthru
          _
        // Predicated region
        $region37: #{mae_encoder_forward.1} parent=19 // pred_check
          %p487 = pneg %p190
        $region38: #{mae_encoder_forward.1} parent=19 // pred_check_branch
          %489 = sbr.rel (%p487) target = $region40
        $region39: #{mae_encoder_forward.1} parent=19 // pred_region
          %p490 = scmp.lt.s32.totalorder %s36, 1
          %s491 = scalar_select %p490, %s36, 1
          %s492 = scalar_lea.vmem %s5, %s491
        $region40: #{mae_encoder_forward.1} parent=19 // pred_fallthru
          _
        // Predicated region
        $region41: #{mae_encoder_forward.1} parent=19 // pred_check
          %p493 = pneg %p216
        $region42: #{mae_encoder_forward.1} parent=19 // pred_check_branch
          %495 = sbr.rel (%p493) target = $region44
        $region43: #{mae_encoder_forward.1} parent=19 // pred_region
          %p496 = scmp.lt.s32.totalorder %s36, 1
          %s497 = scalar_select %p496, %s36, 1
          %s498 = scalar_lea.vmem %s6, %s497
        $region44: #{mae_encoder_forward.1} parent=19 // pred_fallthru
          _
        // Predicated region
        $region45: #{mae_encoder_forward.1} parent=19 // pred_check
          %p499 = pneg %p242
        $region46: #{mae_encoder_forward.1} parent=19 // pred_check_branch
          %501 = sbr.rel (%p499) target = $region48
        $region47: #{mae_encoder_forward.1} parent=19 // pred_region
          %s502 = sand.u32 %s28, 1
          %s503 = scalar_lea.sflag [#allocation6], %s502
          %s504 = sand.u32 %s232, 1
          %s505 = smul.addr %s504, 128
          %s506 = scalar_lea.vmem [#allocation7], %s505
          %s508 = ssub.s32 2048, 2048
          %509 = vsyncadd %s503, %s508
          %s510 = smul.addr %s36, 32
          %s511 = smul.addr %s510, 64
          %s512 = scalar_lea.hbm %s7, %s511
          %s513 = sshll.u32 %s506, 4
          %s514 = int_to_ptr.vmem [resolvable:$true] %s513
          %519 = dma.hbm_to_vmem [thread:$0]  %s512, 2048, %s514, %s503, 128, 128, 8
        $region48: #{mae_encoder_forward.1} parent=19 // pred_fallthru
          _
        // Predicated region
        $region49: #{mae_encoder_forward.1} parent=19 // pred_check
          %p520 = pneg %p268
        $region50: #{mae_encoder_forward.1} parent=19 // pred_check_branch
          %522 = sbr.rel (%p520) target = $region52
        $region51: #{mae_encoder_forward.1} parent=19 // pred_region
          %p523 = scmp.lt.s32.totalorder %s36, 1
          %s524 = scalar_select %p523, %s36, 1
          %s525 = smul.addr %s524, 2
          %s526 = scalar_lea.vmem %s8, %s525
        $region52: #{mae_encoder_forward.1} parent=19 // pred_fallthru
          _
        // Predicated region
        $region53: #{mae_encoder_forward.1} parent=19 // pred_check
          %p527 = pneg %p294
        $region54: #{mae_encoder_forward.1} parent=19 // pred_check_branch
          %529 = sbr.rel (%p527) target = $region56
        $region55: #{mae_encoder_forward.1} parent=19 // pred_region
          %s530 = sand.u32 %s284, 1
          %s531 = scalar_lea.sflag [#allocation9], %s530
          %s532 = sand.u32 %s284, 1
          %s533 = smul.addr %s532, 128
          %s534 = scalar_lea.vmem [#allocation8], %s533
          %s536 = ssub.s32 2048, 2048
          %537 = vsyncadd %s531, %s536
          %s538 = smul.addr %s36, 32
          %s539 = smul.addr %s538, 64
          %s540 = scalar_lea.hbm %s9, %s539
          %s541 = sshll.u32 %s534, 4
          %s542 = int_to_ptr.vmem [resolvable:$true] %s541
          %547 = dma.hbm_to_vmem [thread:$0]  %s540, 2048, %s542, %s531, 64, 64, 4
        $region56: #{mae_encoder_forward.1} parent=19 // pred_fallthru
          _
        // Predicated region
        $region57: #{mae_encoder_forward.1} parent=19 // pred_check
          %p548 = pneg %p320
        $region58: #{mae_encoder_forward.1} parent=19 // pred_check_branch
          %550 = sbr.rel (%p548) target = $region60
        $region59: #{mae_encoder_forward.1} parent=19 // pred_region
          %p551 = scmp.lt.s32.totalorder %s36, 1
          %s552 = scalar_select %p551, %s36, 1
          %s553 = scalar_lea.vmem %s10, %s552
        $region60: #{mae_encoder_forward.1} parent=19 // pred_fallthru
          _
        // Predicated region
        $region61: #{mae_encoder_forward.1} parent=19 // pred_check
          %p554 = pneg %p346
        $region62: #{mae_encoder_forward.1} parent=19 // pred_check_branch
          %556 = sbr.rel (%p554) target = $region64
        $region63: #{mae_encoder_forward.1} parent=19 // pred_region
          %p557 = scmp.lt.s32.totalorder %s36, 1
          %s558 = scalar_select %p557, %s36, 1
          %s559 = scalar_lea.vmem %s11, %s558
        $region64: #{mae_encoder_forward.1} parent=19 // pred_fallthru
          _
        // Predicated region
        $region65: #{mae_encoder_forward.1} parent=19 // pred_check
          %p560 = pneg %p372
        $region66: #{mae_encoder_forward.1} parent=19 // pred_check_branch
          %562 = sbr.rel (%p560) target = $region68
        $region67: #{mae_encoder_forward.1} parent=19 // pred_region
          %p563 = scmp.lt.s32.totalorder %s36, 1
          %s564 = scalar_select %p563, %s36, 1
          %s565 = scalar_lea.vmem %s12, %s564
        $region68: #{mae_encoder_forward.1} parent=19 // pred_fallthru
          _
      $region20: #{mae_encoder_forward.1} parent=5 // pred_fallthru
        _
      %p566 = scmp.le.s32.totalorder 1, %s28
      %p567 = scmp.lt.s32.totalorder %s28, 3
      %p568 = pnand %p566, %p567
      %p569 = pneg %p568
      // Predicated region
      $region69: #{mae_encoder_forward.1} parent=5 // pred_check
        _
      $region70: #{mae_encoder_forward.1} parent=5 // pred_check_branch
        %571 = sbr.rel (%p568) target = $region72
      $region71: #{mae_encoder_forward.1} parent=5 // pred_region
        %s572 = ssub.s32 %s28, 1
        %s573 = sand.u32 %s79, 1
        %s574 = scalar_lea.sflag [#allocation4], %s573
        %s575 = sand.u32 %s79, 1
        %s576 = smul.addr %s575, 192
        %s577 = scalar_lea.vmem [#allocation3], %s576
        // Predicated region
        $region73: #{mae_encoder_forward.1} parent=71 // pred_check
          %p578 = pneg %p92
        $region74: #{mae_encoder_forward.1} parent=71 // pred_check_branch
          %580 = sbr.rel (%p578) target = $region76
        $region75: #{mae_encoder_forward.1} parent=71 // pred_region
          %581 = dma.done %s574, 3072
        $region76: #{mae_encoder_forward.1} parent=71 // pred_fallthru
          _
        %s582 = sand.u32 %s33, 1
        %s583 = scalar_lea.sflag [#allocation6], %s582
        %s584 = sand.u32 %s131, 1
        %s585 = smul.addr %s584, 64
        %s586 = scalar_lea.vmem [#allocation5], %s585
        // Predicated region
        $region77: #{mae_encoder_forward.1} parent=71 // pred_check
          %p587 = pneg %p144
        $region78: #{mae_encoder_forward.1} parent=71 // pred_check_branch
          %589 = sbr.rel (%p587) target = $region80
        $region79: #{mae_encoder_forward.1} parent=71 // pred_region
          %590 = dma.done %s583, 1024
        $region80: #{mae_encoder_forward.1} parent=71 // pred_fallthru
          _
        %s591 = sand.u32 %s33, 1
        %s592 = scalar_lea.sflag [#allocation6], %s591
        %s593 = sand.u32 %s235, 1
        %s594 = smul.addr %s593, 128
        %s595 = scalar_lea.vmem [#allocation7], %s594
        // Predicated region
        $region81: #{mae_encoder_forward.1} parent=71 // pred_check
          %p596 = pneg %p248
        $region82: #{mae_encoder_forward.1} parent=71 // pred_check_branch
          %598 = sbr.rel (%p596) target = $region84
        $region83: #{mae_encoder_forward.1} parent=71 // pred_region
          %599 = dma.done %s592, 2048
        $region84: #{mae_encoder_forward.1} parent=71 // pred_fallthru
          _
        %s600 = sand.u32 %s287, 1
        %s601 = scalar_lea.sflag [#allocation9], %s600
        %s602 = sand.u32 %s287, 1
        %s603 = smul.addr %s602, 128
        %s604 = scalar_lea.vmem [#allocation8], %s603
        // Predicated region
        $region85: #{mae_encoder_forward.1} parent=71 // pred_check
          %p605 = pneg %p300
        $region86: #{mae_encoder_forward.1} parent=71 // pred_check_branch
          %607 = sbr.rel (%p605) target = $region88
        $region87: #{mae_encoder_forward.1} parent=71 // pred_region
          %608 = dma.done %s601, 2048
        $region88: #{mae_encoder_forward.1} parent=71 // pred_fallthru
          _
        %s609 = smul.u32 4, %s37
        %p610 = scmp.lt.s32.totalorder %s609, 3
        %s611 = scalar_select %p610, %s609, 3
        %s612 = smul.addr %s611, 4
        %s613 = scalar_lea.vmem %s0, %s612
        %p614 = pneg %p66
        %p615 = pneg %p63
        %s616 = sand.u32 %s79, 1
        %s617 = scalar_lea.sflag [#allocation4], %s616
        %s618 = sand.u32 %s79, 1
        %s619 = smul.addr %s618, 192
        %s620 = scalar_lea.vmem [#allocation3], %s619
        %p621 = pneg %p92
        %p622 = pneg %p89
        %p623 = scmp.lt.s32.totalorder %s38, 1
        %s624 = scalar_select %p623, %s38, 1
        %s625 = smul.addr %s624, 3
        %s626 = scalar_lea.vmem %s2, %s625
        %p627 = pneg %p118
        %p628 = pneg %p115
        %s629 = sand.u32 %s33, 1
        %s630 = scalar_lea.sflag [#allocation6], %s629
        %s631 = sand.u32 %s131, 1
        %s632 = smul.addr %s631, 64
        %s633 = scalar_lea.vmem [#allocation5], %s632
        %p634 = pneg %p144
        %p635 = pneg %p141
        %p636 = scmp.lt.s32.totalorder %s38, 1
        %s637 = scalar_select %p636, %s38, 1
        %s638 = scalar_lea.vmem %s4, %s637
        %p639 = pneg %p170
        %p640 = pneg %p167
        %p641 = scmp.lt.s32.totalorder %s38, 1
        %s642 = scalar_select %p641, %s38, 1
        %s643 = scalar_lea.vmem %s5, %s642
        %p644 = pneg %p196
        %p645 = pneg %p193
        %p646 = scmp.lt.s32.totalorder %s38, 1
        %s647 = scalar_select %p646, %s38, 1
        %s648 = scalar_lea.vmem %s6, %s647
        %p649 = pneg %p222
        %p650 = pneg %p219
        %s651 = sand.u32 %s33, 1
        %s652 = scalar_lea.sflag [#allocation6], %s651
        %s653 = sand.u32 %s235, 1
        %s654 = smul.addr %s653, 128
        %s655 = scalar_lea.vmem [#allocation7], %s654
        %p656 = pneg %p248
        %p657 = pneg %p245
        %p658 = scmp.lt.s32.totalorder %s38, 1
        %s659 = scalar_select %p658, %s38, 1
        %s660 = smul.addr %s659, 2
        %s661 = scalar_lea.vmem %s8, %s660
        %p662 = pneg %p274
        %p663 = pneg %p271
        %s664 = sand.u32 %s287, 1
        %s665 = scalar_lea.sflag [#allocation9], %s664
        %s666 = sand.u32 %s287, 1
        %s667 = smul.addr %s666, 128
        %s668 = scalar_lea.vmem [#allocation8], %s667
        %p669 = pneg %p300
        %p670 = pneg %p297
        %p671 = scmp.lt.s32.totalorder %s38, 1
        %s672 = scalar_select %p671, %s38, 1
        %s673 = scalar_lea.vmem %s10, %s672
        %p674 = pneg %p326
        %p675 = pneg %p323
        %p676 = scmp.lt.s32.totalorder %s38, 1
        %s677 = scalar_select %p676, %s38, 1
        %s678 = scalar_lea.vmem %s11, %s677
        %p679 = pneg %p352
        %p680 = pneg %p349
        %p681 = scmp.lt.s32.totalorder %s38, 1
        %s682 = scalar_select %p681, %s38, 1
        %s683 = scalar_lea.vmem %s12, %s682
        %p684 = pneg %p378
        %p685 = pneg %p375
        %p686 = pneg %p404
        %p687 = pneg %p401
        %s688 = smul.u32 4, %s37
        %p689 = scmp.lt.s32.totalorder %s688, 3
        %s690 = scalar_select %p689, %s688, 3
        %s691 = smul.addr %s690, 4
        %s692 = scalar_lea.vmem %s13, %s691
        %s693 = smul.u32 4, %s37
        %p694 = scmp.lt.s32.totalorder %s693, 3
        %s695 = scalar_select %p694, %s693, 3
        %s696 = smul.addr %s695, 4
        %s697 = scalar_lea.vmem %s0, %s696
        %s698 = smul.u32 4, %s37
        %p699 = scmp.lt.s32.totalorder %s38, 1
        %s700 = scalar_select %p699, %s38, 1
        %s701 = smul.addr %s700, 3
        %s702 = scalar_lea.vmem %s2, %s701
        %p703 = scmp.lt.s32.totalorder %s38, 1
        %s704 = scalar_select %p703, %s38, 1
        %s705 = scalar_lea.vmem %s4, %s704
        %p706 = scmp.lt.s32.totalorder %s38, 1
        %s707 = scalar_select %p706, %s38, 1
        %s708 = scalar_lea.vmem %s5, %s707
        %p709 = scmp.lt.s32.totalorder %s38, 1
        %s710 = scalar_select %p709, %s38, 1
        %s711 = scalar_lea.vmem %s6, %s710
        %p712 = scmp.lt.s32.totalorder %s38, 1
        %s713 = scalar_select %p712, %s38, 1
        %s714 = smul.addr %s713, 2
        %s715 = scalar_lea.vmem %s8, %s714
        %p716 = scmp.lt.s32.totalorder %s38, 1
        %s717 = scalar_select %p716, %s38, 1
        %s718 = scalar_lea.vmem %s10, %s717
        %p719 = scmp.lt.s32.totalorder %s38, 1
        %s720 = scalar_select %p719, %s38, 1
        %s721 = scalar_lea.vmem %s11, %s720
        %p722 = scmp.lt.s32.totalorder %s38, 1
        %s723 = scalar_select %p722, %s38, 1
        %s724 = scalar_lea.vmem %s12, %s723
        %s725 = smul.u32 4, %s37
        %p726 = scmp.lt.s32.totalorder %s725, 3
        %s727 = scalar_select %p726, %s725, 3
        %s728 = smul.addr %s727, 4
        %s729 = scalar_lea.vmem %s13, %s728
        %s730 = smul.u32 4, %s37
        %p732 = scmp.eq.s32.totalorder %s38, 0
        // Predicated region
        $region89: #{mae_encoder_forward.1} parent=71 // pred_check
          %p733 = pneg %p732
        $region90: #{mae_encoder_forward.1} parent=71 // pred_check_branch
          %735 = sbr.rel (%p733) target = $region92
        $region91: #{mae_encoder_forward.1} parent=71 // pred_region
          %v736 = vld [vmem:[%s697] sm:$0xf]
          %v737 = vld [vmem:[%s697 + $0x4] sm:$0xf]
          %v738 = vld [vmem:[%s697 + $0x8] sm:$0xf]
          %v739 = vld [vmem:[%s697 + $0xc] sm:$0xf]
          %v740 = vunpack.c.l.bf16 %v736
          %v741 = vunpack.c.l.bf16 %v737
          %v742 = vunpack.c.l.bf16 %v738
          %v743 = vunpack.c.l.bf16 %v739
          %744 = vst [vmem:[#allocation2] sm:$0xff] %v740
          %745 = vst [vmem:[#allocation2 + $0x8] sm:$0xff] %v741
          %746 = vst [vmem:[#allocation2 + $0x10] sm:$0xff] %v742
          %747 = vst [vmem:[#allocation2 + $0x18] sm:$0xff] %v743
        $region92: #{mae_encoder_forward.1} parent=71 // pred_fallthru
          _
        %v748 = vld [vmem:[#allocation2] sm:$0xff]
        %v749 = vld [vmem:[#allocation2 + $0x8] sm:$0xff]
        %v750 = vld [vmem:[#allocation2 + $0x10] sm:$0xff]
        %v751 = vld [vmem:[#allocation2 + $0x18] sm:$0xff]
        %v752 = vpack.c.bf16 %v749, %v748
        %v753 = vpack.c.bf16 %v751, %v750
        %v754 = vld [vmem:[%s577] sm:$0xff]
        %v755 = vld [vmem:[%s577 + $0x8] sm:$0xf]
        %v756 = vld [vmem:[%s577 + $0xc] sm:$0xff]
        %v757 = vld [vmem:[%s577 + $0x14] sm:$0xf]
        %v758 = vld [vmem:[%s577 + $0x18] sm:$0xff]
        %v759 = vld [vmem:[%s577 + $0x20] sm:$0xf]
        %v760 = vld [vmem:[%s577 + $0x24] sm:$0xff]
        %v761 = vld [vmem:[%s577 + $0x2c] sm:$0xf]
        %v762 = vld [vmem:[%s577 + $0x30] sm:$0xff]
        %v763 = vld [vmem:[%s577 + $0x38] sm:$0xf]
        %v764 = vld [vmem:[%s577 + $0x3c] sm:$0xff]
        %v765 = vld [vmem:[%s577 + $0x44] sm:$0xf]
        %v766 = vld [vmem:[%s577 + $0x48] sm:$0xff]
        %v767 = vld [vmem:[%s577 + $0x50] sm:$0xf]
        %v768 = vld [vmem:[%s577 + $0x54] sm:$0xff]
        %v769 = vld [vmem:[%s577 + $0x5c] sm:$0xf]
        %v770 = vld [vmem:[%s577 + $0x60] sm:$0xff]
        %v771 = vld [vmem:[%s577 + $0x68] sm:$0xf]
        %v772 = vld [vmem:[%s577 + $0x6c] sm:$0xff]
        %v773 = vld [vmem:[%s577 + $0x74] sm:$0xf]
        %v774 = vld [vmem:[%s577 + $0x78] sm:$0xff]
        %v775 = vld [vmem:[%s577 + $0x80] sm:$0xf]
        %v776 = vld [vmem:[%s577 + $0x84] sm:$0xff]
        %v777 = vld [vmem:[%s577 + $0x8c] sm:$0xf]
        %v778 = vld [vmem:[%s577 + $0x90] sm:$0xff]
        %v779 = vld [vmem:[%s577 + $0x98] sm:$0xf]
        %v780 = vld [vmem:[%s577 + $0x9c] sm:$0xff]
        %v781 = vld [vmem:[%s577 + $0xa4] sm:$0xf]
        %v782 = vld [vmem:[%s577 + $0xa8] sm:$0xff]
        %v783 = vld [vmem:[%s577 + $0xb0] sm:$0xf]
        %v784 = vld [vmem:[%s577 + $0xb4] sm:$0xff]
        %v785 = vld [vmem:[%s577 + $0xbc] sm:$0xf]
        %v786 = vld [vmem:[%s702] sm:$0x7]
        %v788 = vlaneseq
        %v789 = vshrl.u32 %v788, 7
        %v790 = vsub.s32 0, %v789
        %v791 = vrot.slane %v786, %v790
        %v792 = vlaneseq
        %v793 = vshrl.u32 %v792, 7
        %v794 = vsub.s32 1, %v793
        %v795 = vrot.slane %v786, %v794
        %v796 = vlaneseq
        %v797 = vshrl.u32 %v796, 7
        %v798 = vsub.s32 2, %v797
        %v799 = vrot.slane %v786, %v798
        %v835 = vunpack.c.l.b16 %v754
        %v836 = vunpack.c.h.b16 %v754
        %v837 = vunpack.c.l.b16 %v755
        %v838 = vunpack.c.l.b16 %v756
        %v839 = vunpack.c.h.b16 %v756
        %v840 = vunpack.c.l.b16 %v757
        %v841 = vunpack.c.l.b16 %v758
        %v842 = vunpack.c.h.b16 %v758
        %v843 = vunpack.c.l.b16 %v759
        %v844 = vunpack.c.l.b16 %v760
        %v845 = vunpack.c.h.b16 %v760
        %v846 = vunpack.c.l.b16 %v761
        %v847 = vunpack.c.l.b16 %v762
        %v848 = vunpack.c.h.b16 %v762
        %v849 = vunpack.c.l.b16 %v763
        %v850 = vunpack.c.l.b16 %v764
        %v851 = vunpack.c.h.b16 %v764
        %v852 = vunpack.c.l.b16 %v765
        %v853 = vunpack.c.l.b16 %v766
        %v854 = vunpack.c.h.b16 %v766
        %v855 = vunpack.c.l.b16 %v767
        %v856 = vunpack.c.l.b16 %v768
        %v857 = vunpack.c.h.b16 %v768
        %v858 = vunpack.c.l.b16 %v769
        %v859 = vunpack.c.l.b16 %v770
        %v860 = vunpack.c.h.b16 %v770
        %v861 = vunpack.c.l.b16 %v771
        %v862 = vunpack.c.l.b16 %v772
        %v863 = vunpack.c.h.b16 %v772
        %v864 = vunpack.c.l.b16 %v773
        %v865 = vunpack.c.l.b16 %v774
        %v866 = vunpack.c.h.b16 %v774
        %v867 = vunpack.c.l.b16 %v775
        %v868 = vunpack.c.l.b16 %v776
        %v869 = vunpack.c.h.b16 %v776
        %v870 = vunpack.c.l.b16 %v777
        %v871 = vunpack.c.l.b16 %v778
        %v872 = vunpack.c.h.b16 %v778
        %v873 = vunpack.c.l.b16 %v779
        %v874 = vunpack.c.l.b16 %v780
        %v875 = vunpack.c.h.b16 %v780
        %v876 = vunpack.c.l.b16 %v781
        %v877 = vunpack.c.l.b16 %v782
        %v878 = vunpack.c.h.b16 %v782
        %v879 = vunpack.c.l.b16 %v783
        %v880 = vunpack.c.l.b16 %v784
        %v881 = vunpack.c.h.b16 %v784
        %v882 = vunpack.c.l.b16 %v785
        %v883 = vpack.c.b16 %v838, %v835
        %v884 = vpack.c.b16 %v839, %v836
        %v885 = vpack.c.b16 %v840, %v837
        %v886 = vpack.c.b16 %v844, %v841
        %v887 = vpack.c.b16 %v845, %v842
        %v888 = vpack.c.b16 %v846, %v843
        %v889 = vpack.c.b16 %v850, %v847
        %v890 = vpack.c.b16 %v851, %v848
        %v891 = vpack.c.b16 %v852, %v849
        %v892 = vpack.c.b16 %v856, %v853
        %v893 = vpack.c.b16 %v857, %v854
        %v894 = vpack.c.b16 %v858, %v855
        %v895 = vpack.c.b16 %v862, %v859
        %v896 = vpack.c.b16 %v863, %v860
        %v897 = vpack.c.b16 %v864, %v861
        %v898 = vpack.c.b16 %v868, %v865
        %v899 = vpack.c.b16 %v869, %v866
        %v900 = vpack.c.b16 %v870, %v867
        %v901 = vpack.c.b16 %v874, %v871
        %v902 = vpack.c.b16 %v875, %v872
        %v903 = vpack.c.b16 %v876, %v873
        %v904 = vpack.c.b16 %v880, %v877
        %v905 = vpack.c.b16 %v881, %v878
        %v906 = vpack.c.b16 %v882, %v879
        %931 = vmatprep.subr.bf16.mxu0 %v905
        %932 = vmatpush1.bf16.msra.mxu0 %v904
        %933 = vmatprep.subr.bf16.mxu0 %v902
        %934 = vmatpush1.bf16.msra.mxu0 %v901
        %935 = vmatprep.subr.bf16.mxu0 %v899
        %936 = vmatpush1.bf16.msra.mxu0 %v898
        %937 = vmatprep.subr.bf16.mxu0 %v896
        %938 = vmatpush1.bf16.msra.mxu0 %v895
        %939 = vmatprep.subr.bf16.mxu0 %v893
        %940 = vmatpush1.bf16.msra.mxu0 %v892
        %941 = vmatprep.subr.bf16.mxu0 %v890
        %942 = vmatpush1.bf16.msra.mxu0 %v889
        %943 = vmatprep.subr.bf16.mxu0 %v887
        %944 = vmatpush1.bf16.msra.mxu0 %v886
        %945 = vmatprep.subr.bf16.mxu0 %v884
        %946 = vmatpush1.bf16.msra.mxu0 %v883
        %947 = vmatprep.subr.bf16.mxu0 0
        %948 = vmatpush2.bf16.msra.mxu0 0
        %949 = vmatprep.subr.bf16.mxu0 0
        %950 = vmatpush2.bf16.msra.mxu0 0
        %951 = vmatprep.subr.bf16.mxu0 0
        %952 = vmatpush2.bf16.msra.mxu0 0
        %953 = vmatprep.subr.bf16.mxu0 0
        %954 = vmatpush2.bf16.msra.mxu0 0
        %955 = vmatprep.subr.bf16.mxu0 0
        %956 = vmatpush2.bf16.msra.mxu0 0
        %957 = vmatprep.subr.bf16.mxu0 0
        %958 = vmatpush2.bf16.msra.mxu0 0
        %959 = vmatprep.subr.bf16.mxu0 0
        %960 = vmatpush2.bf16.msra.mxu0 0
        %961 = vmatprep.subr.bf16.mxu0 0
        %962 = vmatpush2.bf16.msra.mxu0 0
        %963 = vmatprep.mubr.bf16.mxu0 0
        %964 = vmatmul.mubr.bf16.gmra.mxu0 %v752
        %v965 = vpop.f32.mrf.mxu0
        %v966 = vadd.f32 %v791, %v965
        %v967 = vpop.f32.mrf.mxu0
        %v968 = vadd.f32 %v795, %v967
        %v969 = vpop.f32.mrf.mxu0
        %v970 = vadd.f32 %v791, %v969
        %v971 = vpop.f32.mrf.mxu0
        %v972 = vadd.f32 %v795, %v971
        %973 = vmatprep.mubr.bf16.mxu0 0
        %974 = vmatmul.mubr.bf16.gmra.mxu0 %v753
        %v975 = vpop.f32.mrf.mxu0
        %v976 = vadd.f32 %v791, %v975
        %v977 = vpop.f32.mrf.mxu0
        %v978 = vadd.f32 %v795, %v977
        %v979 = vpop.f32.mrf.mxu0
        %v980 = vadd.f32 %v791, %v979
        %v981 = vpop.f32.mrf.mxu0
        %v982 = vadd.f32 %v795, %v981
        %983 = vdwg.mxu0
        %984 = vmatprep.subr.bf16.mxu0 0
        %985 = vmatpush1.bf16.msra.mxu0 %v906
        %986 = vmatprep.subr.bf16.mxu0 0
        %987 = vmatpush1.bf16.msra.mxu0 %v903
        %988 = vmatprep.subr.bf16.mxu0 0
        %989 = vmatpush1.bf16.msra.mxu0 %v900
        %990 = vmatprep.subr.bf16.mxu0 0
        %991 = vmatpush1.bf16.msra.mxu0 %v897
        %992 = vmatprep.subr.bf16.mxu0 0
        %993 = vmatpush1.bf16.msra.mxu0 %v894
        %994 = vmatprep.subr.bf16.mxu0 0
        %995 = vmatpush1.bf16.msra.mxu0 %v891
        %996 = vmatprep.subr.bf16.mxu0 0
        %997 = vmatpush1.bf16.msra.mxu0 %v888
        %998 = vmatprep.subr.bf16.mxu0 0
        %999 = vmatpush1.bf16.msra.mxu0 %v885
        %1000 = vmatprep.subr.bf16.mxu0 0
        %1001 = vmatpush2.bf16.msra.mxu0 0
        %1002 = vmatprep.subr.bf16.mxu0 0
        %1003 = vmatpush2.bf16.msra.mxu0 0
        %1004 = vmatprep.subr.bf16.mxu0 0
        %1005 = vmatpush2.bf16.msra.mxu0 0
        %1006 = vmatprep.subr.bf16.mxu0 0
        %1007 = vmatpush2.bf16.msra.mxu0 0
        %1008 = vmatprep.subr.bf16.mxu0 0
        %1009 = vmatpush2.bf16.msra.mxu0 0
        %1010 = vmatprep.subr.bf16.mxu0 0
        %1011 = vmatpush2.bf16.msra.mxu0 0
        %1012 = vmatprep.subr.bf16.mxu0 0
        %1013 = vmatpush2.bf16.msra.mxu0 0
        %1014 = vmatprep.subr.bf16.mxu0 0
        %1015 = vmatpush2.bf16.msra.mxu0 0
        %1016 = vmatprep.mubr.bf16.mxu0 0
        %1017 = vmatmul.mubr.bf16.gmra.mxu0 %v752
        %v1018 = vpop.f32.mrf.mxu0
        %v1019 = vadd.f32 %v799, %v1018
        %v1020 = vpop.f32.mrf.mxu0
        %v1021 = vpop.f32.mrf.mxu0
        %v1022 = vadd.f32 %v799, %v1021
        %v1023 = vpop.f32.mrf.mxu0
        %1024 = vmatprep.mubr.bf16.mxu0 0
        %1025 = vmatmul.mubr.bf16.gmra.mxu0 %v753
        %v1026 = vpop.f32.mrf.mxu0
        %v1027 = vadd.f32 %v799, %v1026
        %v1028 = vpop.f32.mrf.mxu0
        %v1029 = vpop.f32.mrf.mxu0
        %v1030 = vadd.f32 %v799, %v1029
        %v1031 = vpop.f32.mrf.mxu0
        %1032 = vdwg.mxu0
        %v1033 = vpack.c.bf16 %v970, %v966
        %v1034 = vpack.c.bf16 %v972, %v968
        %v1035 = vpack.c.bf16 %v1022, %v1019
        %v1036 = vpack.c.bf16 %v980, %v976
        %v1037 = vpack.c.bf16 %v982, %v978
        %v1038 = vpack.c.bf16 %v1030, %v1027
        %v1039 = vld [vmem:[%s586] sm:$0xf]
        %v1040 = vld [vmem:[%s586 + $0x4] sm:$0xf]
        %v1041 = vld [vmem:[%s586 + $0x8] sm:$0xf]
        %v1042 = vld [vmem:[%s586 + $0xc] sm:$0xf]
        %v1043 = vld [vmem:[%s586 + $0x10] sm:$0xf]
        %v1044 = vld [vmem:[%s586 + $0x14] sm:$0xf]
        %v1045 = vld [vmem:[%s586 + $0x18] sm:$0xf]
        %v1046 = vld [vmem:[%s586 + $0x1c] sm:$0xf]
        %v1047 = vld [vmem:[%s586 + $0x20] sm:$0xf]
        %v1048 = vld [vmem:[%s586 + $0x24] sm:$0xf]
        %v1049 = vld [vmem:[%s586 + $0x28] sm:$0xf]
        %v1050 = vld [vmem:[%s586 + $0x2c] sm:$0xf]
        %v1051 = vld [vmem:[%s586 + $0x30] sm:$0xf]
        %v1052 = vld [vmem:[%s586 + $0x34] sm:$0xf]
        %v1053 = vld [vmem:[%s586 + $0x38] sm:$0xf]
        %v1054 = vld [vmem:[%s586 + $0x3c] sm:$0xf]
        %vm1055 = vcmask 261120
        %v1057 = vsel %vm1055, %v1033, 0
        %v1060 = vsel %vm1055, %v1034, 0
        %1062 = vmatprep.subr.bf16.mxu0 0
        %1063 = vmatpush1.bf16.xpose.msra.mxu0 0
        %1064 = vmatprep.subr.bf16.mxu0 0
        %1065 = vmatpush1.bf16.xpose.msra.mxu0 0
        %1066 = vmatprep.subr.bf16.mxu0 0
        %1067 = vmatpush1.bf16.xpose.msra.mxu0 0
        %1068 = vmatprep.subr.bf16.mxu0 0
        %1069 = vmatpush1.bf16.xpose.msra.mxu0 0
        %1070 = vmatprep.subr.bf16.mxu0 0
        %1071 = vmatpush1.bf16.xpose.msra.mxu0 0
        %1072 = vmatprep.subr.bf16.mxu0 0
        %1073 = vmatpush1.bf16.xpose.msra.mxu0 0
        %1074 = vmatprep.subr.bf16.mxu0 0
        %1075 = vmatpush1.bf16.xpose.msra.mxu0 0
        %1076 = vmatprep.subr.bf16.mxu0 0
        %1077 = vmatpush1.bf16.xpose.msra.mxu0 %v1060
        %1078 = vmatprep.subr.bf16.mxu0 0
        %1079 = vmatpush2.bf16.xpose.msra.mxu0 0
        %1080 = vmatprep.subr.bf16.mxu0 0
        %1081 = vmatpush2.bf16.xpose.msra.mxu0 0
        %1082 = vmatprep.subr.bf16.mxu0 0
        %1083 = vmatpush2.bf16.xpose.msra.mxu0 0
        %1084 = vmatprep.subr.bf16.mxu0 0
        %1085 = vmatpush2.bf16.xpose.msra.mxu0 0
        %1086 = vmatprep.subr.bf16.mxu0 0
        %1087 = vmatpush2.bf16.xpose.msra.mxu0 0
        %1088 = vmatprep.subr.bf16.mxu0 0
        %1089 = vmatpush2.bf16.xpose.msra.mxu0 0
        %1090 = vmatprep.subr.bf16.mxu0 0
        %1091 = vmatpush2.bf16.xpose.msra.mxu0 0
        %1092 = vmatprep.subr.bf16.mxu0 0
        %1093 = vmatpush2.bf16.xpose.msra.mxu0 0
        %1094 = vmatprep.mubr.bf16.mxu0 0
        %1095 = vmatmul.mubr.bf16.gmra.mxu0 %v1057
        %v1096 = vpop.f32.mrf.mxu0
        %v1097 = vadd.f32 0.0, %v1096
        %v1098 = vpop.f32.mrf.mxu0
        %v1099 = vpop.f32.mrf.mxu0
        %v1100 = vadd.f32 0.0, %v1099
        %v1101 = vpop.f32.mrf.mxu0
        %1102 = vdwg.mxu0
        %vm1103 = vcmask 130048
        %v1104 = vsel %vm1103, %v1097, -inf
        %1105 = vmax.xlane.f32.xlu0 %v1104
        %v1106 = vpop.xlane.xlu0 %1105
        %v1107 = vsel %vm1103, %v1100, -inf
        %1108 = vmax.xlane.f32.xlu0 %v1107
        %v1109 = vpop.xlane.xlu0 %1108
        %v1110 = vsub.f32 %v1097, %v1106
        %v1111 = vsub.f32 %v1100, %v1109
        %v1112 = vmul.f32 %v1110, 1.442695
        %v1113 = vpow.pop %v1112
        %v1114 = vmul.f32 %v1111, 1.442695
        %v1115 = vpow.pop %v1114
        %v1116 = vsel %vm1103, %v1113, 0.0
        %1117 = vadd.xlane.f32.xlu0 %v1116
        %v1118 = vpop.xlane.xlu0 %1117
        %v1119 = vsel %vm1103, %v1115, 0.0
        %1120 = vadd.xlane.f32.xlu0 %v1119
        %v1121 = vpop.xlane.xlu0 %1120
        %v1122 = vrcp.pop %v1118
        %v1123 = vrcp.pop %v1121
        %v1124 = vmul.f32 %v1113, %v1122
        %v1125 = vmul.f32 %v1115, %v1123
        %v1126 = vpack.c.bf16 %v1125, %v1124
        %v1128 = vsel %vm1103, %v1126, 0
        %1130 = vmatprep.subr.bf16.mxu0 0
        %1131 = vmatpush1.bf16.msra.mxu0 0
        %1132 = vmatprep.subr.bf16.mxu0 0
        %1133 = vmatpush1.bf16.msra.mxu0 0
        %1134 = vmatprep.subr.bf16.mxu0 0
        %1135 = vmatpush1.bf16.msra.mxu0 0
        %1136 = vmatprep.subr.bf16.mxu0 0
        %1137 = vmatpush1.bf16.msra.mxu0 0
        %1138 = vmatprep.subr.bf16.mxu0 0
        %1139 = vmatpush1.bf16.msra.mxu0 0
        %1140 = vmatprep.subr.bf16.mxu0 0
        %1141 = vmatpush1.bf16.msra.mxu0 0
        %1142 = vmatprep.subr.bf16.mxu0 0
        %1143 = vmatpush1.bf16.msra.mxu0 0
        %1144 = vmatprep.subr.bf16.mxu0 0
        %1145 = vmatpush1.bf16.msra.mxu0 %v1035
        %1146 = vmatprep.subr.bf16.mxu0 0
        %1147 = vmatpush2.bf16.msra.mxu0 0
        %1148 = vmatprep.subr.bf16.mxu0 0
        %1149 = vmatpush2.bf16.msra.mxu0 0
        %1150 = vmatprep.subr.bf16.mxu0 0
        %1151 = vmatpush2.bf16.msra.mxu0 0
        %1152 = vmatprep.subr.bf16.mxu0 0
        %1153 = vmatpush2.bf16.msra.mxu0 0
        %1154 = vmatprep.subr.bf16.mxu0 0
        %1155 = vmatpush2.bf16.msra.mxu0 0
        %1156 = vmatprep.subr.bf16.mxu0 0
        %1157 = vmatpush2.bf16.msra.mxu0 0
        %1158 = vmatprep.subr.bf16.mxu0 0
        %1159 = vmatpush2.bf16.msra.mxu0 0
        %1160 = vmatprep.subr.bf16.mxu0 0
        %1161 = vmatpush2.bf16.msra.mxu0 0
        %1162 = vmatprep.mubr.bf16.mxu0 0
        %1163 = vmatmul.mubr.bf16.gmra.mxu0 %v1128
        %v1164 = vpop.f32.mrf.mxu0
        %v1165 = vadd.f32 0.0, %v1164
        %v1166 = vpop.f32.mrf.mxu0
        %v1167 = vpop.f32.mrf.mxu0
        %v1168 = vadd.f32 0.0, %v1167
        %v1169 = vpop.f32.mrf.mxu0
        %1170 = vdwg.mxu0
        %v1171 = vpack.c.bf16 %v1168, %v1165
        %1173 = vrot.lane.b32.xlu0 %v1033, 96
        %v1174 = vpop.permute.xlu0 %1173
        %1176 = vrot.lane.b32.xlu0 %v1034, 96
        %v1177 = vpop.permute.xlu0 %1176
        %v1179 = vsel %vm1055, %v1174, 0
        %v1182 = vsel %vm1055, %v1177, 0
        %1184 = vmatprep.subr.bf16.mxu0 0
        %1185 = vmatpush1.bf16.xpose.msra.mxu0 0
        %1186 = vmatprep.subr.bf16.mxu0 0
        %1187 = vmatpush1.bf16.xpose.msra.mxu0 0
        %1188 = vmatprep.subr.bf16.mxu0 0
        %1189 = vmatpush1.bf16.xpose.msra.mxu0 0
        %1190 = vmatprep.subr.bf16.mxu0 0
        %1191 = vmatpush1.bf16.xpose.msra.mxu0 0
        %1192 = vmatprep.subr.bf16.mxu0 0
        %1193 = vmatpush1.bf16.xpose.msra.mxu0 0
        %1194 = vmatprep.subr.bf16.mxu0 0
        %1195 = vmatpush1.bf16.xpose.msra.mxu0 0
        %1196 = vmatprep.subr.bf16.mxu0 0
        %1197 = vmatpush1.bf16.xpose.msra.mxu0 0
        %1198 = vmatprep.subr.bf16.mxu0 0
        %1199 = vmatpush1.bf16.xpose.msra.mxu0 %v1182
        %1200 = vmatprep.subr.bf16.mxu0 0
        %1201 = vmatpush2.bf16.xpose.msra.mxu0 0
        %1202 = vmatprep.subr.bf16.mxu0 0
        %1203 = vmatpush2.bf16.xpose.msra.mxu0 0
        %1204 = vmatprep.subr.bf16.mxu0 0
        %1205 = vmatpush2.bf16.xpose.msra.mxu0 0
        %1206 = vmatprep.subr.bf16.mxu0 0
        %1207 = vmatpush2.bf16.xpose.msra.mxu0 0
        %1208 = vmatprep.subr.bf16.mxu0 0
        %1209 = vmatpush2.bf16.xpose.msra.mxu0 0
        %1210 = vmatprep.subr.bf16.mxu0 0
        %1211 = vmatpush2.bf16.xpose.msra.mxu0 0
        %1212 = vmatprep.subr.bf16.mxu0 0
        %1213 = vmatpush2.bf16.xpose.msra.mxu0 0
        %1214 = vmatprep.subr.bf16.mxu0 0
        %1215 = vmatpush2.bf16.xpose.msra.mxu0 0
        %1216 = vmatprep.mubr.bf16.mxu0 0
        %1217 = vmatmul.mubr.bf16.gmra.mxu0 %v1179
        %v1218 = vpop.f32.mrf.mxu0
        %v1219 = vadd.f32 0.0, %v1218
        %v1220 = vpop.f32.mrf.mxu0
        %v1221 = vpop.f32.mrf.mxu0
        %v1222 = vadd.f32 0.0, %v1221
        %v1223 = vpop.f32.mrf.mxu0
        %1224 = vdwg.mxu0
        %v1225 = vsel %vm1103, %v1219, -inf
        %1226 = vmax.xlane.f32.xlu0 %v1225
        %v1227 = vpop.xlane.xlu0 %1226
        %v1228 = vsel %vm1103, %v1222, -inf
        %1229 = vmax.xlane.f32.xlu0 %v1228
        %v1230 = vpop.xlane.xlu0 %1229
        %v1231 = vsub.f32 %v1219, %v1227
        %v1232 = vsub.f32 %v1222, %v1230
        %v1233 = vmul.f32 %v1231, 1.442695
        %v1234 = vpow.pop %v1233
        %v1235 = vmul.f32 %v1232, 1.442695
        %v1236 = vpow.pop %v1235
        %v1237 = vsel %vm1103, %v1234, 0.0
        %1238 = vadd.xlane.f32.xlu0 %v1237
        %v1239 = vpop.xlane.xlu0 %1238
        %v1240 = vsel %vm1103, %v1236, 0.0
        %1241 = vadd.xlane.f32.xlu0 %v1240
        %v1242 = vpop.xlane.xlu0 %1241
        %v1243 = vrcp.pop %v1239
        %v1244 = vrcp.pop %v1242
        %v1245 = vmul.f32 %v1234, %v1243
        %v1246 = vmul.f32 %v1236, %v1244
        %v1247 = vpack.c.bf16 %v1246, %v1245
        %1249 = vrot.lane.b32.xlu0 %v1035, 96
        %v1250 = vpop.permute.xlu0 %1249
        %v1253 = vsel %vm1103, %v1247, 0
        %1255 = vmatprep.subr.bf16.mxu0 0
        %1256 = vmatpush1.bf16.msra.mxu0 0
        %1257 = vmatprep.subr.bf16.mxu0 0
        %1258 = vmatpush1.bf16.msra.mxu0 0
        %1259 = vmatprep.subr.bf16.mxu0 0
        %1260 = vmatpush1.bf16.msra.mxu0 0
        %1261 = vmatprep.subr.bf16.mxu0 0
        %1262 = vmatpush1.bf16.msra.mxu0 0
        %1263 = vmatprep.subr.bf16.mxu0 0
        %1264 = vmatpush1.bf16.msra.mxu0 0
        %1265 = vmatprep.subr.bf16.mxu0 0
        %1266 = vmatpush1.bf16.msra.mxu0 0
        %1267 = vmatprep.subr.bf16.mxu0 0
        %1268 = vmatpush1.bf16.msra.mxu0 0
        %1269 = vmatprep.subr.bf16.mxu0 0
        %1270 = vmatpush1.bf16.msra.mxu0 %v1250
        %1271 = vmatprep.subr.bf16.mxu0 0
        %1272 = vmatpush2.bf16.msra.mxu0 0
        %1273 = vmatprep.subr.bf16.mxu0 0
        %1274 = vmatpush2.bf16.msra.mxu0 0
        %1275 = vmatprep.subr.bf16.mxu0 0
        %1276 = vmatpush2.bf16.msra.mxu0 0
        %1277 = vmatprep.subr.bf16.mxu0 0
        %1278 = vmatpush2.bf16.msra.mxu0 0
        %1279 = vmatprep.subr.bf16.mxu0 0
        %1280 = vmatpush2.bf16.msra.mxu0 0
        %1281 = vmatprep.subr.bf16.mxu0 0
        %1282 = vmatpush2.bf16.msra.mxu0 0
        %1283 = vmatprep.subr.bf16.mxu0 0
        %1284 = vmatpush2.bf16.msra.mxu0 0
        %1285 = vmatprep.subr.bf16.mxu0 0
        %1286 = vmatpush2.bf16.msra.mxu0 0
        %1287 = vmatprep.mubr.bf16.mxu0 0
        %1288 = vmatmul.mubr.bf16.gmra.mxu0 %v1253
        %v1289 = vpop.f32.mrf.mxu0
        %v1290 = vadd.f32 0.0, %v1289
        %v1291 = vpop.f32.mrf.mxu0
        %v1292 = vpop.f32.mrf.mxu0
        %v1293 = vadd.f32 0.0, %v1292
        %v1294 = vpop.f32.mrf.mxu0
        %1295 = vdwg.mxu0
        %v1296 = vpack.c.bf16 %v1293, %v1290
        %v1301 = vunpack.c.l.b16 %v1043
        %v1302 = vunpack.c.l.b16 %v1044
        %v1303 = vunpack.c.l.b16 %v1045
        %v1304 = vunpack.c.l.b16 %v1046
        %v1305 = vpack.c.b16 %v1302, %v1301
        %v1306 = vpack.c.b16 %v1304, %v1303
        %v1310 = vsel %vm1055, %v1296, 0
        %1312 = vmatprep.subr.bf16.mxu0 0
        %1313 = vmatpush1.bf16.msra.mxu0 0
        %1314 = vmatprep.subr.bf16.mxu0 0
        %1315 = vmatpush1.bf16.msra.mxu0 0
        %1316 = vmatprep.subr.bf16.mxu0 0
        %1317 = vmatpush1.bf16.msra.mxu0 0
        %1318 = vmatprep.subr.bf16.mxu0 0
        %1319 = vmatpush1.bf16.msra.mxu0 0
        %1320 = vmatprep.subr.bf16.mxu0 0
        %1321 = vmatpush1.bf16.msra.mxu0 0
        %1322 = vmatprep.subr.bf16.mxu0 0
        %1323 = vmatpush1.bf16.msra.mxu0 0
        %1324 = vmatprep.subr.bf16.mxu0 0
        %1325 = vmatpush1.bf16.msra.mxu0 %v1306
        %1326 = vmatprep.subr.bf16.mxu0 0
        %1327 = vmatpush1.bf16.msra.mxu0 %v1305
        %1328 = vmatprep.subr.bf16.mxu0 0
        %1329 = vmatpush2.bf16.msra.mxu0 0
        %1330 = vmatprep.subr.bf16.mxu0 0
        %1331 = vmatpush2.bf16.msra.mxu0 0
        %1332 = vmatprep.subr.bf16.mxu0 0
        %1333 = vmatpush2.bf16.msra.mxu0 0
        %1334 = vmatprep.subr.bf16.mxu0 0
        %1335 = vmatpush2.bf16.msra.mxu0 0
        %1336 = vmatprep.subr.bf16.mxu0 0
        %1337 = vmatpush2.bf16.msra.mxu0 0
        %1338 = vmatprep.subr.bf16.mxu0 0
        %1339 = vmatpush2.bf16.msra.mxu0 0
        %1340 = vmatprep.subr.bf16.mxu0 0
        %1341 = vmatpush2.bf16.msra.mxu0 0
        %1342 = vmatprep.subr.bf16.mxu0 0
        %1343 = vmatpush2.bf16.msra.mxu0 0
        %1344 = vmatprep.mubr.bf16.mxu0 0
        %1345 = vmatmul.mubr.bf16.gmra.mxu0 %v1310
        %v1346 = vpop.f32.mrf.mxu0
        %v1347 = vadd.f32 0.0, %v1346
        %v1348 = vpop.f32.mrf.mxu0
        %v1349 = vpop.f32.mrf.mxu0
        %v1350 = vadd.f32 0.0, %v1349
        %v1351 = vpop.f32.mrf.mxu0
        %1352 = vdwg.mxu0
        %v1357 = vunpack.c.l.b16 %v1039
        %v1358 = vunpack.c.l.b16 %v1040
        %v1359 = vunpack.c.l.b16 %v1041
        %v1360 = vunpack.c.l.b16 %v1042
        %v1361 = vpack.c.b16 %v1358, %v1357
        %v1362 = vpack.c.b16 %v1360, %v1359
        %v1366 = vsel %vm1055, %v1171, 0
        %1368 = vmatprep.subr.bf16.mxu0 0
        %1369 = vmatpush1.bf16.msra.mxu0 0
        %1370 = vmatprep.subr.bf16.mxu0 0
        %1371 = vmatpush1.bf16.msra.mxu0 0
        %1372 = vmatprep.subr.bf16.mxu0 0
        %1373 = vmatpush1.bf16.msra.mxu0 0
        %1374 = vmatprep.subr.bf16.mxu0 0
        %1375 = vmatpush1.bf16.msra.mxu0 0
        %1376 = vmatprep.subr.bf16.mxu0 0
        %1377 = vmatpush1.bf16.msra.mxu0 0
        %1378 = vmatprep.subr.bf16.mxu0 0
        %1379 = vmatpush1.bf16.msra.mxu0 0
        %1380 = vmatprep.subr.bf16.mxu0 0
        %1381 = vmatpush1.bf16.msra.mxu0 %v1362
        %1382 = vmatprep.subr.bf16.mxu0 0
        %1383 = vmatpush1.bf16.msra.mxu0 %v1361
        %1384 = vmatprep.subr.bf16.mxu0 0
        %1385 = vmatpush2.bf16.msra.mxu0 0
        %1386 = vmatprep.subr.bf16.mxu0 0
        %1387 = vmatpush2.bf16.msra.mxu0 0
        %1388 = vmatprep.subr.bf16.mxu0 0
        %1389 = vmatpush2.bf16.msra.mxu0 0
        %1390 = vmatprep.subr.bf16.mxu0 0
        %1391 = vmatpush2.bf16.msra.mxu0 0
        %1392 = vmatprep.subr.bf16.mxu0 0
        %1393 = vmatpush2.bf16.msra.mxu0 0
        %1394 = vmatprep.subr.bf16.mxu0 0
        %1395 = vmatpush2.bf16.msra.mxu0 0
        %1396 = vmatprep.subr.bf16.mxu0 0
        %1397 = vmatpush2.bf16.msra.mxu0 0
        %1398 = vmatprep.subr.bf16.mxu0 0
        %1399 = vmatpush2.bf16.msra.mxu0 0
        %1400 = vmatprep.mubr.bf16.mxu0 0
        %1401 = vmatmul.mubr.bf16.gmra.mxu0 %v1366
        %v1402 = vpop.f32.mrf.mxu0
        %v1403 = vadd.f32 %v1347, %v1402
        %v1404 = vpop.f32.mrf.mxu0
        %v1405 = vpop.f32.mrf.mxu0
        %v1406 = vadd.f32 %v1350, %v1405
        %v1407 = vpop.f32.mrf.mxu0
        %1408 = vdwg.mxu0
        %1409 = vrot.lane.b32.xlu0 %v1033, 64
        %v1410 = vpop.permute.xlu0 %1409
        %1411 = vrot.lane.b32.xlu0 %v1034, 64
        %v1412 = vpop.permute.xlu0 %1411
        %v1414 = vsel %vm1055, %v1410, 0
        %v1417 = vsel %vm1055, %v1412, 0
        %1419 = vmatprep.subr.bf16.mxu0 0
        %1420 = vmatpush1.bf16.xpose.msra.mxu0 0
        %1421 = vmatprep.subr.bf16.mxu0 0
        %1422 = vmatpush1.bf16.xpose.msra.mxu0 0
        %1423 = vmatprep.subr.bf16.mxu0 0
        %1424 = vmatpush1.bf16.xpose.msra.mxu0 0
        %1425 = vmatprep.subr.bf16.mxu0 0
        %1426 = vmatpush1.bf16.xpose.msra.mxu0 0
        %1427 = vmatprep.subr.bf16.mxu0 0
        %1428 = vmatpush1.bf16.xpose.msra.mxu0 0
        %1429 = vmatprep.subr.bf16.mxu0 0
        %1430 = vmatpush1.bf16.xpose.msra.mxu0 0
        %1431 = vmatprep.subr.bf16.mxu0 0
        %1432 = vmatpush1.bf16.xpose.msra.mxu0 0
        %1433 = vmatprep.subr.bf16.mxu0 0
        %1434 = vmatpush1.bf16.xpose.msra.mxu0 %v1417
        %1435 = vmatprep.subr.bf16.mxu0 0
        %1436 = vmatpush2.bf16.xpose.msra.mxu0 0
        %1437 = vmatprep.subr.bf16.mxu0 0
        %1438 = vmatpush2.bf16.xpose.msra.mxu0 0
        %1439 = vmatprep.subr.bf16.mxu0 0
        %1440 = vmatpush2.bf16.xpose.msra.mxu0 0
        %1441 = vmatprep.subr.bf16.mxu0 0
        %1442 = vmatpush2.bf16.xpose.msra.mxu0 0
        %1443 = vmatprep.subr.bf16.mxu0 0
        %1444 = vmatpush2.bf16.xpose.msra.mxu0 0
        %1445 = vmatprep.subr.bf16.mxu0 0
        %1446 = vmatpush2.bf16.xpose.msra.mxu0 0
        %1447 = vmatprep.subr.bf16.mxu0 0
        %1448 = vmatpush2.bf16.xpose.msra.mxu0 0
        %1449 = vmatprep.subr.bf16.mxu0 0
        %1450 = vmatpush2.bf16.xpose.msra.mxu0 0
        %1451 = vmatprep.mubr.bf16.mxu0 0
        %1452 = vmatmul.mubr.bf16.gmra.mxu0 %v1414
        %v1453 = vpop.f32.mrf.mxu0
        %v1454 = vadd.f32 0.0, %v1453
        %v1455 = vpop.f32.mrf.mxu0
        %v1456 = vpop.f32.mrf.mxu0
        %v1457 = vadd.f32 0.0, %v1456
        %v1458 = vpop.f32.mrf.mxu0
        %1459 = vdwg.mxu0
        %v1460 = vsel %vm1103, %v1454, -inf
        %1461 = vmax.xlane.f32.xlu0 %v1460
        %v1462 = vpop.xlane.xlu0 %1461
        %v1463 = vsel %vm1103, %v1457, -inf
        %1464 = vmax.xlane.f32.xlu0 %v1463
        %v1465 = vpop.xlane.xlu0 %1464
        %v1466 = vsub.f32 %v1454, %v1462
        %v1467 = vsub.f32 %v1457, %v1465
        %v1468 = vmul.f32 %v1466, 1.442695
        %v1469 = vpow.pop %v1468
        %v1470 = vmul.f32 %v1467, 1.442695
        %v1471 = vpow.pop %v1470
        %v1472 = vsel %vm1103, %v1469, 0.0
        %1473 = vadd.xlane.f32.xlu0 %v1472
        %v1474 = vpop.xlane.xlu0 %1473
        %v1475 = vsel %vm1103, %v1471, 0.0
        %1476 = vadd.xlane.f32.xlu0 %v1475
        %v1477 = vpop.xlane.xlu0 %1476
        %v1478 = vrcp.pop %v1474
        %v1479 = vrcp.pop %v1477
        %v1480 = vmul.f32 %v1469, %v1478
        %v1481 = vmul.f32 %v1471, %v1479
        %v1482 = vpack.c.bf16 %v1481, %v1480
        %1483 = vrot.lane.b32.xlu0 %v1035, 64
        %v1484 = vpop.permute.xlu0 %1483
        %v1487 = vsel %vm1103, %v1482, 0
        %1489 = vmatprep.subr.bf16.mxu0 0
        %1490 = vmatpush1.bf16.msra.mxu0 0
        %1491 = vmatprep.subr.bf16.mxu0 0
        %1492 = vmatpush1.bf16.msra.mxu0 0
        %1493 = vmatprep.subr.bf16.mxu0 0
        %1494 = vmatpush1.bf16.msra.mxu0 0
        %1495 = vmatprep.subr.bf16.mxu0 0
        %1496 = vmatpush1.bf16.msra.mxu0 0
        %1497 = vmatprep.subr.bf16.mxu0 0
        %1498 = vmatpush1.bf16.msra.mxu0 0
        %1499 = vmatprep.subr.bf16.mxu0 0
        %1500 = vmatpush1.bf16.msra.mxu0 0
        %1501 = vmatprep.subr.bf16.mxu0 0
        %1502 = vmatpush1.bf16.msra.mxu0 0
        %1503 = vmatprep.subr.bf16.mxu0 0
        %1504 = vmatpush1.bf16.msra.mxu0 %v1484
        %1505 = vmatprep.subr.bf16.mxu0 0
        %1506 = vmatpush2.bf16.msra.mxu0 0
        %1507 = vmatprep.subr.bf16.mxu0 0
        %1508 = vmatpush2.bf16.msra.mxu0 0
        %1509 = vmatprep.subr.bf16.mxu0 0
        %1510 = vmatpush2.bf16.msra.mxu0 0
        %1511 = vmatprep.subr.bf16.mxu0 0
        %1512 = vmatpush2.bf16.msra.mxu0 0
        %1513 = vmatprep.subr.bf16.mxu0 0
        %1514 = vmatpush2.bf16.msra.mxu0 0
        %1515 = vmatprep.subr.bf16.mxu0 0
        %1516 = vmatpush2.bf16.msra.mxu0 0
        %1517 = vmatprep.subr.bf16.mxu0 0
        %1518 = vmatpush2.bf16.msra.mxu0 0
        %1519 = vmatprep.subr.bf16.mxu0 0
        %1520 = vmatpush2.bf16.msra.mxu0 0
        %1521 = vmatprep.mubr.bf16.mxu0 0
        %1522 = vmatmul.mubr.bf16.gmra.mxu0 %v1487
        %v1523 = vpop.f32.mrf.mxu0
        %v1524 = vadd.f32 0.0, %v1523
        %v1525 = vpop.f32.mrf.mxu0
        %v1526 = vpop.f32.mrf.mxu0
        %v1527 = vadd.f32 0.0, %v1526
        %v1528 = vpop.f32.mrf.mxu0
        %1529 = vdwg.mxu0
        %v1530 = vpack.c.bf16 %v1527, %v1524
        %v1535 = vunpack.c.l.b16 %v1047
        %v1536 = vunpack.c.l.b16 %v1048
        %v1537 = vunpack.c.l.b16 %v1049
        %v1538 = vunpack.c.l.b16 %v1050
        %v1539 = vpack.c.b16 %v1536, %v1535
        %v1540 = vpack.c.b16 %v1538, %v1537
        %v1544 = vsel %vm1055, %v1530, 0
        %1546 = vmatprep.subr.bf16.mxu0 0
        %1547 = vmatpush1.bf16.msra.mxu0 0
        %1548 = vmatprep.subr.bf16.mxu0 0
        %1549 = vmatpush1.bf16.msra.mxu0 0
        %1550 = vmatprep.subr.bf16.mxu0 0
        %1551 = vmatpush1.bf16.msra.mxu0 0
        %1552 = vmatprep.subr.bf16.mxu0 0
        %1553 = vmatpush1.bf16.msra.mxu0 0
        %1554 = vmatprep.subr.bf16.mxu0 0
        %1555 = vmatpush1.bf16.msra.mxu0 0
        %1556 = vmatprep.subr.bf16.mxu0 0
        %1557 = vmatpush1.bf16.msra.mxu0 0
        %1558 = vmatprep.subr.bf16.mxu0 0
        %1559 = vmatpush1.bf16.msra.mxu0 %v1540
        %1560 = vmatprep.subr.bf16.mxu0 0
        %1561 = vmatpush1.bf16.msra.mxu0 %v1539
        %1562 = vmatprep.subr.bf16.mxu0 0
        %1563 = vmatpush2.bf16.msra.mxu0 0
        %1564 = vmatprep.subr.bf16.mxu0 0
        %1565 = vmatpush2.bf16.msra.mxu0 0
        %1566 = vmatprep.subr.bf16.mxu0 0
        %1567 = vmatpush2.bf16.msra.mxu0 0
        %1568 = vmatprep.subr.bf16.mxu0 0
        %1569 = vmatpush2.bf16.msra.mxu0 0
        %1570 = vmatprep.subr.bf16.mxu0 0
        %1571 = vmatpush2.bf16.msra.mxu0 0
        %1572 = vmatprep.subr.bf16.mxu0 0
        %1573 = vmatpush2.bf16.msra.mxu0 0
        %1574 = vmatprep.subr.bf16.mxu0 0
        %1575 = vmatpush2.bf16.msra.mxu0 0
        %1576 = vmatprep.subr.bf16.mxu0 0
        %1577 = vmatpush2.bf16.msra.mxu0 0
        %1578 = vmatprep.mubr.bf16.mxu0 0
        %1579 = vmatmul.mubr.bf16.gmra.mxu0 %v1544
        %v1580 = vpop.f32.mrf.mxu0
        %v1581 = vadd.f32 0.0, %v1580
        %v1582 = vpop.f32.mrf.mxu0
        %v1583 = vpop.f32.mrf.mxu0
        %v1584 = vadd.f32 0.0, %v1583
        %v1585 = vpop.f32.mrf.mxu0
        %1586 = vdwg.mxu0
        %v1587 = vadd.f32 %v1403, %v1581
        %v1588 = vadd.f32 %v1406, %v1584
        %1589 = vrot.lane.b32.xlu0 %v1033, 32
        %v1590 = vpop.permute.xlu0 %1589
        %1591 = vrot.lane.b32.xlu0 %v1034, 32
        %v1592 = vpop.permute.xlu0 %1591
        %v1594 = vsel %vm1055, %v1590, 0
        %v1597 = vsel %vm1055, %v1592, 0
        %1599 = vmatprep.subr.bf16.mxu0 0
        %1600 = vmatpush1.bf16.xpose.msra.mxu0 0
        %1601 = vmatprep.subr.bf16.mxu0 0
        %1602 = vmatpush1.bf16.xpose.msra.mxu0 0
        %1603 = vmatprep.subr.bf16.mxu0 0
        %1604 = vmatpush1.bf16.xpose.msra.mxu0 0
        %1605 = vmatprep.subr.bf16.mxu0 0
        %1606 = vmatpush1.bf16.xpose.msra.mxu0 0
        %1607 = vmatprep.subr.bf16.mxu0 0
        %1608 = vmatpush1.bf16.xpose.msra.mxu0 0
        %1609 = vmatprep.subr.bf16.mxu0 0
        %1610 = vmatpush1.bf16.xpose.msra.mxu0 0
        %1611 = vmatprep.subr.bf16.mxu0 0
        %1612 = vmatpush1.bf16.xpose.msra.mxu0 0
        %1613 = vmatprep.subr.bf16.mxu0 0
        %1614 = vmatpush1.bf16.xpose.msra.mxu0 %v1597
        %1615 = vmatprep.subr.bf16.mxu0 0
        %1616 = vmatpush2.bf16.xpose.msra.mxu0 0
        %1617 = vmatprep.subr.bf16.mxu0 0
        %1618 = vmatpush2.bf16.xpose.msra.mxu0 0
        %1619 = vmatprep.subr.bf16.mxu0 0
        %1620 = vmatpush2.bf16.xpose.msra.mxu0 0
        %1621 = vmatprep.subr.bf16.mxu0 0
        %1622 = vmatpush2.bf16.xpose.msra.mxu0 0
        %1623 = vmatprep.subr.bf16.mxu0 0
        %1624 = vmatpush2.bf16.xpose.msra.mxu0 0
        %1625 = vmatprep.subr.bf16.mxu0 0
        %1626 = vmatpush2.bf16.xpose.msra.mxu0 0
        %1627 = vmatprep.subr.bf16.mxu0 0
        %1628 = vmatpush2.bf16.xpose.msra.mxu0 0
        %1629 = vmatprep.subr.bf16.mxu0 0
        %1630 = vmatpush2.bf16.xpose.msra.mxu0 0
        %1631 = vmatprep.mubr.bf16.mxu0 0
        %1632 = vmatmul.mubr.bf16.gmra.mxu0 %v1594
        %v1633 = vpop.f32.mrf.mxu0
        %v1634 = vadd.f32 0.0, %v1633
        %v1635 = vpop.f32.mrf.mxu0
        %v1636 = vpop.f32.mrf.mxu0
        %v1637 = vadd.f32 0.0, %v1636
        %v1638 = vpop.f32.mrf.mxu0
        %1639 = vdwg.mxu0
        %v1640 = vsel %vm1103, %v1634, -inf
        %1641 = vmax.xlane.f32.xlu0 %v1640
        %v1642 = vpop.xlane.xlu0 %1641
        %v1643 = vsel %vm1103, %v1637, -inf
        %1644 = vmax.xlane.f32.xlu0 %v1643
        %v1645 = vpop.xlane.xlu0 %1644
        %v1646 = vsub.f32 %v1634, %v1642
        %v1647 = vsub.f32 %v1637, %v1645
        %v1648 = vmul.f32 %v1646, 1.442695
        %v1649 = vpow.pop %v1648
        %v1650 = vmul.f32 %v1647, 1.442695
        %v1651 = vpow.pop %v1650
        %v1652 = vsel %vm1103, %v1649, 0.0
        %1653 = vadd.xlane.f32.xlu0 %v1652
        %v1654 = vpop.xlane.xlu0 %1653
        %v1655 = vsel %vm1103, %v1651, 0.0
        %1656 = vadd.xlane.f32.xlu0 %v1655
        %v1657 = vpop.xlane.xlu0 %1656
        %v1658 = vrcp.pop %v1654
        %v1659 = vrcp.pop %v1657
        %v1660 = vmul.f32 %v1649, %v1658
        %v1661 = vmul.f32 %v1651, %v1659
        %v1662 = vpack.c.bf16 %v1661, %v1660
        %1663 = vrot.lane.b32.xlu0 %v1035, 32
        %v1664 = vpop.permute.xlu0 %1663
        %v1667 = vsel %vm1103, %v1662, 0
        %1669 = vmatprep.subr.bf16.mxu0 0
        %1670 = vmatpush1.bf16.msra.mxu0 0
        %1671 = vmatprep.subr.bf16.mxu0 0
        %1672 = vmatpush1.bf16.msra.mxu0 0
        %1673 = vmatprep.subr.bf16.mxu0 0
        %1674 = vmatpush1.bf16.msra.mxu0 0
        %1675 = vmatprep.subr.bf16.mxu0 0
        %1676 = vmatpush1.bf16.msra.mxu0 0
        %1677 = vmatprep.subr.bf16.mxu0 0
        %1678 = vmatpush1.bf16.msra.mxu0 0
        %1679 = vmatprep.subr.bf16.mxu0 0
        %1680 = vmatpush1.bf16.msra.mxu0 0
        %1681 = vmatprep.subr.bf16.mxu0 0
        %1682 = vmatpush1.bf16.msra.mxu0 0
        %1683 = vmatprep.subr.bf16.mxu0 0
        %1684 = vmatpush1.bf16.msra.mxu0 %v1664
        %1685 = vmatprep.subr.bf16.mxu0 0
        %1686 = vmatpush2.bf16.msra.mxu0 0
        %1687 = vmatprep.subr.bf16.mxu0 0
        %1688 = vmatpush2.bf16.msra.mxu0 0
        %1689 = vmatprep.subr.bf16.mxu0 0
        %1690 = vmatpush2.bf16.msra.mxu0 0
        %1691 = vmatprep.subr.bf16.mxu0 0
        %1692 = vmatpush2.bf16.msra.mxu0 0
        %1693 = vmatprep.subr.bf16.mxu0 0
        %1694 = vmatpush2.bf16.msra.mxu0 0
        %1695 = vmatprep.subr.bf16.mxu0 0
        %1696 = vmatpush2.bf16.msra.mxu0 0
        %1697 = vmatprep.subr.bf16.mxu0 0
        %1698 = vmatpush2.bf16.msra.mxu0 0
        %1699 = vmatprep.subr.bf16.mxu0 0
        %1700 = vmatpush2.bf16.msra.mxu0 0
        %1701 = vmatprep.mubr.bf16.mxu0 0
        %1702 = vmatmul.mubr.bf16.gmra.mxu0 %v1667
        %v1703 = vpop.f32.mrf.mxu0
        %v1704 = vadd.f32 0.0, %v1703
        %v1705 = vpop.f32.mrf.mxu0
        %v1706 = vpop.f32.mrf.mxu0
        %v1707 = vadd.f32 0.0, %v1706
        %v1708 = vpop.f32.mrf.mxu0
        %1709 = vdwg.mxu0
        %v1710 = vpack.c.bf16 %v1707, %v1704
        %v1715 = vunpack.c.l.b16 %v1051
        %v1716 = vunpack.c.l.b16 %v1052
        %v1717 = vunpack.c.l.b16 %v1053
        %v1718 = vunpack.c.l.b16 %v1054
        %v1719 = vpack.c.b16 %v1716, %v1715
        %v1720 = vpack.c.b16 %v1718, %v1717
        %v1724 = vsel %vm1055, %v1710, 0
        %1726 = vmatprep.subr.bf16.mxu0 0
        %1727 = vmatpush1.bf16.msra.mxu0 0
        %1728 = vmatprep.subr.bf16.mxu0 0
        %1729 = vmatpush1.bf16.msra.mxu0 0
        %1730 = vmatprep.subr.bf16.mxu0 0
        %1731 = vmatpush1.bf16.msra.mxu0 0
        %1732 = vmatprep.subr.bf16.mxu0 0
        %1733 = vmatpush1.bf16.msra.mxu0 0
        %1734 = vmatprep.subr.bf16.mxu0 0
        %1735 = vmatpush1.bf16.msra.mxu0 0
        %1736 = vmatprep.subr.bf16.mxu0 0
        %1737 = vmatpush1.bf16.msra.mxu0 0
        %1738 = vmatprep.subr.bf16.mxu0 0
        %1739 = vmatpush1.bf16.msra.mxu0 %v1720
        %1740 = vmatprep.subr.bf16.mxu0 0
        %1741 = vmatpush1.bf16.msra.mxu0 %v1719
        %1742 = vmatprep.subr.bf16.mxu0 0
        %1743 = vmatpush2.bf16.msra.mxu0 0
        %1744 = vmatprep.subr.bf16.mxu0 0
        %1745 = vmatpush2.bf16.msra.mxu0 0
        %1746 = vmatprep.subr.bf16.mxu0 0
        %1747 = vmatpush2.bf16.msra.mxu0 0
        %1748 = vmatprep.subr.bf16.mxu0 0
        %1749 = vmatpush2.bf16.msra.mxu0 0
        %1750 = vmatprep.subr.bf16.mxu0 0
        %1751 = vmatpush2.bf16.msra.mxu0 0
        %1752 = vmatprep.subr.bf16.mxu0 0
        %1753 = vmatpush2.bf16.msra.mxu0 0
        %1754 = vmatprep.subr.bf16.mxu0 0
        %1755 = vmatpush2.bf16.msra.mxu0 0
        %1756 = vmatprep.subr.bf16.mxu0 0
        %1757 = vmatpush2.bf16.msra.mxu0 0
        %1758 = vmatprep.mubr.bf16.mxu0 0
        %1759 = vmatmul.mubr.bf16.gmra.mxu0 %v1724
        %v1760 = vpop.f32.mrf.mxu0
        %v1761 = vadd.f32 0.0, %v1760
        %v1762 = vpop.f32.mrf.mxu0
        %v1763 = vpop.f32.mrf.mxu0
        %v1764 = vadd.f32 0.0, %v1763
        %v1765 = vpop.f32.mrf.mxu0
        %1766 = vdwg.mxu0
        %v1767 = vadd.f32 %v1587, %v1761
        %v1768 = vadd.f32 %v1588, %v1764
        %v1770 = vsel %vm1055, %v1036, 0
        %v1773 = vsel %vm1055, %v1037, 0
        %1775 = vmatprep.subr.bf16.mxu0 0
        %1776 = vmatpush1.bf16.xpose.msra.mxu0 0
        %1777 = vmatprep.subr.bf16.mxu0 0
        %1778 = vmatpush1.bf16.xpose.msra.mxu0 0
        %1779 = vmatprep.subr.bf16.mxu0 0
        %1780 = vmatpush1.bf16.xpose.msra.mxu0 0
        %1781 = vmatprep.subr.bf16.mxu0 0
        %1782 = vmatpush1.bf16.xpose.msra.mxu0 0
        %1783 = vmatprep.subr.bf16.mxu0 0
        %1784 = vmatpush1.bf16.xpose.msra.mxu0 0
        %1785 = vmatprep.subr.bf16.mxu0 0
        %1786 = vmatpush1.bf16.xpose.msra.mxu0 0
        %1787 = vmatprep.subr.bf16.mxu0 0
        %1788 = vmatpush1.bf16.xpose.msra.mxu0 0
        %1789 = vmatprep.subr.bf16.mxu0 0
        %1790 = vmatpush1.bf16.xpose.msra.mxu0 %v1773
        %1791 = vmatprep.subr.bf16.mxu0 0
        %1792 = vmatpush2.bf16.xpose.msra.mxu0 0
        %1793 = vmatprep.subr.bf16.mxu0 0
        %1794 = vmatpush2.bf16.xpose.msra.mxu0 0
        %1795 = vmatprep.subr.bf16.mxu0 0
        %1796 = vmatpush2.bf16.xpose.msra.mxu0 0
        %1797 = vmatprep.subr.bf16.mxu0 0
        %1798 = vmatpush2.bf16.xpose.msra.mxu0 0
        %1799 = vmatprep.subr.bf16.mxu0 0
        %1800 = vmatpush2.bf16.xpose.msra.mxu0 0
        %1801 = vmatprep.subr.bf16.mxu0 0
        %1802 = vmatpush2.bf16.xpose.msra.mxu0 0
        %1803 = vmatprep.subr.bf16.mxu0 0
        %1804 = vmatpush2.bf16.xpose.msra.mxu0 0
        %1805 = vmatprep.subr.bf16.mxu0 0
        %1806 = vmatpush2.bf16.xpose.msra.mxu0 0
        %1807 = vmatprep.mubr.bf16.mxu0 0
        %1808 = vmatmul.mubr.bf16.gmra.mxu0 %v1770
        %v1809 = vpop.f32.mrf.mxu0
        %v1810 = vadd.f32 0.0, %v1809
        %v1811 = vpop.f32.mrf.mxu0
        %v1812 = vpop.f32.mrf.mxu0
        %v1813 = vadd.f32 0.0, %v1812
        %v1814 = vpop.f32.mrf.mxu0
        %1815 = vdwg.mxu0
        %v1816 = vsel %vm1103, %v1810, -inf
        %1817 = vmax.xlane.f32.xlu0 %v1816
        %v1818 = vpop.xlane.xlu0 %1817
        %v1819 = vsel %vm1103, %v1813, -inf
        %1820 = vmax.xlane.f32.xlu0 %v1819
        %v1821 = vpop.xlane.xlu0 %1820
        %v1822 = vsub.f32 %v1810, %v1818
        %v1823 = vsub.f32 %v1813, %v1821
        %v1824 = vmul.f32 %v1822, 1.442695
        %v1825 = vpow.pop %v1824
        %v1826 = vmul.f32 %v1823, 1.442695
        %v1827 = vpow.pop %v1826
        %v1828 = vsel %vm1103, %v1825, 0.0
        %1829 = vadd.xlane.f32.xlu0 %v1828
        %v1830 = vpop.xlane.xlu0 %1829
        %v1831 = vsel %vm1103, %v1827, 0.0
        %1832 = vadd.xlane.f32.xlu0 %v1831
        %v1833 = vpop.xlane.xlu0 %1832
        %v1834 = vrcp.pop %v1830
        %v1835 = vrcp.pop %v1833
        %v1836 = vmul.f32 %v1825, %v1834
        %v1837 = vmul.f32 %v1827, %v1835
        %v1838 = vpack.c.bf16 %v1837, %v1836
        %v1840 = vsel %vm1103, %v1838, 0
        %1842 = vmatprep.subr.bf16.mxu0 0
        %1843 = vmatpush1.bf16.msra.mxu0 0
        %1844 = vmatprep.subr.bf16.mxu0 0
        %1845 = vmatpush1.bf16.msra.mxu0 0
        %1846 = vmatprep.subr.bf16.mxu0 0
        %1847 = vmatpush1.bf16.msra.mxu0 0
        %1848 = vmatprep.subr.bf16.mxu0 0
        %1849 = vmatpush1.bf16.msra.mxu0 0
        %1850 = vmatprep.subr.bf16.mxu0 0
        %1851 = vmatpush1.bf16.msra.mxu0 0
        %1852 = vmatprep.subr.bf16.mxu0 0
        %1853 = vmatpush1.bf16.msra.mxu0 0
        %1854 = vmatprep.subr.bf16.mxu0 0
        %1855 = vmatpush1.bf16.msra.mxu0 0
        %1856 = vmatprep.subr.bf16.mxu0 0
        %1857 = vmatpush1.bf16.msra.mxu0 %v1038
        %1858 = vmatprep.subr.bf16.mxu0 0
        %1859 = vmatpush2.bf16.msra.mxu0 0
        %1860 = vmatprep.subr.bf16.mxu0 0
        %1861 = vmatpush2.bf16.msra.mxu0 0
        %1862 = vmatprep.subr.bf16.mxu0 0
        %1863 = vmatpush2.bf16.msra.mxu0 0
        %1864 = vmatprep.subr.bf16.mxu0 0
        %1865 = vmatpush2.bf16.msra.mxu0 0
        %1866 = vmatprep.subr.bf16.mxu0 0
        %1867 = vmatpush2.bf16.msra.mxu0 0
        %1868 = vmatprep.subr.bf16.mxu0 0
        %1869 = vmatpush2.bf16.msra.mxu0 0
        %1870 = vmatprep.subr.bf16.mxu0 0
        %1871 = vmatpush2.bf16.msra.mxu0 0
        %1872 = vmatprep.subr.bf16.mxu0 0
        %1873 = vmatpush2.bf16.msra.mxu0 0
        %1874 = vmatprep.mubr.bf16.mxu0 0
        %1875 = vmatmul.mubr.bf16.gmra.mxu0 %v1840
        %v1876 = vpop.f32.mrf.mxu0
        %v1877 = vadd.f32 0.0, %v1876
        %v1878 = vpop.f32.mrf.mxu0
        %v1879 = vpop.f32.mrf.mxu0
        %v1880 = vadd.f32 0.0, %v1879
        %v1881 = vpop.f32.mrf.mxu0
        %1882 = vdwg.mxu0
        %v1883 = vpack.c.bf16 %v1880, %v1877
        %1885 = vrot.lane.b32.xlu0 %v1036, 96
        %v1886 = vpop.permute.xlu0 %1885
        %1888 = vrot.lane.b32.xlu0 %v1037, 96
        %v1889 = vpop.permute.xlu0 %1888
        %v1891 = vsel %vm1055, %v1886, 0
        %v1894 = vsel %vm1055, %v1889, 0
        %1896 = vmatprep.subr.bf16.mxu0 0
        %1897 = vmatpush1.bf16.xpose.msra.mxu0 0
        %1898 = vmatprep.subr.bf16.mxu0 0
        %1899 = vmatpush1.bf16.xpose.msra.mxu0 0
        %1900 = vmatprep.subr.bf16.mxu0 0
        %1901 = vmatpush1.bf16.xpose.msra.mxu0 0
        %1902 = vmatprep.subr.bf16.mxu0 0
        %1903 = vmatpush1.bf16.xpose.msra.mxu0 0
        %1904 = vmatprep.subr.bf16.mxu0 0
        %1905 = vmatpush1.bf16.xpose.msra.mxu0 0
        %1906 = vmatprep.subr.bf16.mxu0 0
        %1907 = vmatpush1.bf16.xpose.msra.mxu0 0
        %1908 = vmatprep.subr.bf16.mxu0 0
        %1909 = vmatpush1.bf16.xpose.msra.mxu0 0
        %1910 = vmatprep.subr.bf16.mxu0 0
        %1911 = vmatpush1.bf16.xpose.msra.mxu0 %v1894
        %1912 = vmatprep.subr.bf16.mxu0 0
        %1913 = vmatpush2.bf16.xpose.msra.mxu0 0
        %1914 = vmatprep.subr.bf16.mxu0 0
        %1915 = vmatpush2.bf16.xpose.msra.mxu0 0
        %1916 = vmatprep.subr.bf16.mxu0 0
        %1917 = vmatpush2.bf16.xpose.msra.mxu0 0
        %1918 = vmatprep.subr.bf16.mxu0 0
        %1919 = vmatpush2.bf16.xpose.msra.mxu0 0
        %1920 = vmatprep.subr.bf16.mxu0 0
        %1921 = vmatpush2.bf16.xpose.msra.mxu0 0
        %1922 = vmatprep.subr.bf16.mxu0 0
        %1923 = vmatpush2.bf16.xpose.msra.mxu0 0
        %1924 = vmatprep.subr.bf16.mxu0 0
        %1925 = vmatpush2.bf16.xpose.msra.mxu0 0
        %1926 = vmatprep.subr.bf16.mxu0 0
        %1927 = vmatpush2.bf16.xpose.msra.mxu0 0
        %1928 = vmatprep.mubr.bf16.mxu0 0
        %1929 = vmatmul.mubr.bf16.gmra.mxu0 %v1891
        %v1930 = vpop.f32.mrf.mxu0
        %v1931 = vadd.f32 0.0, %v1930
        %v1932 = vpop.f32.mrf.mxu0
        %v1933 = vpop.f32.mrf.mxu0
        %v1934 = vadd.f32 0.0, %v1933
        %v1935 = vpop.f32.mrf.mxu0
        %1936 = vdwg.mxu0
        %v1937 = vsel %vm1103, %v1931, -inf
        %1938 = vmax.xlane.f32.xlu0 %v1937
        %v1939 = vpop.xlane.xlu0 %1938
        %v1940 = vsel %vm1103, %v1934, -inf
        %1941 = vmax.xlane.f32.xlu0 %v1940
        %v1942 = vpop.xlane.xlu0 %1941
        %v1943 = vsub.f32 %v1931, %v1939
        %v1944 = vsub.f32 %v1934, %v1942
        %v1945 = vmul.f32 %v1943, 1.442695
        %v1946 = vpow.pop %v1945
        %v1947 = vmul.f32 %v1944, 1.442695
        %v1948 = vpow.pop %v1947
        %v1949 = vsel %vm1103, %v1946, 0.0
        %1950 = vadd.xlane.f32.xlu0 %v1949
        %v1951 = vpop.xlane.xlu0 %1950
        %v1952 = vsel %vm1103, %v1948, 0.0
        %1953 = vadd.xlane.f32.xlu0 %v1952
        %v1954 = vpop.xlane.xlu0 %1953
        %v1955 = vrcp.pop %v1951
        %v1956 = vrcp.pop %v1954
        %v1957 = vmul.f32 %v1946, %v1955
        %v1958 = vmul.f32 %v1948, %v1956
        %v1959 = vpack.c.bf16 %v1958, %v1957
        %1961 = vrot.lane.b32.xlu0 %v1038, 96
        %v1962 = vpop.permute.xlu0 %1961
        %v1965 = vsel %vm1103, %v1959, 0
        %1967 = vmatprep.subr.bf16.mxu0 0
        %1968 = vmatpush1.bf16.msra.mxu0 0
        %1969 = vmatprep.subr.bf16.mxu0 0
        %1970 = vmatpush1.bf16.msra.mxu0 0
        %1971 = vmatprep.subr.bf16.mxu0 0
        %1972 = vmatpush1.bf16.msra.mxu0 0
        %1973 = vmatprep.subr.bf16.mxu0 0
        %1974 = vmatpush1.bf16.msra.mxu0 0
        %1975 = vmatprep.subr.bf16.mxu0 0
        %1976 = vmatpush1.bf16.msra.mxu0 0
        %1977 = vmatprep.subr.bf16.mxu0 0
        %1978 = vmatpush1.bf16.msra.mxu0 0
        %1979 = vmatprep.subr.bf16.mxu0 0
        %1980 = vmatpush1.bf16.msra.mxu0 0
        %1981 = vmatprep.subr.bf16.mxu0 0
        %1982 = vmatpush1.bf16.msra.mxu0 %v1962
        %1983 = vmatprep.subr.bf16.mxu0 0
        %1984 = vmatpush2.bf16.msra.mxu0 0
        %1985 = vmatprep.subr.bf16.mxu0 0
        %1986 = vmatpush2.bf16.msra.mxu0 0
        %1987 = vmatprep.subr.bf16.mxu0 0
        %1988 = vmatpush2.bf16.msra.mxu0 0
        %1989 = vmatprep.subr.bf16.mxu0 0
        %1990 = vmatpush2.bf16.msra.mxu0 0
        %1991 = vmatprep.subr.bf16.mxu0 0
        %1992 = vmatpush2.bf16.msra.mxu0 0
        %1993 = vmatprep.subr.bf16.mxu0 0
        %1994 = vmatpush2.bf16.msra.mxu0 0
        %1995 = vmatprep.subr.bf16.mxu0 0
        %1996 = vmatpush2.bf16.msra.mxu0 0
        %1997 = vmatprep.subr.bf16.mxu0 0
        %1998 = vmatpush2.bf16.msra.mxu0 0
        %1999 = vmatprep.mubr.bf16.mxu0 0
        %2000 = vmatmul.mubr.bf16.gmra.mxu0 %v1965
        %v2001 = vpop.f32.mrf.mxu0
        %v2002 = vadd.f32 0.0, %v2001
        %v2003 = vpop.f32.mrf.mxu0
        %v2004 = vpop.f32.mrf.mxu0
        %v2005 = vadd.f32 0.0, %v2004
        %v2006 = vpop.f32.mrf.mxu0
        %2007 = vdwg.mxu0
        %v2008 = vpack.c.bf16 %v2005, %v2002
        %v2010 = vsel %vm1055, %v2008, 0
        %2012 = vmatprep.subr.bf16.mxu0 0
        %2013 = vmatpush1.bf16.msra.mxu0 0
        %2014 = vmatprep.subr.bf16.mxu0 0
        %2015 = vmatpush1.bf16.msra.mxu0 0
        %2016 = vmatprep.subr.bf16.mxu0 0
        %2017 = vmatpush1.bf16.msra.mxu0 0
        %2018 = vmatprep.subr.bf16.mxu0 0
        %2019 = vmatpush1.bf16.msra.mxu0 0
        %2020 = vmatprep.subr.bf16.mxu0 0
        %2021 = vmatpush1.bf16.msra.mxu0 0
        %2022 = vmatprep.subr.bf16.mxu0 0
        %2023 = vmatpush1.bf16.msra.mxu0 0
        %2024 = vmatprep.subr.bf16.mxu0 0
        %2025 = vmatpush1.bf16.msra.mxu0 %v1306
        %2026 = vmatprep.subr.bf16.mxu0 0
        %2027 = vmatpush1.bf16.msra.mxu0 %v1305
        %2028 = vmatprep.subr.bf16.mxu0 0
        %2029 = vmatpush2.bf16.msra.mxu0 0
        %2030 = vmatprep.subr.bf16.mxu0 0
        %2031 = vmatpush2.bf16.msra.mxu0 0
        %2032 = vmatprep.subr.bf16.mxu0 0
        %2033 = vmatpush2.bf16.msra.mxu0 0
        %2034 = vmatprep.subr.bf16.mxu0 0
        %2035 = vmatpush2.bf16.msra.mxu0 0
        %2036 = vmatprep.subr.bf16.mxu0 0
        %2037 = vmatpush2.bf16.msra.mxu0 0
        %2038 = vmatprep.subr.bf16.mxu0 0
        %2039 = vmatpush2.bf16.msra.mxu0 0
        %2040 = vmatprep.subr.bf16.mxu0 0
        %2041 = vmatpush2.bf16.msra.mxu0 0
        %2042 = vmatprep.subr.bf16.mxu0 0
        %2043 = vmatpush2.bf16.msra.mxu0 0
        %2044 = vmatprep.mubr.bf16.mxu0 0
        %2045 = vmatmul.mubr.bf16.gmra.mxu0 %v2010
        %v2046 = vpop.f32.mrf.mxu0
        %v2047 = vadd.f32 0.0, %v2046
        %v2048 = vpop.f32.mrf.mxu0
        %v2049 = vpop.f32.mrf.mxu0
        %v2050 = vadd.f32 0.0, %v2049
        %v2051 = vpop.f32.mrf.mxu0
        %2052 = vdwg.mxu0
        %v2054 = vsel %vm1055, %v1883, 0
        %2056 = vmatprep.subr.bf16.mxu0 0
        %2057 = vmatpush1.bf16.msra.mxu0 0
        %2058 = vmatprep.subr.bf16.mxu0 0
        %2059 = vmatpush1.bf16.msra.mxu0 0
        %2060 = vmatprep.subr.bf16.mxu0 0
        %2061 = vmatpush1.bf16.msra.mxu0 0
        %2062 = vmatprep.subr.bf16.mxu0 0
        %2063 = vmatpush1.bf16.msra.mxu0 0
        %2064 = vmatprep.subr.bf16.mxu0 0
        %2065 = vmatpush1.bf16.msra.mxu0 0
        %2066 = vmatprep.subr.bf16.mxu0 0
        %2067 = vmatpush1.bf16.msra.mxu0 0
        %2068 = vmatprep.subr.bf16.mxu0 0
        %2069 = vmatpush1.bf16.msra.mxu0 %v1362
        %2070 = vmatprep.subr.bf16.mxu0 0
        %2071 = vmatpush1.bf16.msra.mxu0 %v1361
        %2072 = vmatprep.subr.bf16.mxu0 0
        %2073 = vmatpush2.bf16.msra.mxu0 0
        %2074 = vmatprep.subr.bf16.mxu0 0
        %2075 = vmatpush2.bf16.msra.mxu0 0
        %2076 = vmatprep.subr.bf16.mxu0 0
        %2077 = vmatpush2.bf16.msra.mxu0 0
        %2078 = vmatprep.subr.bf16.mxu0 0
        %2079 = vmatpush2.bf16.msra.mxu0 0
        %2080 = vmatprep.subr.bf16.mxu0 0
        %2081 = vmatpush2.bf16.msra.mxu0 0
        %2082 = vmatprep.subr.bf16.mxu0 0
        %2083 = vmatpush2.bf16.msra.mxu0 0
        %2084 = vmatprep.subr.bf16.mxu0 0
        %2085 = vmatpush2.bf16.msra.mxu0 0
        %2086 = vmatprep.subr.bf16.mxu0 0
        %2087 = vmatpush2.bf16.msra.mxu0 0
        %2088 = vmatprep.mubr.bf16.mxu0 0
        %2089 = vmatmul.mubr.bf16.gmra.mxu0 %v2054
        %v2090 = vpop.f32.mrf.mxu0
        %v2091 = vadd.f32 %v2047, %v2090
        %v2092 = vpop.f32.mrf.mxu0
        %v2093 = vpop.f32.mrf.mxu0
        %v2094 = vadd.f32 %v2050, %v2093
        %v2095 = vpop.f32.mrf.mxu0
        %2096 = vdwg.mxu0
        %2097 = vrot.lane.b32.xlu0 %v1036, 64
        %v2098 = vpop.permute.xlu0 %2097
        %2099 = vrot.lane.b32.xlu0 %v1037, 64
        %v2100 = vpop.permute.xlu0 %2099
        %v2102 = vsel %vm1055, %v2098, 0
        %v2105 = vsel %vm1055, %v2100, 0
        %2107 = vmatprep.subr.bf16.mxu0 0
        %2108 = vmatpush1.bf16.xpose.msra.mxu0 0
        %2109 = vmatprep.subr.bf16.mxu0 0
        %2110 = vmatpush1.bf16.xpose.msra.mxu0 0
        %2111 = vmatprep.subr.bf16.mxu0 0
        %2112 = vmatpush1.bf16.xpose.msra.mxu0 0
        %2113 = vmatprep.subr.bf16.mxu0 0
        %2114 = vmatpush1.bf16.xpose.msra.mxu0 0
        %2115 = vmatprep.subr.bf16.mxu0 0
        %2116 = vmatpush1.bf16.xpose.msra.mxu0 0
        %2117 = vmatprep.subr.bf16.mxu0 0
        %2118 = vmatpush1.bf16.xpose.msra.mxu0 0
        %2119 = vmatprep.subr.bf16.mxu0 0
        %2120 = vmatpush1.bf16.xpose.msra.mxu0 0
        %2121 = vmatprep.subr.bf16.mxu0 0
        %2122 = vmatpush1.bf16.xpose.msra.mxu0 %v2105
        %2123 = vmatprep.subr.bf16.mxu0 0
        %2124 = vmatpush2.bf16.xpose.msra.mxu0 0
        %2125 = vmatprep.subr.bf16.mxu0 0
        %2126 = vmatpush2.bf16.xpose.msra.mxu0 0
        %2127 = vmatprep.subr.bf16.mxu0 0
        %2128 = vmatpush2.bf16.xpose.msra.mxu0 0
        %2129 = vmatprep.subr.bf16.mxu0 0
        %2130 = vmatpush2.bf16.xpose.msra.mxu0 0
        %2131 = vmatprep.subr.bf16.mxu0 0
        %2132 = vmatpush2.bf16.xpose.msra.mxu0 0
        %2133 = vmatprep.subr.bf16.mxu0 0
        %2134 = vmatpush2.bf16.xpose.msra.mxu0 0
        %2135 = vmatprep.subr.bf16.mxu0 0
        %2136 = vmatpush2.bf16.xpose.msra.mxu0 0
        %2137 = vmatprep.subr.bf16.mxu0 0
        %2138 = vmatpush2.bf16.xpose.msra.mxu0 0
        %2139 = vmatprep.mubr.bf16.mxu0 0
        %2140 = vmatmul.mubr.bf16.gmra.mxu0 %v2102
        %v2141 = vpop.f32.mrf.mxu0
        %v2142 = vadd.f32 0.0, %v2141
        %v2143 = vpop.f32.mrf.mxu0
        %v2144 = vpop.f32.mrf.mxu0
        %v2145 = vadd.f32 0.0, %v2144
        %v2146 = vpop.f32.mrf.mxu0
        %2147 = vdwg.mxu0
        %v2148 = vsel %vm1103, %v2142, -inf
        %2149 = vmax.xlane.f32.xlu0 %v2148
        %v2150 = vpop.xlane.xlu0 %2149
        %v2151 = vsel %vm1103, %v2145, -inf
        %2152 = vmax.xlane.f32.xlu0 %v2151
        %v2153 = vpop.xlane.xlu0 %2152
        %v2154 = vsub.f32 %v2142, %v2150
        %v2155 = vsub.f32 %v2145, %v2153
        %v2156 = vmul.f32 %v2154, 1.442695
        %v2157 = vpow.pop %v2156
        %v2158 = vmul.f32 %v2155, 1.442695
        %v2159 = vpow.pop %v2158
        %v2160 = vsel %vm1103, %v2157, 0.0
        %2161 = vadd.xlane.f32.xlu0 %v2160
        %v2162 = vpop.xlane.xlu0 %2161
        %v2163 = vsel %vm1103, %v2159, 0.0
        %2164 = vadd.xlane.f32.xlu0 %v2163
        %v2165 = vpop.xlane.xlu0 %2164
        %v2166 = vrcp.pop %v2162
        %v2167 = vrcp.pop %v2165
        %v2168 = vmul.f32 %v2157, %v2166
        %v2169 = vmul.f32 %v2159, %v2167
        %v2170 = vpack.c.bf16 %v2169, %v2168
        %2171 = vrot.lane.b32.xlu0 %v1038, 64
        %v2172 = vpop.permute.xlu0 %2171
        %v2175 = vsel %vm1103, %v2170, 0
        %2177 = vmatprep.subr.bf16.mxu0 0
        %2178 = vmatpush1.bf16.msra.mxu0 0
        %2179 = vmatprep.subr.bf16.mxu0 0
        %2180 = vmatpush1.bf16.msra.mxu0 0
        %2181 = vmatprep.subr.bf16.mxu0 0
        %2182 = vmatpush1.bf16.msra.mxu0 0
        %2183 = vmatprep.subr.bf16.mxu0 0
        %2184 = vmatpush1.bf16.msra.mxu0 0
        %2185 = vmatprep.subr.bf16.mxu0 0
        %2186 = vmatpush1.bf16.msra.mxu0 0
        %2187 = vmatprep.subr.bf16.mxu0 0
        %2188 = vmatpush1.bf16.msra.mxu0 0
        %2189 = vmatprep.subr.bf16.mxu0 0
        %2190 = vmatpush1.bf16.msra.mxu0 0
        %2191 = vmatprep.subr.bf16.mxu0 0
        %2192 = vmatpush1.bf16.msra.mxu0 %v2172
        %2193 = vmatprep.subr.bf16.mxu0 0
        %2194 = vmatpush2.bf16.msra.mxu0 0
        %2195 = vmatprep.subr.bf16.mxu0 0
        %2196 = vmatpush2.bf16.msra.mxu0 0
        %2197 = vmatprep.subr.bf16.mxu0 0
        %2198 = vmatpush2.bf16.msra.mxu0 0
        %2199 = vmatprep.subr.bf16.mxu0 0
        %2200 = vmatpush2.bf16.msra.mxu0 0
        %2201 = vmatprep.subr.bf16.mxu0 0
        %2202 = vmatpush2.bf16.msra.mxu0 0
        %2203 = vmatprep.subr.bf16.mxu0 0
        %2204 = vmatpush2.bf16.msra.mxu0 0
        %2205 = vmatprep.subr.bf16.mxu0 0
        %2206 = vmatpush2.bf16.msra.mxu0 0
        %2207 = vmatprep.subr.bf16.mxu0 0
        %2208 = vmatpush2.bf16.msra.mxu0 0
        %2209 = vmatprep.mubr.bf16.mxu0 0
        %2210 = vmatmul.mubr.bf16.gmra.mxu0 %v2175
        %v2211 = vpop.f32.mrf.mxu0
        %v2212 = vadd.f32 0.0, %v2211
        %v2213 = vpop.f32.mrf.mxu0
        %v2214 = vpop.f32.mrf.mxu0
        %v2215 = vadd.f32 0.0, %v2214
        %v2216 = vpop.f32.mrf.mxu0
        %2217 = vdwg.mxu0
        %v2218 = vpack.c.bf16 %v2215, %v2212
        %v2220 = vsel %vm1055, %v2218, 0
        %2222 = vmatprep.subr.bf16.mxu0 0
        %2223 = vmatpush1.bf16.msra.mxu0 0
        %2224 = vmatprep.subr.bf16.mxu0 0
        %2225 = vmatpush1.bf16.msra.mxu0 0
        %2226 = vmatprep.subr.bf16.mxu0 0
        %2227 = vmatpush1.bf16.msra.mxu0 0
        %2228 = vmatprep.subr.bf16.mxu0 0
        %2229 = vmatpush1.bf16.msra.mxu0 0
        %2230 = vmatprep.subr.bf16.mxu0 0
        %2231 = vmatpush1.bf16.msra.mxu0 0
        %2232 = vmatprep.subr.bf16.mxu0 0
        %2233 = vmatpush1.bf16.msra.mxu0 0
        %2234 = vmatprep.subr.bf16.mxu0 0
        %2235 = vmatpush1.bf16.msra.mxu0 %v1540
        %2236 = vmatprep.subr.bf16.mxu0 0
        %2237 = vmatpush1.bf16.msra.mxu0 %v1539
        %2238 = vmatprep.subr.bf16.mxu0 0
        %2239 = vmatpush2.bf16.msra.mxu0 0
        %2240 = vmatprep.subr.bf16.mxu0 0
        %2241 = vmatpush2.bf16.msra.mxu0 0
        %2242 = vmatprep.subr.bf16.mxu0 0
        %2243 = vmatpush2.bf16.msra.mxu0 0
        %2244 = vmatprep.subr.bf16.mxu0 0
        %2245 = vmatpush2.bf16.msra.mxu0 0
        %2246 = vmatprep.subr.bf16.mxu0 0
        %2247 = vmatpush2.bf16.msra.mxu0 0
        %2248 = vmatprep.subr.bf16.mxu0 0
        %2249 = vmatpush2.bf16.msra.mxu0 0
        %2250 = vmatprep.subr.bf16.mxu0 0
        %2251 = vmatpush2.bf16.msra.mxu0 0
        %2252 = vmatprep.subr.bf16.mxu0 0
        %2253 = vmatpush2.bf16.msra.mxu0 0
        %2254 = vmatprep.mubr.bf16.mxu0 0
        %2255 = vmatmul.mubr.bf16.gmra.mxu0 %v2220
        %v2256 = vpop.f32.mrf.mxu0
        %v2257 = vadd.f32 0.0, %v2256
        %v2258 = vpop.f32.mrf.mxu0
        %v2259 = vpop.f32.mrf.mxu0
        %v2260 = vadd.f32 0.0, %v2259
        %v2261 = vpop.f32.mrf.mxu0
        %2262 = vdwg.mxu0
        %v2263 = vadd.f32 %v2091, %v2257
        %v2264 = vadd.f32 %v2094, %v2260
        %2265 = vrot.lane.b32.xlu0 %v1036, 32
        %v2266 = vpop.permute.xlu0 %2265
        %2267 = vrot.lane.b32.xlu0 %v1037, 32
        %v2268 = vpop.permute.xlu0 %2267
        %v2270 = vsel %vm1055, %v2266, 0
        %v2273 = vsel %vm1055, %v2268, 0
        %2275 = vmatprep.subr.bf16.mxu0 0
        %2276 = vmatpush1.bf16.xpose.msra.mxu0 0
        %2277 = vmatprep.subr.bf16.mxu0 0
        %2278 = vmatpush1.bf16.xpose.msra.mxu0 0
        %2279 = vmatprep.subr.bf16.mxu0 0
        %2280 = vmatpush1.bf16.xpose.msra.mxu0 0
        %2281 = vmatprep.subr.bf16.mxu0 0
        %2282 = vmatpush1.bf16.xpose.msra.mxu0 0
        %2283 = vmatprep.subr.bf16.mxu0 0
        %2284 = vmatpush1.bf16.xpose.msra.mxu0 0
        %2285 = vmatprep.subr.bf16.mxu0 0
        %2286 = vmatpush1.bf16.xpose.msra.mxu0 0
        %2287 = vmatprep.subr.bf16.mxu0 0
        %2288 = vmatpush1.bf16.xpose.msra.mxu0 0
        %2289 = vmatprep.subr.bf16.mxu0 0
        %2290 = vmatpush1.bf16.xpose.msra.mxu0 %v2273
        %2291 = vmatprep.subr.bf16.mxu0 0
        %2292 = vmatpush2.bf16.xpose.msra.mxu0 0
        %2293 = vmatprep.subr.bf16.mxu0 0
        %2294 = vmatpush2.bf16.xpose.msra.mxu0 0
        %2295 = vmatprep.subr.bf16.mxu0 0
        %2296 = vmatpush2.bf16.xpose.msra.mxu0 0
        %2297 = vmatprep.subr.bf16.mxu0 0
        %2298 = vmatpush2.bf16.xpose.msra.mxu0 0
        %2299 = vmatprep.subr.bf16.mxu0 0
        %2300 = vmatpush2.bf16.xpose.msra.mxu0 0
        %2301 = vmatprep.subr.bf16.mxu0 0
        %2302 = vmatpush2.bf16.xpose.msra.mxu0 0
        %2303 = vmatprep.subr.bf16.mxu0 0
        %2304 = vmatpush2.bf16.xpose.msra.mxu0 0
        %2305 = vmatprep.subr.bf16.mxu0 0
        %2306 = vmatpush2.bf16.xpose.msra.mxu0 0
        %2307 = vmatprep.mubr.bf16.mxu0 0
        %2308 = vmatmul.mubr.bf16.gmra.mxu0 %v2270
        %v2309 = vpop.f32.mrf.mxu0
        %v2310 = vadd.f32 0.0, %v2309
        %v2311 = vpop.f32.mrf.mxu0
        %v2312 = vpop.f32.mrf.mxu0
        %v2313 = vadd.f32 0.0, %v2312
        %v2314 = vpop.f32.mrf.mxu0
        %2315 = vdwg.mxu0
        %v2316 = vsel %vm1103, %v2310, -inf
        %2317 = vmax.xlane.f32.xlu0 %v2316
        %v2318 = vpop.xlane.xlu0 %2317
        %v2319 = vsel %vm1103, %v2313, -inf
        %2320 = vmax.xlane.f32.xlu0 %v2319
        %v2321 = vpop.xlane.xlu0 %2320
        %v2322 = vsub.f32 %v2310, %v2318
        %v2323 = vsub.f32 %v2313, %v2321
        %v2324 = vmul.f32 %v2322, 1.442695
        %v2325 = vpow.pop %v2324
        %v2326 = vmul.f32 %v2323, 1.442695
        %v2327 = vpow.pop %v2326
        %v2328 = vsel %vm1103, %v2325, 0.0
        %2329 = vadd.xlane.f32.xlu0 %v2328
        %v2330 = vpop.xlane.xlu0 %2329
        %v2331 = vsel %vm1103, %v2327, 0.0
        %2332 = vadd.xlane.f32.xlu0 %v2331
        %v2333 = vpop.xlane.xlu0 %2332
        %v2334 = vrcp.pop %v2330
        %v2335 = vrcp.pop %v2333
        %v2336 = vmul.f32 %v2325, %v2334
        %v2337 = vmul.f32 %v2327, %v2335
        %v2338 = vpack.c.bf16 %v2337, %v2336
        %2339 = vrot.lane.b32.xlu0 %v1038, 32
        %v2340 = vpop.permute.xlu0 %2339
        %v2343 = vsel %vm1103, %v2338, 0
        %2345 = vmatprep.subr.bf16.mxu0 0
        %2346 = vmatpush1.bf16.msra.mxu0 0
        %2347 = vmatprep.subr.bf16.mxu0 0
        %2348 = vmatpush1.bf16.msra.mxu0 0
        %2349 = vmatprep.subr.bf16.mxu0 0
        %2350 = vmatpush1.bf16.msra.mxu0 0
        %2351 = vmatprep.subr.bf16.mxu0 0
        %2352 = vmatpush1.bf16.msra.mxu0 0
        %2353 = vmatprep.subr.bf16.mxu0 0
        %2354 = vmatpush1.bf16.msra.mxu0 0
        %2355 = vmatprep.subr.bf16.mxu0 0
        %2356 = vmatpush1.bf16.msra.mxu0 0
        %2357 = vmatprep.subr.bf16.mxu0 0
        %2358 = vmatpush1.bf16.msra.mxu0 0
        %2359 = vmatprep.subr.bf16.mxu0 0
        %2360 = vmatpush1.bf16.msra.mxu0 %v2340
        %2361 = vmatprep.subr.bf16.mxu0 0
        %2362 = vmatpush2.bf16.msra.mxu0 0
        %2363 = vmatprep.subr.bf16.mxu0 0
        %2364 = vmatpush2.bf16.msra.mxu0 0
        %2365 = vmatprep.subr.bf16.mxu0 0
        %2366 = vmatpush2.bf16.msra.mxu0 0
        %2367 = vmatprep.subr.bf16.mxu0 0
        %2368 = vmatpush2.bf16.msra.mxu0 0
        %2369 = vmatprep.subr.bf16.mxu0 0
        %2370 = vmatpush2.bf16.msra.mxu0 0
        %2371 = vmatprep.subr.bf16.mxu0 0
        %2372 = vmatpush2.bf16.msra.mxu0 0
        %2373 = vmatprep.subr.bf16.mxu0 0
        %2374 = vmatpush2.bf16.msra.mxu0 0
        %2375 = vmatprep.subr.bf16.mxu0 0
        %2376 = vmatpush2.bf16.msra.mxu0 0
        %2377 = vmatprep.mubr.bf16.mxu0 0
        %2378 = vmatmul.mubr.bf16.gmra.mxu0 %v2343
        %v2379 = vpop.f32.mrf.mxu0
        %v2380 = vadd.f32 0.0, %v2379
        %v2381 = vpop.f32.mrf.mxu0
        %v2382 = vpop.f32.mrf.mxu0
        %v2383 = vadd.f32 0.0, %v2382
        %v2384 = vpop.f32.mrf.mxu0
        %2385 = vdwg.mxu0
        %v2386 = vpack.c.bf16 %v2383, %v2380
        %v2388 = vsel %vm1055, %v2386, 0
        %2390 = vmatprep.subr.bf16.mxu0 0
        %2391 = vmatpush1.bf16.msra.mxu0 0
        %2392 = vmatprep.subr.bf16.mxu0 0
        %2393 = vmatpush1.bf16.msra.mxu0 0
        %2394 = vmatprep.subr.bf16.mxu0 0
        %2395 = vmatpush1.bf16.msra.mxu0 0
        %2396 = vmatprep.subr.bf16.mxu0 0
        %2397 = vmatpush1.bf16.msra.mxu0 0
        %2398 = vmatprep.subr.bf16.mxu0 0
        %2399 = vmatpush1.bf16.msra.mxu0 0
        %2400 = vmatprep.subr.bf16.mxu0 0
        %2401 = vmatpush1.bf16.msra.mxu0 0
        %2402 = vmatprep.subr.bf16.mxu0 0
        %2403 = vmatpush1.bf16.msra.mxu0 %v1720
        %2404 = vmatprep.subr.bf16.mxu0 0
        %2405 = vmatpush1.bf16.msra.mxu0 %v1719
        %2406 = vmatprep.subr.bf16.mxu0 0
        %2407 = vmatpush2.bf16.msra.mxu0 0
        %2408 = vmatprep.subr.bf16.mxu0 0
        %2409 = vmatpush2.bf16.msra.mxu0 0
        %2410 = vmatprep.subr.bf16.mxu0 0
        %2411 = vmatpush2.bf16.msra.mxu0 0
        %2412 = vmatprep.subr.bf16.mxu0 0
        %2413 = vmatpush2.bf16.msra.mxu0 0
        %2414 = vmatprep.subr.bf16.mxu0 0
        %2415 = vmatpush2.bf16.msra.mxu0 0
        %2416 = vmatprep.subr.bf16.mxu0 0
        %2417 = vmatpush2.bf16.msra.mxu0 0
        %2418 = vmatprep.subr.bf16.mxu0 0
        %2419 = vmatpush2.bf16.msra.mxu0 0
        %2420 = vmatprep.subr.bf16.mxu0 0
        %2421 = vmatpush2.bf16.msra.mxu0 0
        %2422 = vmatprep.mubr.bf16.mxu0 0
        %2423 = vmatmul.mubr.bf16.gmra.mxu0 %v2388
        %v2424 = vpop.f32.mrf.mxu0
        %v2425 = vadd.f32 0.0, %v2424
        %v2426 = vpop.f32.mrf.mxu0
        %v2427 = vpop.f32.mrf.mxu0
        %v2428 = vadd.f32 0.0, %v2427
        %v2429 = vpop.f32.mrf.mxu0
        %2430 = vdwg.mxu0
        %v2431 = vadd.f32 %v2263, %v2425
        %v2432 = vadd.f32 %v2264, %v2428
        %v2433 = vld [vmem:[%s705] sm:$0x1]
        %v2435 = vlaneseq
        %v2436 = vshrl.u32 %v2435, 7
        %v2437 = vsub.s32 0, %v2436
        %v2438 = vrot.slane %v2433, %v2437
        %v2440 = vadd.f32 %v1767, %v2438
        %v2441 = vadd.f32 %v1768, %v2438
        %v2442 = vadd.f32 %v2431, %v2438
        %v2443 = vadd.f32 %v2432, %v2438
        %v2444 = vadd.f32 %v748, %v2440
        %v2445 = vadd.f32 %v749, %v2441
        %v2446 = vadd.f32 %v750, %v2442
        %v2447 = vadd.f32 %v751, %v2443
        %v2448 = vld [vmem:[%s708] sm:$0x1]
        %v2449 = vld [vmem:[%s711] sm:$0x1]
        %2450 = vadd.xlane.f32.xlu0 %v2444
        %v2451 = vpop.xlane.xlu0 %2450
        %2452 = vadd.xlane.f32.xlu0 %v2445
        %v2453 = vpop.xlane.xlu0 %2452
        %2454 = vadd.xlane.f32.xlu0 %v2446
        %v2455 = vpop.xlane.xlu0 %2454
        %2456 = vadd.xlane.f32.xlu0 %v2447
        %v2457 = vpop.xlane.xlu0 %2456
        %v2458 = vrcp.pop 128.0
        %v2459 = vmul.f32 %v2451, %v2458
        %v2460 = vmul.f32 %v2453, %v2458
        %v2461 = vmul.f32 %v2455, %v2458
        %v2462 = vmul.f32 %v2457, %v2458
        %v2463 = vsub.f32 %v2444, %v2459
        %v2464 = vsub.f32 %v2445, %v2460
        %v2465 = vsub.f32 %v2446, %v2461
        %v2466 = vsub.f32 %v2447, %v2462
        %v2467 = vmul.f32 %v2463, %v2463
        %v2468 = vmul.f32 %v2464, %v2464
        %v2469 = vmul.f32 %v2465, %v2465
        %v2470 = vmul.f32 %v2466, %v2466
        %2471 = vadd.xlane.f32.xlu0 %v2467
        %v2472 = vpop.xlane.xlu0 %2471
        %2473 = vadd.xlane.f32.xlu0 %v2468
        %v2474 = vpop.xlane.xlu0 %2473
        %2475 = vadd.xlane.f32.xlu0 %v2469
        %v2476 = vpop.xlane.xlu0 %2475
        %2477 = vadd.xlane.f32.xlu0 %v2470
        %v2478 = vpop.xlane.xlu0 %2477
        %v2479 = vmul.f32 %v2472, %v2458
        %v2480 = vmul.f32 %v2474, %v2458
        %v2481 = vmul.f32 %v2476, %v2458
        %v2482 = vmul.f32 %v2478, %v2458
        %v2483 = vadd.f32 %v2479, 1e-05
        %v2484 = vadd.f32 %v2480, 1e-05
        %v2485 = vadd.f32 %v2481, 1e-05
        %v2486 = vadd.f32 %v2482, 1e-05
        %v2487 = vrsqrt.pop %v2483
        %v2488 = vrsqrt.pop %v2484
        %v2489 = vrsqrt.pop %v2485
        %v2490 = vrsqrt.pop %v2486
        %v2491 = vmul.f32 %v2463, %v2487
        %v2492 = vmul.f32 %v2464, %v2488
        %v2493 = vmul.f32 %v2465, %v2489
        %v2494 = vmul.f32 %v2466, %v2490
        %v2496 = vlaneseq
        %v2497 = vshrl.u32 %v2496, 7
        %v2498 = vsub.s32 0, %v2497
        %v2499 = vrot.slane %v2448, %v2498
        %v2501 = vmul.f32 %v2491, %v2499
        %v2502 = vmul.f32 %v2492, %v2499
        %v2503 = vmul.f32 %v2493, %v2499
        %v2504 = vmul.f32 %v2494, %v2499
        %v2506 = vlaneseq
        %v2507 = vshrl.u32 %v2506, 7
        %v2508 = vsub.s32 0, %v2507
        %v2509 = vrot.slane %v2449, %v2508
        %v2511 = vadd.f32 %v2501, %v2509
        %v2512 = vadd.f32 %v2502, %v2509
        %v2513 = vadd.f32 %v2503, %v2509
        %v2514 = vadd.f32 %v2504, %v2509
        %v2515 = vpack.c.bf16 %v2512, %v2511
        %v2516 = vpack.c.bf16 %v2514, %v2513
        %v2517 = vld [vmem:[%s595] sm:$0xff]
        %v2518 = vld [vmem:[%s595 + $0x8] sm:$0xff]
        %v2519 = vld [vmem:[%s595 + $0x10] sm:$0xff]
        %v2520 = vld [vmem:[%s595 + $0x18] sm:$0xff]
        %v2521 = vld [vmem:[%s595 + $0x20] sm:$0xff]
        %v2522 = vld [vmem:[%s595 + $0x28] sm:$0xff]
        %v2523 = vld [vmem:[%s595 + $0x30] sm:$0xff]
        %v2524 = vld [vmem:[%s595 + $0x38] sm:$0xff]
        %v2525 = vld [vmem:[%s595 + $0x40] sm:$0xff]
        %v2526 = vld [vmem:[%s595 + $0x48] sm:$0xff]
        %v2527 = vld [vmem:[%s595 + $0x50] sm:$0xff]
        %v2528 = vld [vmem:[%s595 + $0x58] sm:$0xff]
        %v2529 = vld [vmem:[%s595 + $0x60] sm:$0xff]
        %v2530 = vld [vmem:[%s595 + $0x68] sm:$0xff]
        %v2531 = vld [vmem:[%s595 + $0x70] sm:$0xff]
        %v2532 = vld [vmem:[%s595 + $0x78] sm:$0xff]
        %v2533 = vld [vmem:[%s715] sm:$0x3]
        %v2535 = vlaneseq
        %v2536 = vshrl.u32 %v2535, 7
        %v2537 = vsub.s32 0, %v2536
        %v2538 = vrot.slane %v2533, %v2537
        %v2539 = vlaneseq
        %v2540 = vshrl.u32 %v2539, 7
        %v2541 = vsub.s32 1, %v2540
        %v2542 = vrot.slane %v2533, %v2541
        %v2561 = vunpack.c.l.b16 %v2517
        %v2562 = vunpack.c.h.b16 %v2517
        %v2563 = vunpack.c.l.b16 %v2518
        %v2564 = vunpack.c.h.b16 %v2518
        %v2565 = vunpack.c.l.b16 %v2519
        %v2566 = vunpack.c.h.b16 %v2519
        %v2567 = vunpack.c.l.b16 %v2520
        %v2568 = vunpack.c.h.b16 %v2520
        %v2569 = vunpack.c.l.b16 %v2521
        %v2570 = vunpack.c.h.b16 %v2521
        %v2571 = vunpack.c.l.b16 %v2522
        %v2572 = vunpack.c.h.b16 %v2522
        %v2573 = vunpack.c.l.b16 %v2523
        %v2574 = vunpack.c.h.b16 %v2523
        %v2575 = vunpack.c.l.b16 %v2524
        %v2576 = vunpack.c.h.b16 %v2524
        %v2577 = vunpack.c.l.b16 %v2525
        %v2578 = vunpack.c.h.b16 %v2525
        %v2579 = vunpack.c.l.b16 %v2526
        %v2580 = vunpack.c.h.b16 %v2526
        %v2581 = vunpack.c.l.b16 %v2527
        %v2582 = vunpack.c.h.b16 %v2527
        %v2583 = vunpack.c.l.b16 %v2528
        %v2584 = vunpack.c.h.b16 %v2528
        %v2585 = vunpack.c.l.b16 %v2529
        %v2586 = vunpack.c.h.b16 %v2529
        %v2587 = vunpack.c.l.b16 %v2530
        %v2588 = vunpack.c.h.b16 %v2530
        %v2589 = vunpack.c.l.b16 %v2531
        %v2590 = vunpack.c.h.b16 %v2531
        %v2591 = vunpack.c.l.b16 %v2532
        %v2592 = vunpack.c.h.b16 %v2532
        %v2593 = vpack.c.b16 %v2563, %v2561
        %v2594 = vpack.c.b16 %v2564, %v2562
        %v2595 = vpack.c.b16 %v2567, %v2565
        %v2596 = vpack.c.b16 %v2568, %v2566
        %v2597 = vpack.c.b16 %v2571, %v2569
        %v2598 = vpack.c.b16 %v2572, %v2570
        %v2599 = vpack.c.b16 %v2575, %v2573
        %v2600 = vpack.c.b16 %v2576, %v2574
        %v2601 = vpack.c.b16 %v2579, %v2577
        %v2602 = vpack.c.b16 %v2580, %v2578
        %v2603 = vpack.c.b16 %v2583, %v2581
        %v2604 = vpack.c.b16 %v2584, %v2582
        %v2605 = vpack.c.b16 %v2587, %v2585
        %v2606 = vpack.c.b16 %v2588, %v2586
        %v2607 = vpack.c.b16 %v2591, %v2589
        %v2608 = vpack.c.b16 %v2592, %v2590
        %2625 = vmatprep.subr.bf16.mxu0 %v2608
        %2626 = vmatpush1.bf16.msra.mxu0 %v2607
        %2627 = vmatprep.subr.bf16.mxu0 %v2606
        %2628 = vmatpush1.bf16.msra.mxu0 %v2605
        %2629 = vmatprep.subr.bf16.mxu0 %v2604
        %2630 = vmatpush1.bf16.msra.mxu0 %v2603
        %2631 = vmatprep.subr.bf16.mxu0 %v2602
        %2632 = vmatpush1.bf16.msra.mxu0 %v2601
        %2633 = vmatprep.subr.bf16.mxu0 %v2600
        %2634 = vmatpush1.bf16.msra.mxu0 %v2599
        %2635 = vmatprep.subr.bf16.mxu0 %v2598
        %2636 = vmatpush1.bf16.msra.mxu0 %v2597
        %2637 = vmatprep.subr.bf16.mxu0 %v2596
        %2638 = vmatpush1.bf16.msra.mxu0 %v2595
        %2639 = vmatprep.subr.bf16.mxu0 %v2594
        %2640 = vmatpush1.bf16.msra.mxu0 %v2593
        %2641 = vmatprep.subr.bf16.mxu0 0
        %2642 = vmatpush2.bf16.msra.mxu0 0
        %2643 = vmatprep.subr.bf16.mxu0 0
        %2644 = vmatpush2.bf16.msra.mxu0 0
        %2645 = vmatprep.subr.bf16.mxu0 0
        %2646 = vmatpush2.bf16.msra.mxu0 0
        %2647 = vmatprep.subr.bf16.mxu0 0
        %2648 = vmatpush2.bf16.msra.mxu0 0
        %2649 = vmatprep.subr.bf16.mxu0 0
        %2650 = vmatpush2.bf16.msra.mxu0 0
        %2651 = vmatprep.subr.bf16.mxu0 0
        %2652 = vmatpush2.bf16.msra.mxu0 0
        %2653 = vmatprep.subr.bf16.mxu0 0
        %2654 = vmatpush2.bf16.msra.mxu0 0
        %2655 = vmatprep.subr.bf16.mxu0 0
        %2656 = vmatpush2.bf16.msra.mxu0 0
        %2657 = vmatprep.mubr.bf16.mxu0 0
        %2658 = vmatmul.mubr.bf16.gmra.mxu0 %v2515
        %v2659 = vpop.f32.mrf.mxu0
        %v2660 = vadd.f32 %v2538, %v2659
        %v2661 = vpop.f32.mrf.mxu0
        %v2662 = vadd.f32 %v2542, %v2661
        %v2663 = vpop.f32.mrf.mxu0
        %v2664 = vadd.f32 %v2538, %v2663
        %v2665 = vpop.f32.mrf.mxu0
        %v2666 = vadd.f32 %v2542, %v2665
        %2667 = vmatprep.mubr.bf16.mxu0 0
        %2668 = vmatmul.mubr.bf16.gmra.mxu0 %v2516
        %v2669 = vpop.f32.mrf.mxu0
        %v2670 = vadd.f32 %v2538, %v2669
        %v2671 = vpop.f32.mrf.mxu0
        %v2672 = vadd.f32 %v2542, %v2671
        %v2673 = vpop.f32.mrf.mxu0
        %v2674 = vadd.f32 %v2538, %v2673
        %v2675 = vpop.f32.mrf.mxu0
        %v2676 = vadd.f32 %v2542, %v2675
        %2677 = vdwg.mxu0
        %v2678 = vmax.f32 %v2660, 0.0
        %v2679 = vmax.f32 %v2662, 0.0
        %v2680 = vmax.f32 %v2664, 0.0
        %v2681 = vmax.f32 %v2666, 0.0
        %v2682 = vmax.f32 %v2670, 0.0
        %v2683 = vmax.f32 %v2672, 0.0
        %v2684 = vmax.f32 %v2674, 0.0
        %v2685 = vmax.f32 %v2676, 0.0
        %v2686 = vpack.c.bf16 %v2680, %v2678
        %v2687 = vpack.c.bf16 %v2681, %v2679
        %v2688 = vpack.c.bf16 %v2684, %v2682
        %v2689 = vpack.c.bf16 %v2685, %v2683
        %v2690 = vld [vmem:[%s604] sm:$0xf]
        %v2691 = vld [vmem:[%s604 + $0x4] sm:$0xf]
        %v2692 = vld [vmem:[%s604 + $0x8] sm:$0xf]
        %v2693 = vld [vmem:[%s604 + $0xc] sm:$0xf]
        %v2694 = vld [vmem:[%s604 + $0x10] sm:$0xf]
        %v2695 = vld [vmem:[%s604 + $0x14] sm:$0xf]
        %v2696 = vld [vmem:[%s604 + $0x18] sm:$0xf]
        %v2697 = vld [vmem:[%s604 + $0x1c] sm:$0xf]
        %v2698 = vld [vmem:[%s604 + $0x20] sm:$0xf]
        %v2699 = vld [vmem:[%s604 + $0x24] sm:$0xf]
        %v2700 = vld [vmem:[%s604 + $0x28] sm:$0xf]
        %v2701 = vld [vmem:[%s604 + $0x2c] sm:$0xf]
        %v2702 = vld [vmem:[%s604 + $0x30] sm:$0xf]
        %v2703 = vld [vmem:[%s604 + $0x34] sm:$0xf]
        %v2704 = vld [vmem:[%s604 + $0x38] sm:$0xf]
        %v2705 = vld [vmem:[%s604 + $0x3c] sm:$0xf]
        %v2706 = vld [vmem:[%s604 + $0x40] sm:$0xf]
        %v2707 = vld [vmem:[%s604 + $0x44] sm:$0xf]
        %v2708 = vld [vmem:[%s604 + $0x48] sm:$0xf]
        %v2709 = vld [vmem:[%s604 + $0x4c] sm:$0xf]
        %v2710 = vld [vmem:[%s604 + $0x50] sm:$0xf]
        %v2711 = vld [vmem:[%s604 + $0x54] sm:$0xf]
        %v2712 = vld [vmem:[%s604 + $0x58] sm:$0xf]
        %v2713 = vld [vmem:[%s604 + $0x5c] sm:$0xf]
        %v2714 = vld [vmem:[%s604 + $0x60] sm:$0xf]
        %v2715 = vld [vmem:[%s604 + $0x64] sm:$0xf]
        %v2716 = vld [vmem:[%s604 + $0x68] sm:$0xf]
        %v2717 = vld [vmem:[%s604 + $0x6c] sm:$0xf]
        %v2718 = vld [vmem:[%s604 + $0x70] sm:$0xf]
        %v2719 = vld [vmem:[%s604 + $0x74] sm:$0xf]
        %v2720 = vld [vmem:[%s604 + $0x78] sm:$0xf]
        %v2721 = vld [vmem:[%s604 + $0x7c] sm:$0xf]
        %v2722 = vld [vmem:[%s718] sm:$0x1]
        %v2724 = vlaneseq
        %v2725 = vshrl.u32 %v2724, 7
        %v2726 = vsub.s32 0, %v2725
        %v2727 = vrot.slane %v2722, %v2726
        %v2761 = vunpack.c.l.b16 %v2690
        %v2762 = vunpack.c.l.b16 %v2691
        %v2763 = vunpack.c.l.b16 %v2692
        %v2764 = vunpack.c.l.b16 %v2693
        %v2765 = vunpack.c.l.b16 %v2694
        %v2766 = vunpack.c.l.b16 %v2695
        %v2767 = vunpack.c.l.b16 %v2696
        %v2768 = vunpack.c.l.b16 %v2697
        %v2769 = vunpack.c.l.b16 %v2698
        %v2770 = vunpack.c.l.b16 %v2699
        %v2771 = vunpack.c.l.b16 %v2700
        %v2772 = vunpack.c.l.b16 %v2701
        %v2773 = vunpack.c.l.b16 %v2702
        %v2774 = vunpack.c.l.b16 %v2703
        %v2775 = vunpack.c.l.b16 %v2704
        %v2776 = vunpack.c.l.b16 %v2705
        %v2777 = vunpack.c.l.b16 %v2706
        %v2778 = vunpack.c.l.b16 %v2707
        %v2779 = vunpack.c.l.b16 %v2708
        %v2780 = vunpack.c.l.b16 %v2709
        %v2781 = vunpack.c.l.b16 %v2710
        %v2782 = vunpack.c.l.b16 %v2711
        %v2783 = vunpack.c.l.b16 %v2712
        %v2784 = vunpack.c.l.b16 %v2713
        %v2785 = vunpack.c.l.b16 %v2714
        %v2786 = vunpack.c.l.b16 %v2715
        %v2787 = vunpack.c.l.b16 %v2716
        %v2788 = vunpack.c.l.b16 %v2717
        %v2789 = vunpack.c.l.b16 %v2718
        %v2790 = vunpack.c.l.b16 %v2719
        %v2791 = vunpack.c.l.b16 %v2720
        %v2792 = vunpack.c.l.b16 %v2721
        %v2793 = vpack.c.b16 %v2762, %v2761
        %v2794 = vpack.c.b16 %v2764, %v2763
        %v2795 = vpack.c.b16 %v2766, %v2765
        %v2796 = vpack.c.b16 %v2768, %v2767
        %v2797 = vpack.c.b16 %v2770, %v2769
        %v2798 = vpack.c.b16 %v2772, %v2771
        %v2799 = vpack.c.b16 %v2774, %v2773
        %v2800 = vpack.c.b16 %v2776, %v2775
        %v2801 = vpack.c.b16 %v2778, %v2777
        %v2802 = vpack.c.b16 %v2780, %v2779
        %v2803 = vpack.c.b16 %v2782, %v2781
        %v2804 = vpack.c.b16 %v2784, %v2783
        %v2805 = vpack.c.b16 %v2786, %v2785
        %v2806 = vpack.c.b16 %v2788, %v2787
        %v2807 = vpack.c.b16 %v2790, %v2789
        %v2808 = vpack.c.b16 %v2792, %v2791
        %2825 = vmatprep.subr.bf16.mxu0 0
        %2826 = vmatpush1.bf16.msra.mxu0 %v2800
        %2827 = vmatprep.subr.bf16.mxu0 0
        %2828 = vmatpush1.bf16.msra.mxu0 %v2799
        %2829 = vmatprep.subr.bf16.mxu0 0
        %2830 = vmatpush1.bf16.msra.mxu0 %v2798
        %2831 = vmatprep.subr.bf16.mxu0 0
        %2832 = vmatpush1.bf16.msra.mxu0 %v2797
        %2833 = vmatprep.subr.bf16.mxu0 0
        %2834 = vmatpush1.bf16.msra.mxu0 %v2796
        %2835 = vmatprep.subr.bf16.mxu0 0
        %2836 = vmatpush1.bf16.msra.mxu0 %v2795
        %2837 = vmatprep.subr.bf16.mxu0 0
        %2838 = vmatpush1.bf16.msra.mxu0 %v2794
        %2839 = vmatprep.subr.bf16.mxu0 0
        %2840 = vmatpush1.bf16.msra.mxu0 %v2793
        %2841 = vmatprep.subr.bf16.mxu0 0
        %2842 = vmatpush2.bf16.msra.mxu0 %v2808
        %2843 = vmatprep.subr.bf16.mxu0 0
        %2844 = vmatpush2.bf16.msra.mxu0 %v2807
        %2845 = vmatprep.subr.bf16.mxu0 0
        %2846 = vmatpush2.bf16.msra.mxu0 %v2806
        %2847 = vmatprep.subr.bf16.mxu0 0
        %2848 = vmatpush2.bf16.msra.mxu0 %v2805
        %2849 = vmatprep.subr.bf16.mxu0 0
        %2850 = vmatpush2.bf16.msra.mxu0 %v2804
        %2851 = vmatprep.subr.bf16.mxu0 0
        %2852 = vmatpush2.bf16.msra.mxu0 %v2803
        %2853 = vmatprep.subr.bf16.mxu0 0
        %2854 = vmatpush2.bf16.msra.mxu0 %v2802
        %2855 = vmatprep.subr.bf16.mxu0 0
        %2856 = vmatpush2.bf16.msra.mxu0 %v2801
        %2857 = vmatprep.mubr.bf16.mxu0 %v2687
        %2858 = vmatmul.mubr.bf16.gmra.mxu0 %v2686
        %v2859 = vpop.f32.mrf.mxu0
        %v2860 = vadd.f32 %v2727, %v2859
        %v2861 = vpop.f32.mrf.mxu0
        %v2862 = vpop.f32.mrf.mxu0
        %v2863 = vadd.f32 %v2727, %v2862
        %v2864 = vpop.f32.mrf.mxu0
        %2865 = vmatprep.mubr.bf16.mxu0 %v2689
        %2866 = vmatmul.mubr.bf16.gmra.mxu0 %v2688
        %v2867 = vpop.f32.mrf.mxu0
        %v2868 = vadd.f32 %v2727, %v2867
        %v2869 = vpop.f32.mrf.mxu0
        %v2870 = vpop.f32.mrf.mxu0
        %v2871 = vadd.f32 %v2727, %v2870
        %v2872 = vpop.f32.mrf.mxu0
        %2873 = vdwg.mxu0
        %v2874 = vadd.f32 %v2511, %v2860
        %v2875 = vadd.f32 %v2512, %v2863
        %v2876 = vadd.f32 %v2513, %v2868
        %v2877 = vadd.f32 %v2514, %v2871
        %v2878 = vld [vmem:[%s721] sm:$0x1]
        %v2879 = vld [vmem:[%s724] sm:$0x1]
        %2880 = vadd.xlane.f32.xlu0 %v2874
        %v2881 = vpop.xlane.xlu0 %2880
        %2882 = vadd.xlane.f32.xlu0 %v2875
        %v2883 = vpop.xlane.xlu0 %2882
        %2884 = vadd.xlane.f32.xlu0 %v2876
        %v2885 = vpop.xlane.xlu0 %2884
        %2886 = vadd.xlane.f32.xlu0 %v2877
        %v2887 = vpop.xlane.xlu0 %2886
        %v2888 = vmul.f32 %v2881, %v2458
        %v2889 = vmul.f32 %v2883, %v2458
        %v2890 = vmul.f32 %v2885, %v2458
        %v2891 = vmul.f32 %v2887, %v2458
        %v2892 = vsub.f32 %v2874, %v2888
        %v2893 = vsub.f32 %v2875, %v2889
        %v2894 = vsub.f32 %v2876, %v2890
        %v2895 = vsub.f32 %v2877, %v2891
        %v2896 = vmul.f32 %v2892, %v2892
        %v2897 = vmul.f32 %v2893, %v2893
        %v2898 = vmul.f32 %v2894, %v2894
        %v2899 = vmul.f32 %v2895, %v2895
        %2900 = vadd.xlane.f32.xlu0 %v2896
        %v2901 = vpop.xlane.xlu0 %2900
        %2902 = vadd.xlane.f32.xlu0 %v2897
        %v2903 = vpop.xlane.xlu0 %2902
        %2904 = vadd.xlane.f32.xlu0 %v2898
        %v2905 = vpop.xlane.xlu0 %2904
        %2906 = vadd.xlane.f32.xlu0 %v2899
        %v2907 = vpop.xlane.xlu0 %2906
        %v2908 = vmul.f32 %v2901, %v2458
        %v2909 = vmul.f32 %v2903, %v2458
        %v2910 = vmul.f32 %v2905, %v2458
        %v2911 = vmul.f32 %v2907, %v2458
        %v2912 = vadd.f32 %v2908, 1e-05
        %v2913 = vadd.f32 %v2909, 1e-05
        %v2914 = vadd.f32 %v2910, 1e-05
        %v2915 = vadd.f32 %v2911, 1e-05
        %v2916 = vrsqrt.pop %v2912
        %v2917 = vrsqrt.pop %v2913
        %v2918 = vrsqrt.pop %v2914
        %v2919 = vrsqrt.pop %v2915
        %v2920 = vmul.f32 %v2892, %v2916
        %v2921 = vmul.f32 %v2893, %v2917
        %v2922 = vmul.f32 %v2894, %v2918
        %v2923 = vmul.f32 %v2895, %v2919
        %v2925 = vlaneseq
        %v2926 = vshrl.u32 %v2925, 7
        %v2927 = vsub.s32 0, %v2926
        %v2928 = vrot.slane %v2878, %v2927
        %v2930 = vmul.f32 %v2920, %v2928
        %v2931 = vmul.f32 %v2921, %v2928
        %v2932 = vmul.f32 %v2922, %v2928
        %v2933 = vmul.f32 %v2923, %v2928
        %v2935 = vlaneseq
        %v2936 = vshrl.u32 %v2935, 7
        %v2937 = vsub.s32 0, %v2936
        %v2938 = vrot.slane %v2879, %v2937
        %v2940 = vadd.f32 %v2930, %v2938
        %v2941 = vadd.f32 %v2931, %v2938
        %v2942 = vadd.f32 %v2932, %v2938
        %v2943 = vadd.f32 %v2933, %v2938
        %2944 = vst [vmem:[#allocation2] sm:$0xff] %v2940
        %2945 = vst [vmem:[#allocation2 + $0x8] sm:$0xff] %v2941
        %2946 = vst [vmem:[#allocation2 + $0x10] sm:$0xff] %v2942
        %2947 = vst [vmem:[#allocation2 + $0x18] sm:$0xff] %v2943
        %p2948 = scmp.eq.s32.totalorder %s38, 1
        // Predicated region
        $region93: #{mae_encoder_forward.1} parent=71 // pred_check
          %p2949 = pneg %p2948
        $region94: #{mae_encoder_forward.1} parent=71 // pred_check_branch
          %2951 = sbr.rel (%p2949) target = $region96
        $region95: #{mae_encoder_forward.1} parent=71 // pred_region
          %v2952 = vpack.c.bf16 %v2941, %v2940
          %v2953 = vpack.c.bf16 %v2943, %v2942
          %v2956 = vunpack.c.l.b16 %v2952
          %v2957 = vunpack.c.h.b16 %v2952
          %v2958 = vunpack.c.l.b16 %v2953
          %v2959 = vunpack.c.h.b16 %v2953
          %v2960 = vpack.c.b16 %v2956, %v2956
          %v2961 = vpack.c.b16 %v2957, %v2957
          %v2962 = vpack.c.b16 %v2958, %v2958
          %v2963 = vpack.c.b16 %v2959, %v2959
          %2968 = vst [vmem:[%s729] sm:$0xf] %v2960
          %2969 = vst [vmem:[%s729 + $0x4] sm:$0xf] %v2961
          %2970 = vst [vmem:[%s729 + $0x8] sm:$0xf] %v2962
          %2971 = vst [vmem:[%s729 + $0xc] sm:$0xf] %v2963
        $region96: #{mae_encoder_forward.1} parent=71 // pred_fallthru
          _
        %s2972 = smul.u32 4, %s37
        %p2973 = scmp.lt.s32.totalorder %s2972, 3
        %s2974 = scalar_select %p2973, %s2972, 3
        %s2975 = smul.addr %s2974, 4
        %s2976 = scalar_lea.vmem %s13, %s2975
        // Predicated region
        $region97: #{mae_encoder_forward.1} parent=71 // pred_check
          %p2977 = pneg %p401
        $region98: #{mae_encoder_forward.1} parent=71 // pred_check_branch
          %2979 = sbr.rel (%p2977) target = $region100
        $region99: #{mae_encoder_forward.1} parent=71 // pred_region
          %s2980 = smul.u32 4, %s37
        $region100: #{mae_encoder_forward.1} parent=71 // pred_fallthru
          _
        // Predicated region
        $region101: #{mae_encoder_forward.1} parent=71 // pred_check
          %p2981 = pneg %p401
        $region102: #{mae_encoder_forward.1} parent=71 // pred_check_branch
          %2983 = sbr.rel (%p2981) target = $region104
        $region103: #{mae_encoder_forward.1} parent=71 // pred_region
          %s2984 = smul.u32 4, %s37
          %p2985 = scmp.lt.s32.totalorder %s2984, 3
          %s2986 = scalar_select %p2985, %s2984, 3
          %s2987 = smul.addr %s2986, 4
          %s2988 = scalar_lea.vmem %s13, %s2987
        $region104: #{mae_encoder_forward.1} parent=71 // pred_fallthru
          _
      $region72: #{mae_encoder_forward.1} parent=5 // pred_fallthru
        _
      %p2989 = scmp.le.s32.totalorder 2, %s28
      // Predicated region
      $region105: #{mae_encoder_forward.1} parent=5 // pred_check
        %p2990 = pneg %p2989
      $region106: #{mae_encoder_forward.1} parent=5 // pred_check_branch
        %2992 = sbr.rel (%p2990) target = $region108
      $region107: #{mae_encoder_forward.1} parent=5 // pred_region
        %s2993 = ssub.s32 %s28, 2
      $region108: #{mae_encoder_forward.1} parent=5 // pred_fallthru
        _
    $region6: #{mae_encoder_forward.1} parent=1 // loop_footer
      %s32 = sadd.s32 1, %s28
    $region7: #{mae_encoder_forward.1} parent=1 // loop_footer_branch
      %27 = sbr.rel target = $region3
    $region8: #{mae_encoder_forward.1} parent=1 // loop_exit
      _
    %2994 = vsyncpa [#allocation4], 1
    %s2995 = scalar_lea.sflag [#allocation4], 1
    %2996 = vsyncpa %s2995, 1
    %2997 = vsyncpa [#allocation6], 1
    %s2998 = scalar_lea.sflag [#allocation6], 1
    %2999 = vsyncpa %s2998, 1
    %3000 = vsyncpa [#allocation9], 1
    %s3001 = scalar_lea.sflag [#allocation9], 1
    %3002 = vsyncpa %s3001, 1

</llo_original>
